<compile_context>
chip_gen: v6e
topology: v6e:2x2x1
jax: 0.10.0
libtpu: 0.0.40
codegen_flags: <defaults>
</compile_context>

<pallas_src>
import jax
import jax.numpy as jnp
from jax.experimental import pallas as pl
from jax.experimental.pallas import tpu as pltpu

KH = KW = 5
C_IN = 256
C_OUT = 2
OUT_PAD = 128      # final layer padded to one full lane group (unmasked store)


# ----------------------------- Pallas kernel ---------------------------------

def _make_kernel(n, w_in, ho, wo, hwp, h_pad):
    """Fused conv(256->2,k5) + BatchNorm(train) + 3-layer MLP, batched over N."""
    # TODO(synk): the source module declares nn.BatchNorm2d(4) after a 2-channel
    # conv (PyTorch itself would raise at runtime); implemented as BatchNorm
    # over the 2 conv channels.
    L = n * hwp
    inv_count = 1.0 / float(n * ho * wo)

    def kernel(sc_ref, x_ref, wc_ref, w1_ref, w2_ref, w3_ref, aux_ref,
               out_ref, stage_ref):
        # ---- conv as ONE batched GEMM + 25-tap lane-roll accumulation --------
        r_all = jnp.dot(wc_ref[...], x_ref[...],
                        preferred_element_type=jnp.float32)        # (50, L) f32
        acc = None
        for di in range(KH):
            for dj in range(KW):
                t = di * KW + dj
                off = di * w_in + dj
                rt = r_all[2 * t:2 * t + 2, :]                     # (2, L)
                if off:
                    # out[q] = rt[q + off]; for valid q the read stays inside
                    # the sample's hwp-lane block, wrap lands only in garbage.
                    rt = pltpu.roll(rt, L - off, axis=1)
                acc = rt if acc is None else acc + rt
        # NOTE: conv bias intentionally dropped — training-mode BN right after
        # the conv absorbs any per-channel constant exactly.

        # ---- training-mode BatchNorm (masked lanes, centered variance) -------
        mask = aux_ref[0:1, :]                                     # (1, L) {0,1}
        for c in range(C_OUT):
            row = acc[c:c + 1, :]                                  # (1, L) f32
            mean = jnp.sum(row * mask, axis=1, keepdims=True) * inv_count
            d = (row - mean) * mask
            var = jnp.sum(d * d, axis=1, keepdims=True) * inv_count
            scale = sc_ref[c] * jax.lax.rsqrt(var + 1e-5)          # (1, 1)
            shift = sc_ref[C_OUT + c] - mean * scale               # (1, 1)
            bn = row * scale + shift                               # (1, L) f32
            # Stage per-sample slabs -> (N, 2*hwp): cols [0,hwp)=ch0, [hwp,2hwp)=ch1.
            for s in range(n):
                stage_ref[s:s + 1, c * hwp:(c + 1) * hwp] = \
                    bn[0:1, s * hwp:(s + 1) * hwp]

        # ---- batched 3-layer MLP (flatten folded into expanded l1 weights) ---
        def leaky(v):
            return jnp.where(v > 0, v, 0.1 * v)

        b1 = aux_ref[1:2, 0:h_pad]
        b2 = aux_ref[2:3, 0:h_pad]
        b3 = aux_ref[3:4, 0:OUT_PAD]
        st = stage_ref[...].astype(jnp.bfloat16)                   # (N, 2*hwp)
        h1 = leaky(jnp.dot(st, w1_ref[...],
                           preferred_element_type=jnp.float32) + b1)
        h2 = leaky(jnp.dot(h1.astype(jnp.bfloat16), w2_ref[...],
                           preferred_element_type=jnp.float32) + b2)
        out_ref[...] = jnp.dot(h2.astype(jnp.bfloat16), w3_ref[...],
                               preferred_element_type=jnp.float32) + b3

    return kernel


# ----------------------------- Host-side glue ---------------------------------

def prepare_kernel_params(params, input_shape):
    """One-time repack of PyTorch-style params into kernel-friendly layouts."""
    n, c_in, h, w = input_shape
    ho, wo = h - KH + 1, w - KW + 1
    hw = h * w
    hwp = pl.cdiv(hw, 128) * 128
    L = n * hwp
    h_dim = params["w1"].shape[1]
    h_pad = pl.cdiv(h_dim, 128) * 128

    # Conv weight -> (KH*KW*C_OUT, Cin); row = (di*KW + dj)*C_OUT + c_out. bf16.
    w_all = (params["conv_w"].transpose(2, 3, 0, 1)
             .reshape(KH * KW * C_OUT, c_in).astype(jnp.bfloat16))

    # l1 weight: PyTorch flatten order (c, i*wo + j) -> padded raster lanes
    # (c*hwp + i*w + j); zero rows at invalid/padded lanes; out dim padded.
    pos = (jnp.arange(ho)[:, None] * w + jnp.arange(wo)[None, :]).reshape(-1)
    w1r = params["w1"].reshape(C_OUT, ho * wo, h_dim)
    w1e = jnp.zeros((C_OUT, hwp, h_pad), jnp.float32).at[:, pos, :h_dim].set(w1r)
    w1ab = w1e.reshape(C_OUT * hwp, h_pad).astype(jnp.bfloat16)

    w2p = (jnp.zeros((h_pad, h_pad), jnp.float32)
           .at[:h_dim, :h_dim].set(params["w2"]).astype(jnp.bfloat16))
    w3p = (jnp.zeros((h_pad, OUT_PAD), jnp.float32)
           .at[:h_dim, :C_OUT].set(params["w3"]).astype(jnp.bfloat16))

    # Packed small params: one SMEM vector (gamma|beta) + one f32 VMEM slab
    # holding [mask ; b1 ; b2 ; b3] (zero-padded).
    lane = jnp.arange(hwp)
    mask_row = (((lane % w) < wo) & (lane < ho * w)).astype(jnp.float32)
    aux = jnp.zeros((4, L), jnp.float32)
    aux = aux.at[0, :].set(jnp.tile(mask_row, (n,)))
    aux = aux.at[1, :h_dim].set(params["b1"].reshape(-1))
    aux = aux.at[2, :h_dim].set(params["b2"].reshape(-1))
    aux = aux.at[3, :C_OUT].set(params["b3"].reshape(-1))
    sc = jnp.concatenate([params["gamma"].reshape(-1),
                          params["beta"].reshape(-1)]).astype(jnp.float32)

    return dict(w_all=w_all, w1ab=w1ab, w2=w2p, w3=w3p, aux=aux, sc=sc,
                dims=(n, c_in, h, w, ho, wo, hw, hwp, h_pad))


def discriminator_forward(x, kp):
    n, c_in, h, w, ho, wo, hw, hwp, h_pad = kp["dims"]
    # Glue: reshape + tiny zero-pad + sample-major lane fuse (no im2col), bf16.
    x_flat = jnp.pad(x.reshape(n, c_in, hw), ((0, 0), (0, 0), (0, hwp - hw)))
    x_b = (jnp.transpose(x_flat, (1, 0, 2))
           .reshape(c_in, n * hwp).astype(jnp.bfloat16))

    kernel = _make_kernel(n, w, ho, wo, hwp, h_pad)
    vmem = pl.BlockSpec(memory_space=pltpu.MemorySpace.VMEM)
    smem = pl.BlockSpec(memory_space=pltpu.MemorySpace.SMEM)
    out = pl.pallas_call(
        kernel,
        out_shape=jax.ShapeDtypeStruct((n, OUT_PAD), jnp.float32),
        in_specs=[smem, vmem, vmem, vmem, vmem, vmem, vmem],
        out_specs=vmem,
        scratch_shapes=[pltpu.VMEM((n, 2 * hwp), jnp.float32)],
        # TODO(synk): for large N, add a grid over sample chunks (two-phase BN
        # stats, P3 accumulators) and/or set pltpu.CompilerParams(
        # vmem_limit_bytes=...); at this size everything (~1.3 MB) fits grid-less.
    )(kp["sc"], x_b, kp["w_all"], kp["w1ab"], kp["w2"], kp["w3"], kp["aux"])
    return out[:, :C_OUT]


def init_params(key, h=200):
    """Conv/Linear weights ~ N(0, 0.02) as in __init__; biases / BN affine made
    small-but-nonzero so those code paths are actually exercised by the check."""
    ks = jax.random.split(key, 10)
    conv_w = 0.02 * jax.random.normal(ks[0], (C_OUT, C_IN, KH, KW), jnp.float32)  # OIHW
    w1 = 0.02 * jax.random.normal(ks[1], (400, h), jnp.float32)  # stored (in, out)
    w2 = 0.02 * jax.random.normal(ks[2], (h, h), jnp.float32)
    w3 = 0.02 * jax.random.normal(ks[3], (h, 2), jnp.float32)
    return dict(
        conv_w=conv_w,
        conv_b=0.1 * jax.random.normal(ks[4], (C_OUT,), jnp.float32),
        gamma=1.0 + 0.1 * jax.random.normal(ks[5], (C_OUT,), jnp.float32),
        beta=0.1 * jax.random.normal(ks[6], (C_OUT,), jnp.float32),
        w1=w1, b1=0.02 * jax.random.normal(ks[7], (1, h), jnp.float32),
        w2=w2, b2=0.02 * jax.random.normal(ks[8], (1, h), jnp.float32),
        w3=w3, b3=0.02 * jax.random.normal(ks[9], (1, 2), jnp.float32),
    )


def reference_forward(x, params):
    """Pure-JAX reference of the PyTorch forward (training-mode BN, with conv bias)."""
    hp = jax.lax.Precision.HIGHEST
    conv = jax.lax.conv_general_dilated(
        x, params["conv_w"], window_strides=(1, 1), padding="VALID",
        dimension_numbers=("NCHW", "OIHW", "NCHW"), precision=hp)
    conv = conv + params["conv_b"].reshape(1, C_OUT, 1, 1)
    mean = conv.mean(axis=(0, 2, 3), keepdims=True)
    var = conv.var(axis=(0, 2, 3), keepdims=True)
    bn = (conv - mean) * jax.lax.rsqrt(var + 1e-5)
    bn = bn * params["gamma"].reshape(1, C_OUT, 1, 1) + params["beta"].reshape(1, C_OUT, 1, 1)
    xf = bn.reshape(x.shape[0], -1)

    def leaky(v):
        return jnp.where(v > 0, v, 0.1 * v)
    h1 = leaky(jnp.dot(xf, params["w1"], precision=hp) + params["b1"])
    h2 = leaky(jnp.dot(h1, params["w2"], precision=hp) + params["b2"])
    return jnp.dot(h2, params["w3"], precision=hp) + params["b3"]


if __name__ == "__main__":
    key = jax.random.PRNGKey(0)
    kx, kparam = jax.random.split(key)
    # Input shape is pinned by the module: Cin=256 (conv) and (H-4)*(W-4)*2 == 400
    # (Linear(400, h)); pick H=14, W=24 -> conv out (N, 2, 10, 20), flatten = 400.
    x = jax.random.normal(kx, (2, 256, 14, 24), jnp.float32)
    params = init_params(kparam, h=200)
    kparams = prepare_kernel_params(params, x.shape)

    out = jax.block_until_ready(discriminator_forward(x, kparams))
    ref = reference_forward(x, params)

    assert out.shape == (2, 2)
    max_err = jnp.max(jnp.abs(out - ref))
    assert bool(jnp.allclose(out, ref, atol=2e-2, rtol=2e-2)), f"max abs err {max_err}"
    print("KERNEL_OK")
</pallas_src>

<mosaic_0001>
module attributes {stable_mosaic.version = 11 : i64} {
  func.func @kernel(%arg0: memref<4xf32, #tpu.memory_space<smem>>, %arg1: memref<256x768xbf16, #tpu.memory_space<vmem>>, %arg2: memref<50x256xbf16, #tpu.memory_space<vmem>>, %arg3: memref<768x256xbf16, #tpu.memory_space<vmem>>, %arg4: memref<256x256xbf16, #tpu.memory_space<vmem>>, %arg5: memref<256x128xbf16, #tpu.memory_space<vmem>>, %arg6: memref<4x768xf32, #tpu.memory_space<vmem>>, %arg7: memref<2x128xf32, #tpu.memory_space<vmem>>, %arg8: memref<2x768xf32, #tpu.memory_space<vmem>>) attributes {dimension_semantics = [], scalar_prefetch = 0 : i64, scratch_operands = 1 : i64, tpu.core_type = #tpu.core_type<tc>} {
    %c0 = arith.constant 0 : index
    %c0_0 = arith.constant 0 : index
    %0 = vector.load %arg2[%c0, %c0_0] : memref<50x256xbf16, #tpu.memory_space<vmem>>, vector<50x256xbf16>
    %c0_1 = arith.constant 0 : index
    %c0_2 = arith.constant 0 : index
    %1 = vector.load %arg1[%c0_1, %c0_2] : memref<256x768xbf16, #tpu.memory_space<vmem>>, vector<256x768xbf16>
    %cst = arith.constant dense<0.000000e+00> : vector<50x768xf32>
    %2 = tpu.matmul %0, %1, %cst {dimension_numbers = #tpu.dot_dimension_numbers<[1], [0], [0], [1], [0, 0, 1, 1], [], []>} : vector<50x256xbf16>, vector<256x768xbf16>, vector<50x768xf32> -> vector<50x768xf32>
    %3 = vector.extract_strided_slice %2 {offsets = [0, 0], sizes = [2, 768], strides = [1, 1]} : vector<50x768xf32> to vector<2x768xf32>
    %4 = vector.extract_strided_slice %2 {offsets = [2, 0], sizes = [2, 768], strides = [1, 1]} : vector<50x768xf32> to vector<2x768xf32>
    %c767_i32 = arith.constant 767 : i32
    %5 = tpu.dynamic_rotate %4 by %c767_i32 dim 1 : vector<2x768xf32>, i32 -> vector<2x768xf32>
    %6 = arith.addf %3, %5 : vector<2x768xf32>
    %7 = vector.extract_strided_slice %2 {offsets = [4, 0], sizes = [2, 768], strides = [1, 1]} : vector<50x768xf32> to vector<2x768xf32>
    %c766_i32 = arith.constant 766 : i32
    %8 = tpu.dynamic_rotate %7 by %c766_i32 dim 1 : vector<2x768xf32>, i32 -> vector<2x768xf32>
    %9 = arith.addf %6, %8 : vector<2x768xf32>
    %10 = vector.extract_strided_slice %2 {offsets = [6, 0], sizes = [2, 768], strides = [1, 1]} : vector<50x768xf32> to vector<2x768xf32>
    %c765_i32 = arith.constant 765 : i32
    %11 = tpu.dynamic_rotate %10 by %c765_i32 dim 1 : vector<2x768xf32>, i32 -> vector<2x768xf32>
    %12 = arith.addf %9, %11 : vector<2x768xf32>
    %13 = vector.extract_strided_slice %2 {offsets = [8, 0], sizes = [2, 768], strides = [1, 1]} : vector<50x768xf32> to vector<2x768xf32>
    %c764_i32 = arith.constant 764 : i32
    %14 = tpu.dynamic_rotate %13 by %c764_i32 dim 1 : vector<2x768xf32>, i32 -> vector<2x768xf32>
    %15 = arith.addf %12, %14 : vector<2x768xf32>
    %16 = vector.extract_strided_slice %2 {offsets = [10, 0], sizes = [2, 768], strides = [1, 1]} : vector<50x768xf32> to vector<2x768xf32>
    %c744_i32 = arith.constant 744 : i32
    %17 = tpu.dynamic_rotate %16 by %c744_i32 dim 1 : vector<2x768xf32>, i32 -> vector<2x768xf32>
    %18 = arith.addf %15, %17 : vector<2x768xf32>
    %19 = vector.extract_strided_slice %2 {offsets = [12, 0], sizes = [2, 768], strides = [1, 1]} : vector<50x768xf32> to vector<2x768xf32>
    %c743_i32 = arith.constant 743 : i32
    %20 = tpu.dynamic_rotate %19 by %c743_i32 dim 1 : vector<2x768xf32>, i32 -> vector<2x768xf32>
    %21 = arith.addf %18, %20 : vector<2x768xf32>
    %22 = vector.extract_strided_slice %2 {offsets = [14, 0], sizes = [2, 768], strides = [1, 1]} : vector<50x768xf32> to vector<2x768xf32>
    %c742_i32 = arith.constant 742 : i32
    %23 = tpu.dynamic_rotate %22 by %c742_i32 dim 1 : vector<2x768xf32>, i32 -> vector<2x768xf32>
    %24 = arith.addf %21, %23 : vector<2x768xf32>
    %25 = vector.extract_strided_slice %2 {offsets = [16, 0], sizes = [2, 768], strides = [1, 1]} : vector<50x768xf32> to vector<2x768xf32>
    %c741_i32 = arith.constant 741 : i32
    %26 = tpu.dynamic_rotate %25 by %c741_i32 dim 1 : vector<2x768xf32>, i32 -> vector<2x768xf32>
    %27 = arith.addf %24, %26 : vector<2x768xf32>
    %28 = vector.extract_strided_slice %2 {offsets = [18, 0], sizes = [2, 768], strides = [1, 1]} : vector<50x768xf32> to vector<2x768xf32>
    %c740_i32 = arith.constant 740 : i32
    %29 = tpu.dynamic_rotate %28 by %c740_i32 dim 1 : vector<2x768xf32>, i32 -> vector<2x768xf32>
    %30 = arith.addf %27, %29 : vector<2x768xf32>
    %31 = vector.extract_strided_slice %2 {offsets = [20, 0], sizes = [2, 768], strides = [1, 1]} : vector<50x768xf32> to vector<2x768xf32>
    %c720_i32 = arith.constant 720 : i32
    %32 = tpu.dynamic_rotate %31 by %c720_i32 dim 1 : vector<2x768xf32>, i32 -> vector<2x768xf32>
    %33 = arith.addf %30, %32 : vector<2x768xf32>
    %34 = vector.extract_strided_slice %2 {offsets = [22, 0], sizes = [2, 768], strides = [1, 1]} : vector<50x768xf32> to vector<2x768xf32>
    %c719_i32 = arith.constant 719 : i32
    %35 = tpu.dynamic_rotate %34 by %c719_i32 dim 1 : vector<2x768xf32>, i32 -> vector<2x768xf32>
    %36 = arith.addf %33, %35 : vector<2x768xf32>
    %37 = vector.extract_strided_slice %2 {offsets = [24, 0], sizes = [2, 768], strides = [1, 1]} : vector<50x768xf32> to vector<2x768xf32>
    %c718_i32 = arith.constant 718 : i32
    %38 = tpu.dynamic_rotate %37 by %c718_i32 dim 1 : vector<2x768xf32>, i32 -> vector<2x768xf32>
    %39 = arith.addf %36, %38 : vector<2x768xf32>
    %40 = vector.extract_strided_slice %2 {offsets = [26, 0], sizes = [2, 768], strides = [1, 1]} : vector<50x768xf32> to vector<2x768xf32>
    %c717_i32 = arith.constant 717 : i32
    %41 = tpu.dynamic_rotate %40 by %c717_i32 dim 1 : vector<2x768xf32>, i32 -> vector<2x768xf32>
    %42 = arith.addf %39, %41 : vector<2x768xf32>
    %43 = vector.extract_strided_slice %2 {offsets = [28, 0], sizes = [2, 768], strides = [1, 1]} : vector<50x768xf32> to vector<2x768xf32>
    %c716_i32 = arith.constant 716 : i32
    %44 = tpu.dynamic_rotate %43 by %c716_i32 dim 1 : vector<2x768xf32>, i32 -> vector<2x768xf32>
    %45 = arith.addf %42, %44 : vector<2x768xf32>
    %46 = vector.extract_strided_slice %2 {offsets = [30, 0], sizes = [2, 768], strides = [1, 1]} : vector<50x768xf32> to vector<2x768xf32>
    %c696_i32 = arith.constant 696 : i32
    %47 = tpu.dynamic_rotate %46 by %c696_i32 dim 1 : vector<2x768xf32>, i32 -> vector<2x768xf32>
    %48 = arith.addf %45, %47 : vector<2x768xf32>
    %49 = vector.extract_strided_slice %2 {offsets = [32, 0], sizes = [2, 768], strides = [1, 1]} : vector<50x768xf32> to vector<2x768xf32>
    %c695_i32 = arith.constant 695 : i32
    %50 = tpu.dynamic_rotate %49 by %c695_i32 dim 1 : vector<2x768xf32>, i32 -> vector<2x768xf32>
    %51 = arith.addf %48, %50 : vector<2x768xf32>
    %52 = vector.extract_strided_slice %2 {offsets = [34, 0], sizes = [2, 768], strides = [1, 1]} : vector<50x768xf32> to vector<2x768xf32>
    %c694_i32 = arith.constant 694 : i32
    %53 = tpu.dynamic_rotate %52 by %c694_i32 dim 1 : vector<2x768xf32>, i32 -> vector<2x768xf32>
    %54 = arith.addf %51, %53 : vector<2x768xf32>
    %55 = vector.extract_strided_slice %2 {offsets = [36, 0], sizes = [2, 768], strides = [1, 1]} : vector<50x768xf32> to vector<2x768xf32>
    %c693_i32 = arith.constant 693 : i32
    %56 = tpu.dynamic_rotate %55 by %c693_i32 dim 1 : vector<2x768xf32>, i32 -> vector<2x768xf32>
    %57 = arith.addf %54, %56 : vector<2x768xf32>
    %58 = vector.extract_strided_slice %2 {offsets = [38, 0], sizes = [2, 768], strides = [1, 1]} : vector<50x768xf32> to vector<2x768xf32>
    %c692_i32 = arith.constant 692 : i32
    %59 = tpu.dynamic_rotate %58 by %c692_i32 dim 1 : vector<2x768xf32>, i32 -> vector<2x768xf32>
    %60 = arith.addf %57, %59 : vector<2x768xf32>
    %61 = vector.extract_strided_slice %2 {offsets = [40, 0], sizes = [2, 768], strides = [1, 1]} : vector<50x768xf32> to vector<2x768xf32>
    %c672_i32 = arith.constant 672 : i32
    %62 = tpu.dynamic_rotate %61 by %c672_i32 dim 1 : vector<2x768xf32>, i32 -> vector<2x768xf32>
    %63 = arith.addf %60, %62 : vector<2x768xf32>
    %64 = vector.extract_strided_slice %2 {offsets = [42, 0], sizes = [2, 768], strides = [1, 1]} : vector<50x768xf32> to vector<2x768xf32>
    %c671_i32 = arith.constant 671 : i32
    %65 = tpu.dynamic_rotate %64 by %c671_i32 dim 1 : vector<2x768xf32>, i32 -> vector<2x768xf32>
    %66 = arith.addf %63, %65 : vector<2x768xf32>
    %67 = vector.extract_strided_slice %2 {offsets = [44, 0], sizes = [2, 768], strides = [1, 1]} : vector<50x768xf32> to vector<2x768xf32>
    %c670_i32 = arith.constant 670 : i32
    %68 = tpu.dynamic_rotate %67 by %c670_i32 dim 1 : vector<2x768xf32>, i32 -> vector<2x768xf32>
    %69 = arith.addf %66, %68 : vector<2x768xf32>
    %70 = vector.extract_strided_slice %2 {offsets = [46, 0], sizes = [2, 768], strides = [1, 1]} : vector<50x768xf32> to vector<2x768xf32>
    %c669_i32 = arith.constant 669 : i32
    %71 = tpu.dynamic_rotate %70 by %c669_i32 dim 1 : vector<2x768xf32>, i32 -> vector<2x768xf32>
    %72 = arith.addf %69, %71 : vector<2x768xf32>
    %73 = vector.extract_strided_slice %2 {offsets = [48, 0], sizes = [2, 768], strides = [1, 1]} : vector<50x768xf32> to vector<2x768xf32>
    %c668_i32 = arith.constant 668 : i32
    %74 = tpu.dynamic_rotate %73 by %c668_i32 dim 1 : vector<2x768xf32>, i32 -> vector<2x768xf32>
    %75 = arith.addf %72, %74 : vector<2x768xf32>
    %c0_3 = arith.constant 0 : index
    %c0_4 = arith.constant 0 : index
    %76 = vector.load %arg6[%c0_3, %c0_4] : memref<4x768xf32, #tpu.memory_space<vmem>>, vector<1x768xf32>
    %77 = vector.extract_strided_slice %75 {offsets = [0, 0], sizes = [1, 768], strides = [1, 1]} : vector<2x768xf32> to vector<1x768xf32>
    %78 = arith.mulf %77, %76 : vector<1x768xf32>
    %cst_5 = arith.constant dense<0.000000e+00> : vector<1xf32>
    %79 = vector.multi_reduction <add>, %78, %cst_5 [1] : vector<1x768xf32> to vector<1xf32>
    %80 = vector.shape_cast %79 : vector<1xf32> to vector<1x1xf32>
    %cst_6 = arith.constant 2.500000e-03 : f32
    %81 = vector.broadcast %cst_6 : f32 to vector<1x1xf32>
    %82 = arith.mulf %80, %81 : vector<1x1xf32>
    %83 = vector.broadcast %82 : vector<1x1xf32> to vector<1x768xf32>
    %84 = arith.subf %77, %83 : vector<1x768xf32>
    %85 = arith.mulf %84, %76 : vector<1x768xf32>
    %86 = arith.mulf %85, %85 : vector<1x768xf32>
    %cst_7 = arith.constant dense<0.000000e+00> : vector<1xf32>
    %87 = vector.multi_reduction <add>, %86, %cst_7 [1] : vector<1x768xf32> to vector<1xf32>
    %88 = vector.shape_cast %87 : vector<1xf32> to vector<1x1xf32>
    %cst_8 = arith.constant 2.500000e-03 : f32
    %89 = vector.broadcast %cst_8 : f32 to vector<1x1xf32>
    %90 = arith.mulf %88, %89 : vector<1x1xf32>
    %c0_9 = arith.constant 0 : index
    %91 = memref.load %arg0[%c0_9] : memref<4xf32, #tpu.memory_space<smem>>
    %cst_10 = arith.constant 9.99999974E-6 : f32
    %92 = vector.broadcast %cst_10 : f32 to vector<1x1xf32>
    %93 = arith.addf %90, %92 : vector<1x1xf32>
    %94 = math.rsqrt %93 : vector<1x1xf32>
    %95 = vector.broadcast %91 : f32 to vector<1x1xf32>
    %96 = arith.mulf %95, %94 : vector<1x1xf32>
    %c2 = arith.constant 2 : index
    %97 = memref.load %arg0[%c2] : memref<4xf32, #tpu.memory_space<smem>>
    %98 = arith.mulf %82, %96 : vector<1x1xf32>
    %99 = vector.broadcast %97 : f32 to vector<1x1xf32>
    %100 = arith.subf %99, %98 : vector<1x1xf32>
    %101 = vector.broadcast %96 : vector<1x1xf32> to vector<1x768xf32>
    %102 = arith.mulf %77, %101 : vector<1x768xf32>
    %103 = vector.broadcast %100 : vector<1x1xf32> to vector<1x768xf32>
    %104 = arith.addf %102, %103 : vector<1x768xf32>
    %105 = vector.extract_strided_slice %104 {offsets = [0, 0], sizes = [1, 384], strides = [1, 1]} : vector<1x768xf32> to vector<1x384xf32>
    %c0_11 = arith.constant 0 : index
    %c0_12 = arith.constant 0 : index
    %106 = vector.load %arg8[%c0_11, %c0_12] : memref<2x768xf32, #tpu.memory_space<vmem>>, vector<1x384xf32>
    tpu.vector_store %arg8[%c0_11, %c0_12], %105 {strides = array<i32>} : memref<2x768xf32, #tpu.memory_space<vmem>>, vector<1x384xf32>,
    %107 = vector.extract_strided_slice %104 {offsets = [0, 384], sizes = [1, 384], strides = [1, 1]} : vector<1x768xf32> to vector<1x384xf32>
    %c1 = arith.constant 1 : index
    %c0_13 = arith.constant 0 : index
    %108 = vector.load %arg8[%c1, %c0_13] : memref<2x768xf32, #tpu.memory_space<vmem>>, vector<1x384xf32>
    tpu.vector_store %arg8[%c1, %c0_13], %107 {strides = array<i32>} : memref<2x768xf32, #tpu.memory_space<vmem>>, vector<1x384xf32>,
    %109 = vector.extract_strided_slice %75 {offsets = [1, 0], sizes = [1, 768], strides = [1, 1]} : vector<2x768xf32> to vector<1x768xf32>
    %110 = arith.mulf %109, %76 : vector<1x768xf32>
    %cst_14 = arith.constant dense<0.000000e+00> : vector<1xf32>
    %111 = vector.multi_reduction <add>, %110, %cst_14 [1] : vector<1x768xf32> to vector<1xf32>
    %112 = vector.shape_cast %111 : vector<1xf32> to vector<1x1xf32>
    %cst_15 = arith.constant 2.500000e-03 : f32
    %113 = vector.broadcast %cst_15 : f32 to vector<1x1xf32>
    %114 = arith.mulf %112, %113 : vector<1x1xf32>
    %115 = vector.broadcast %114 : vector<1x1xf32> to vector<1x768xf32>
    %116 = arith.subf %109, %115 : vector<1x768xf32>
    %117 = arith.mulf %116, %76 : vector<1x768xf32>
    %118 = arith.mulf %117, %117 : vector<1x768xf32>
    %cst_16 = arith.constant dense<0.000000e+00> : vector<1xf32>
    %119 = vector.multi_reduction <add>, %118, %cst_16 [1] : vector<1x768xf32> to vector<1xf32>
    %120 = vector.shape_cast %119 : vector<1xf32> to vector<1x1xf32>
    %cst_17 = arith.constant 2.500000e-03 : f32
    %121 = vector.broadcast %cst_17 : f32 to vector<1x1xf32>
    %122 = arith.mulf %120, %121 : vector<1x1xf32>
    %c1_18 = arith.constant 1 : index
    %123 = memref.load %arg0[%c1_18] : memref<4xf32, #tpu.memory_space<smem>>
    %cst_19 = arith.constant 9.99999974E-6 : f32
    %124 = vector.broadcast %cst_19 : f32 to vector<1x1xf32>
    %125 = arith.addf %122, %124 : vector<1x1xf32>
    %126 = math.rsqrt %125 : vector<1x1xf32>
    %127 = vector.broadcast %123 : f32 to vector<1x1xf32>
    %128 = arith.mulf %127, %126 : vector<1x1xf32>
    %c3 = arith.constant 3 : index
    %129 = memref.load %arg0[%c3] : memref<4xf32, #tpu.memory_space<smem>>
    %130 = arith.mulf %114, %128 : vector<1x1xf32>
    %131 = vector.broadcast %129 : f32 to vector<1x1xf32>
    %132 = arith.subf %131, %130 : vector<1x1xf32>
    %133 = vector.broadcast %128 : vector<1x1xf32> to vector<1x768xf32>
    %134 = arith.mulf %109, %133 : vector<1x768xf32>
    %135 = vector.broadcast %132 : vector<1x1xf32> to vector<1x768xf32>
    %136 = arith.addf %134, %135 : vector<1x768xf32>
    %137 = vector.extract_strided_slice %136 {offsets = [0, 0], sizes = [1, 384], strides = [1, 1]} : vector<1x768xf32> to vector<1x384xf32>
    %c0_20 = arith.constant 0 : index
    %c384 = arith.constant 384 : index
    %138 = vector.load %arg8[%c0_20, %c384] : memref<2x768xf32, #tpu.memory_space<vmem>>, vector<1x384xf32>
    tpu.vector_store %arg8[%c0_20, %c384], %137 {strides = array<i32>} : memref<2x768xf32, #tpu.memory_space<vmem>>, vector<1x384xf32>,
    %139 = vector.extract_strided_slice %136 {offsets = [0, 384], sizes = [1, 384], strides = [1, 1]} : vector<1x768xf32> to vector<1x384xf32>
    %c1_21 = arith.constant 1 : index
    %c384_22 = arith.constant 384 : index
    %140 = vector.load %arg8[%c1_21, %c384_22] : memref<2x768xf32, #tpu.memory_space<vmem>>, vector<1x384xf32>
    tpu.vector_store %arg8[%c1_21, %c384_22], %139 {strides = array<i32>} : memref<2x768xf32, #tpu.memory_space<vmem>>, vector<1x384xf32>,
    %c1_23 = arith.constant 1 : index
    %c0_24 = arith.constant 0 : index
    %141 = vector.load %arg6[%c1_23, %c0_24] : memref<4x768xf32, #tpu.memory_space<vmem>>, vector<1x256xf32>
    %c2_25 = arith.constant 2 : index
    %c0_26 = arith.constant 0 : index
    %142 = vector.load %arg6[%c2_25, %c0_26] : memref<4x768xf32, #tpu.memory_space<vmem>>, vector<1x256xf32>
    %c3_27 = arith.constant 3 : index
    %c0_28 = arith.constant 0 : index
    %143 = vector.load %arg6[%c3_27, %c0_28] : memref<4x768xf32, #tpu.memory_space<vmem>>, vector<1x128xf32>
    %c0_29 = arith.constant 0 : index
    %c0_30 = arith.constant 0 : index
    %144 = vector.load %arg8[%c0_29, %c0_30] : memref<2x768xf32, #tpu.memory_space<vmem>>, vector<2x768xf32>
    %145 = arith.truncf %144 : vector<2x768xf32> to vector<2x768xbf16>
    %c0_31 = arith.constant 0 : index
    %c0_32 = arith.constant 0 : index
    %146 = vector.load %arg3[%c0_31, %c0_32] : memref<768x256xbf16, #tpu.memory_space<vmem>>, vector<768x256xbf16>
    %cst_33 = arith.constant dense<0.000000e+00> : vector<2x256xf32>
    %147 = tpu.matmul %145, %146, %cst_33 {dimension_numbers = #tpu.dot_dimension_numbers<[1], [0], [0], [1], [0, 0, 1, 1], [], []>} : vector<2x768xbf16>, vector<768x256xbf16>, vector<2x256xf32> -> vector<2x256xf32>
    %148 = vector.broadcast %141 : vector<1x256xf32> to vector<2x256xf32>
    %149 = arith.addf %147, %148 : vector<2x256xf32>
    %cst_34 = arith.constant 0.000000e+00 : f32
    %150 = vector.broadcast %cst_34 : f32 to vector<2x256xf32>
    %151 = arith.cmpf ogt, %149, %150 : vector<2x256xf32>
    %cst_35 = arith.constant 1.000000e-01 : f32
    %152 = vector.broadcast %cst_35 : f32 to vector<2x256xf32>
    %153 = arith.mulf %152, %149 : vector<2x256xf32>
    %154 = arith.select %151, %149, %153 : vector<2x256xi1>, vector<2x256xf32>
    %155 = arith.truncf %154 : vector<2x256xf32> to vector<2x256xbf16>
    %c0_36 = arith.constant 0 : index
    %c0_37 = arith.constant 0 : index
    %156 = vector.load %arg4[%c0_36, %c0_37] : memref<256x256xbf16, #tpu.memory_space<vmem>>, vector<256x256xbf16>
    %cst_38 = arith.constant dense<0.000000e+00> : vector<2x256xf32>
    %157 = tpu.matmul %155, %156, %cst_38 {dimension_numbers = #tpu.dot_dimension_numbers<[1], [0], [0], [1], [0, 0, 1, 1], [], []>} : vector<2x256xbf16>, vector<256x256xbf16>, vector<2x256xf32> -> vector<2x256xf32>
    %158 = vector.broadcast %142 : vector<1x256xf32> to vector<2x256xf32>
    %159 = arith.addf %157, %158 : vector<2x256xf32>
    %cst_39 = arith.constant 0.000000e+00 : f32
    %160 = vector.broadcast %cst_39 : f32 to vector<2x256xf32>
    %161 = arith.cmpf ogt, %159, %160 : vector<2x256xf32>
    %cst_40 = arith.constant 1.000000e-01 : f32
    %162 = vector.broadcast %cst_40 : f32 to vector<2x256xf32>
    %163 = arith.mulf %162, %159 : vector<2x256xf32>
    %164 = arith.select %161, %159, %163 : vector<2x256xi1>, vector<2x256xf32>
    %165 = arith.truncf %164 : vector<2x256xf32> to vector<2x256xbf16>
    %c0_41 = arith.constant 0 : index
    %c0_42 = arith.constant 0 : index
    %166 = vector.load %arg5[%c0_41, %c0_42] : memref<256x128xbf16, #tpu.memory_space<vmem>>, vector<256x128xbf16>
    %cst_43 = arith.constant dense<0.000000e+00> : vector<2x128xf32>
    %167 = tpu.matmul %165, %166, %cst_43 {dimension_numbers = #tpu.dot_dimension_numbers<[1], [0], [0], [1], [0, 0, 1, 1], [], []>} : vector<2x256xbf16>, vector<256x128xbf16>, vector<2x128xf32> -> vector<2x128xf32>
    %168 = vector.broadcast %143 : vector<1x128xf32> to vector<2x128xf32>
    %169 = arith.addf %167, %168 : vector<2x128xf32>
    %c0_44 = arith.constant 0 : index
    %c0_45 = arith.constant 0 : index
    %170 = vector.load %arg7[%c0_44, %c0_45] : memref<2x128xf32, #tpu.memory_space<vmem>>, vector<2x128xf32>
    tpu.vector_store %arg7[%c0_44, %c0_45], %169 {strides = array<i32>} : memref<2x128xf32, #tpu.memory_space<vmem>>, vector<2x128xf32>,
    return
  }
}

</mosaic_0001>

<llo_original>
// kernel: tpu_custom_call.1
$region0: #{tpu_custom_call.1}
  #allocation0 [shape = 'u32[]', space=smem, size = 0x4, offset = 0x4, fixed_abs, tag = 'smem constant byte address 0x4 - core index']
  #allocation1 [shape = 'u32[144,128]{1,0:T(1,128)}', space=vmem, size = 0x12000, scoped, tag = 'internal scratch']
  #allocation2 [shape = 'f32[2,768]{1,0:T(2,128)}', space=vmem, size = 0x1800, scoped, tag = 'scratch operand']
  %s0 = inlined_call_operand.hbm [shape: f32[4], index: 0, kind: input, shape index: {}]
  %s1 = inlined_call_operand.hbm [shape: bf16[256,768], index: 1, kind: input, shape index: {}]
  %s2 = inlined_call_operand.hbm [shape: bf16[50,256], index: 2, kind: input, shape index: {}]
  %s3 = inlined_call_operand.hbm [shape: bf16[768,256], index: 3, kind: input, shape index: {}]
  %s4 = inlined_call_operand.hbm [shape: bf16[256,256], index: 4, kind: input, shape index: {}]
  %s5 = inlined_call_operand.hbm [shape: bf16[256,128], index: 5, kind: input, shape index: {}]
  %s6 = inlined_call_operand.hbm [shape: f32[4,768], index: 6, kind: input, shape index: {}]
  %s7 = inlined_call_operand.hbm [shape: f32[2,128], index: 7, kind: output, shape index: {}]
  %s8 = sld [smem:[#allocation0]]
  $region66: #{tpu_custom_call.1} parent=0
    _
  %s10 = ssub.s32 1, %s8
  %s11 = scalar_select 0, %s10, %s8
  $region1: #{tpu_custom_call.1} parent=0
    #allocation3 [shape = 'u8[512]{0}', space=smem, size = 0x200, scoped, tag = 'input window, operand 0, single buffered']
    #allocation4 [shape = 's32[1]{0}', space=sflag, size = 0x4, scoped, tag = 'scoped memory for tpu_custom_call.1']
    #allocation5 [shape = 's32[1]{0}', space=sflag, size = 0x4, scoped, tag = 'scoped memory for tpu_custom_call.1']
    #allocation6 [shape = 's32[1]{0}', space=sflag, size = 0x4, scoped, tag = 'scoped memory for tpu_custom_call.1']
    #allocation7 [shape = 'u8[393216]{0}', space=vmem, size = 0x60000, scoped, tag = 'input window, operand 1, single buffered']
    #allocation8 [shape = 'u8[28672]{0}', space=vmem, size = 0x7000, scoped, tag = 'input window, operand 2, single buffered']
    #allocation9 [shape = 's32[1]{0}', space=sflag, size = 0x4, scoped, tag = 'scoped memory for tpu_custom_call.1']
    #allocation10 [shape = 'u8[393216]{0}', space=vmem, size = 0x60000, scoped, tag = 'input window, operand 3, single buffered']
    #allocation11 [shape = 'u8[131072]{0}', space=vmem, size = 0x20000, scoped, tag = 'input window, operand 4, single buffered']
    #allocation12 [shape = 's32[1]{0}', space=sflag, size = 0x4, scoped, tag = 'scoped memory for tpu_custom_call.1']
    #allocation13 [shape = 'u8[65536]{0}', space=vmem, size = 0x10000, scoped, tag = 'input window, operand 5, single buffered']
    #allocation14 [shape = 'u8[12288]{0}', space=vmem, size = 0x3000, scoped, tag = 'input window, operand 6, single buffered']
    #allocation15 [shape = 's32[1]{0}', space=sflag, size = 0x4, scoped, tag = 'scoped memory for tpu_custom_call.1']
    #allocation16 [shape = 'u8[1024]{0}', space=vmem, size = 0x400, scoped, tag = 'output window, operand 0, single buffered']
    %12 = vsyncpa [#allocation6], 0
    %13 = vsyncpa [#allocation4], 0
    %14 = vsyncpa [#allocation9], 0
    %15 = vsyncpa [#allocation12], 0
    %16 = vsyncpa [#allocation15], 0
    %17 = vsyncpa [#allocation5], 0
    // Predicated region
    $region2: #{tpu_custom_call.1} parent=1 // pred_check
      _
    $region3: #{tpu_custom_call.1} parent=1 // pred_check_branch
      %19 = sbr.rel (0) target = $region5
    $region4: #{tpu_custom_call.1} parent=1 // pred_region
      %s21 = ssub.s32 16, 16
      %22 = vsyncadd [#allocation6], %s21
      %25 = dma.hbm_to_smem %s0, 16, [#allocation3], [#allocation6]
    $region5: #{tpu_custom_call.1} parent=1 // pred_fallthru
      _
    // Predicated region
    $region6: #{tpu_custom_call.1} parent=1 // pred_check
      _
    $region7: #{tpu_custom_call.1} parent=1 // pred_check_branch
      %27 = sbr.rel (0) target = $region9
    $region8: #{tpu_custom_call.1} parent=1 // pred_region
      %s29 = ssub.s32 12288, 12288
      %30 = vsyncadd [#allocation4], %s29
      %s31 = sshll.u32 [#allocation7], 4
      %s32 = int_to_ptr.vmem [resolvable:$true] %s31
      %37 = dma.hbm_to_vmem [thread:$0]  %s1, 12288, %s32, [#allocation4], 384, 384, 24
    $region9: #{tpu_custom_call.1} parent=1 // pred_fallthru
      _
    // Predicated region
    $region10: #{tpu_custom_call.1} parent=1 // pred_check
      _
    $region11: #{tpu_custom_call.1} parent=1 // pred_check_branch
      %39 = sbr.rel (0) target = $region13
    $region12: #{tpu_custom_call.1} parent=1 // pred_region
      %s41 = ssub.s32 896, 896
      %42 = vsyncadd [#allocation9], %s41
      %s43 = sshll.u32 [#allocation8], 4
      %s44 = int_to_ptr.vmem [resolvable:$true] %s43
      %49 = dma.hbm_to_vmem [thread:$0]  %s2, 896, %s44, [#allocation9], 128, 128, 8
    $region13: #{tpu_custom_call.1} parent=1 // pred_fallthru
      _
    // Predicated region
    $region14: #{tpu_custom_call.1} parent=1 // pred_check
      _
    $region15: #{tpu_custom_call.1} parent=1 // pred_check_branch
      %51 = sbr.rel (0) target = $region17
    $region16: #{tpu_custom_call.1} parent=1 // pred_region
      %s53 = ssub.s32 12288, 12288
      %54 = vsyncadd [#allocation9], %s53
      %s55 = sshll.u32 [#allocation10], 4
      %s56 = int_to_ptr.vmem [resolvable:$true] %s55
      %61 = dma.hbm_to_vmem [thread:$0]  %s3, 12288, %s56, [#allocation9], 128, 128, 8
    $region17: #{tpu_custom_call.1} parent=1 // pred_fallthru
      _
    // Predicated region
    $region18: #{tpu_custom_call.1} parent=1 // pred_check
      _
    $region19: #{tpu_custom_call.1} parent=1 // pred_check_branch
      %63 = sbr.rel (0) target = $region21
    $region20: #{tpu_custom_call.1} parent=1 // pred_region
      %s65 = ssub.s32 4096, 4096
      %66 = vsyncadd [#allocation12], %s65
      %s67 = sshll.u32 [#allocation11], 4
      %s68 = int_to_ptr.vmem [resolvable:$true] %s67
      %73 = dma.hbm_to_vmem [thread:$0]  %s4, 4096, %s68, [#allocation12], 128, 128, 8
    $region21: #{tpu_custom_call.1} parent=1 // pred_fallthru
      _
    // Predicated region
    $region22: #{tpu_custom_call.1} parent=1 // pred_check
      _
    $region23: #{tpu_custom_call.1} parent=1 // pred_check_branch
      %75 = sbr.rel (0) target = $region25
    $region24: #{tpu_custom_call.1} parent=1 // pred_region
      %s77 = ssub.s32 2048, 2048
      %78 = vsyncadd [#allocation12], %s77
      %s79 = sshll.u32 [#allocation13], 4
      %s80 = int_to_ptr.vmem [resolvable:$true] %s79
      %85 = dma.hbm_to_vmem [thread:$0]  %s5, 2048, %s80, [#allocation12], 64, 64, 4
    $region25: #{tpu_custom_call.1} parent=1 // pred_fallthru
      _
    // Predicated region
    $region26: #{tpu_custom_call.1} parent=1 // pred_check
      _
    $region27: #{tpu_custom_call.1} parent=1 // pred_check_branch
      %87 = sbr.rel (0) target = $region29
    $region28: #{tpu_custom_call.1} parent=1 // pred_region
      %s89 = ssub.s32 384, 384
      %90 = vsyncadd [#allocation15], %s89
      %s92 = sshll.u32 [#allocation14], 4
      %s93 = int_to_ptr.vmem [resolvable:$true] %s92
      %95 = dma.hbm_to_vmem [thread:$0]  %s6, 384, %s93, [#allocation15]
    $region29: #{tpu_custom_call.1} parent=1 // pred_fallthru
      _
    // Predicated region
    $region30: #{tpu_custom_call.1} parent=1 // pred_check
      _
    $region31: #{tpu_custom_call.1} parent=1 // pred_check_branch
      %97 = sbr.rel (0) target = $region33
    $region32: #{tpu_custom_call.1} parent=1 // pred_region
      %98 = dma.done [#allocation6], 16
    $region33: #{tpu_custom_call.1} parent=1 // pred_fallthru
      _
    // Predicated region
    $region34: #{tpu_custom_call.1} parent=1 // pred_check
      _
    $region35: #{tpu_custom_call.1} parent=1 // pred_check_branch
      %100 = sbr.rel (0) target = $region37
    $region36: #{tpu_custom_call.1} parent=1 // pred_region
      %101 = dma.done [#allocation4], 12288
    $region37: #{tpu_custom_call.1} parent=1 // pred_fallthru
      _
    // Predicated region
    $region38: #{tpu_custom_call.1} parent=1 // pred_check
      _
    $region39: #{tpu_custom_call.1} parent=1 // pred_check_branch
      %103 = sbr.rel (0) target = $region41
    $region40: #{tpu_custom_call.1} parent=1 // pred_region
      %104 = dma.done [#allocation9], 896
    $region41: #{tpu_custom_call.1} parent=1 // pred_fallthru
      _
    // Predicated region
    $region42: #{tpu_custom_call.1} parent=1 // pred_check
      _
    $region43: #{tpu_custom_call.1} parent=1 // pred_check_branch
      %106 = sbr.rel (0) target = $region45
    $region44: #{tpu_custom_call.1} parent=1 // pred_region
      %107 = dma.done [#allocation9], 12288
    $region45: #{tpu_custom_call.1} parent=1 // pred_fallthru
      _
    // Predicated region
    $region46: #{tpu_custom_call.1} parent=1 // pred_check
      _
    $region47: #{tpu_custom_call.1} parent=1 // pred_check_branch
      %109 = sbr.rel (0) target = $region49
    $region48: #{tpu_custom_call.1} parent=1 // pred_region
      %110 = dma.done [#allocation12], 4096
    $region49: #{tpu_custom_call.1} parent=1 // pred_fallthru
      _
    // Predicated region
    $region50: #{tpu_custom_call.1} parent=1 // pred_check
      _
    $region51: #{tpu_custom_call.1} parent=1 // pred_check_branch
      %112 = sbr.rel (0) target = $region53
    $region52: #{tpu_custom_call.1} parent=1 // pred_region
      %113 = dma.done [#allocation12], 2048
    $region53: #{tpu_custom_call.1} parent=1 // pred_fallthru
      _
    // Predicated region
    $region54: #{tpu_custom_call.1} parent=1 // pred_check
      _
    $region55: #{tpu_custom_call.1} parent=1 // pred_check_branch
      %115 = sbr.rel (0) target = $region57
    $region56: #{tpu_custom_call.1} parent=1 // pred_region
      %116 = dma.done [#allocation15], 384
    $region57: #{tpu_custom_call.1} parent=1 // pred_fallthru
      _
    %117 = sfence
    %v119 = vld [vmem:[#allocation8] sm:$0xff]
    %v120 = vld [vmem:[#allocation8 + $0x8] sm:$0xff]
    %v121 = vld [vmem:[#allocation8 + $0x10] sm:$0xff]
    %v122 = vld [vmem:[#allocation8 + $0x18] sm:$0xff]
    %v123 = vld [vmem:[#allocation8 + $0x20] sm:$0xff]
    %v124 = vld [vmem:[#allocation8 + $0x28] sm:$0xff]
    %v125 = vld [vmem:[#allocation8 + $0x30] sm:$0x11]
    %v126 = vld [vmem:[#allocation7] sm:$0xff]
    %v127 = vld [vmem:[#allocation7 + $0x8] sm:$0xff]
    %v128 = vld [vmem:[#allocation7 + $0x10] sm:$0xff]
    %v129 = vld [vmem:[#allocation7 + $0x18] sm:$0xff]
    %v130 = vld [vmem:[#allocation7 + $0x20] sm:$0xff]
    %v131 = vld [vmem:[#allocation7 + $0x28] sm:$0xff]
    %v132 = vld [vmem:[#allocation7 + $0x30] sm:$0xff]
    %v133 = vld [vmem:[#allocation7 + $0x38] sm:$0xff]
    %v134 = vld [vmem:[#allocation7 + $0x40] sm:$0xff]
    %v135 = vld [vmem:[#allocation7 + $0x48] sm:$0xff]
    %v136 = vld [vmem:[#allocation7 + $0x50] sm:$0xff]
    %v137 = vld [vmem:[#allocation7 + $0x58] sm:$0xff]
    %v138 = vld [vmem:[#allocation7 + $0x60] sm:$0xff]
    %v139 = vld [vmem:[#allocation7 + $0x68] sm:$0xff]
    %v140 = vld [vmem:[#allocation7 + $0x70] sm:$0xff]
    %v141 = vld [vmem:[#allocation7 + $0x78] sm:$0xff]
    %v142 = vld [vmem:[#allocation7 + $0x80] sm:$0xff]
    %v143 = vld [vmem:[#allocation7 + $0x88] sm:$0xff]
    %v144 = vld [vmem:[#allocation7 + $0x90] sm:$0xff]
    %v145 = vld [vmem:[#allocation7 + $0x98] sm:$0xff]
    %v146 = vld [vmem:[#allocation7 + $0xa0] sm:$0xff]
    %v147 = vld [vmem:[#allocation7 + $0xa8] sm:$0xff]
    %v148 = vld [vmem:[#allocation7 + $0xb0] sm:$0xff]
    %v149 = vld [vmem:[#allocation7 + $0xb8] sm:$0xff]
    %v150 = vld [vmem:[#allocation7 + $0xc0] sm:$0xff]
    %v151 = vld [vmem:[#allocation7 + $0xc8] sm:$0xff]
    %v152 = vld [vmem:[#allocation7 + $0xd0] sm:$0xff]
    %v153 = vld [vmem:[#allocation7 + $0xd8] sm:$0xff]
    %v154 = vld [vmem:[#allocation7 + $0xe0] sm:$0xff]
    %v155 = vld [vmem:[#allocation7 + $0xe8] sm:$0xff]
    %v156 = vld [vmem:[#allocation7 + $0xf0] sm:$0xff]
    %v157 = vld [vmem:[#allocation7 + $0xf8] sm:$0xff]
    %v158 = vld [vmem:[#allocation7 + $0x100] sm:$0xff]
    %v159 = vld [vmem:[#allocation7 + $0x108] sm:$0xff]
    %v160 = vld [vmem:[#allocation7 + $0x110] sm:$0xff]
    %v161 = vld [vmem:[#allocation7 + $0x118] sm:$0xff]
    %v162 = vld [vmem:[#allocation7 + $0x120] sm:$0xff]
    %v163 = vld [vmem:[#allocation7 + $0x128] sm:$0xff]
    %v164 = vld [vmem:[#allocation7 + $0x130] sm:$0xff]
    %v165 = vld [vmem:[#allocation7 + $0x138] sm:$0xff]
    %v166 = vld [vmem:[#allocation7 + $0x140] sm:$0xff]
    %v167 = vld [vmem:[#allocation7 + $0x148] sm:$0xff]
    %v168 = vld [vmem:[#allocation7 + $0x150] sm:$0xff]
    %v169 = vld [vmem:[#allocation7 + $0x158] sm:$0xff]
    %v170 = vld [vmem:[#allocation7 + $0x160] sm:$0xff]
    %v171 = vld [vmem:[#allocation7 + $0x168] sm:$0xff]
    %v172 = vld [vmem:[#allocation7 + $0x170] sm:$0xff]
    %v173 = vld [vmem:[#allocation7 + $0x178] sm:$0xff]
    %v174 = vld [vmem:[#allocation7 + $0x180] sm:$0xff]
    %v175 = vld [vmem:[#allocation7 + $0x188] sm:$0xff]
    %v176 = vld [vmem:[#allocation7 + $0x190] sm:$0xff]
    %v177 = vld [vmem:[#allocation7 + $0x198] sm:$0xff]
    %v178 = vld [vmem:[#allocation7 + $0x1a0] sm:$0xff]
    %v179 = vld [vmem:[#allocation7 + $0x1a8] sm:$0xff]
    %v180 = vld [vmem:[#allocation7 + $0x1b0] sm:$0xff]
    %v181 = vld [vmem:[#allocation7 + $0x1b8] sm:$0xff]
    %v182 = vld [vmem:[#allocation7 + $0x1c0] sm:$0xff]
    %v183 = vld [vmem:[#allocation7 + $0x1c8] sm:$0xff]
    %v184 = vld [vmem:[#allocation7 + $0x1d0] sm:$0xff]
    %v185 = vld [vmem:[#allocation7 + $0x1d8] sm:$0xff]
    %v186 = vld [vmem:[#allocation7 + $0x1e0] sm:$0xff]
    %v187 = vld [vmem:[#allocation7 + $0x1e8] sm:$0xff]
    %v188 = vld [vmem:[#allocation7 + $0x1f0] sm:$0xff]
    %v189 = vld [vmem:[#allocation7 + $0x1f8] sm:$0xff]
    %v190 = vld [vmem:[#allocation7 + $0x200] sm:$0xff]
    %v191 = vld [vmem:[#allocation7 + $0x208] sm:$0xff]
    %v192 = vld [vmem:[#allocation7 + $0x210] sm:$0xff]
    %v193 = vld [vmem:[#allocation7 + $0x218] sm:$0xff]
    %v194 = vld [vmem:[#allocation7 + $0x220] sm:$0xff]
    %v195 = vld [vmem:[#allocation7 + $0x228] sm:$0xff]
    %v196 = vld [vmem:[#allocation7 + $0x230] sm:$0xff]
    %v197 = vld [vmem:[#allocation7 + $0x238] sm:$0xff]
    %v198 = vld [vmem:[#allocation7 + $0x240] sm:$0xff]
    %v199 = vld [vmem:[#allocation7 + $0x248] sm:$0xff]
    %v200 = vld [vmem:[#allocation7 + $0x250] sm:$0xff]
    %v201 = vld [vmem:[#allocation7 + $0x258] sm:$0xff]
    %v202 = vld [vmem:[#allocation7 + $0x260] sm:$0xff]
    %v203 = vld [vmem:[#allocation7 + $0x268] sm:$0xff]
    %v204 = vld [vmem:[#allocation7 + $0x270] sm:$0xff]
    %v205 = vld [vmem:[#allocation7 + $0x278] sm:$0xff]
    %v206 = vld [vmem:[#allocation7 + $0x280] sm:$0xff]
    %v207 = vld [vmem:[#allocation7 + $0x288] sm:$0xff]
    %v208 = vld [vmem:[#allocation7 + $0x290] sm:$0xff]
    %v209 = vld [vmem:[#allocation7 + $0x298] sm:$0xff]
    %v210 = vld [vmem:[#allocation7 + $0x2a0] sm:$0xff]
    %v211 = vld [vmem:[#allocation7 + $0x2a8] sm:$0xff]
    %v212 = vld [vmem:[#allocation7 + $0x2b0] sm:$0xff]
    %v213 = vld [vmem:[#allocation7 + $0x2b8] sm:$0xff]
    %v214 = vld [vmem:[#allocation7 + $0x2c0] sm:$0xff]
    %v215 = vld [vmem:[#allocation7 + $0x2c8] sm:$0xff]
    %v216 = vld [vmem:[#allocation7 + $0x2d0] sm:$0xff]
    %v217 = vld [vmem:[#allocation7 + $0x2d8] sm:$0xff]
    %v218 = vld [vmem:[#allocation7 + $0x2e0] sm:$0xff]
    %v219 = vld [vmem:[#allocation7 + $0x2e8] sm:$0xff]
    %v220 = vld [vmem:[#allocation7 + $0x2f0] sm:$0xff]
    %v221 = vld [vmem:[#allocation7 + $0x2f8] sm:$0xff]
    %v229 = vunpack.c.l.b16 %v119
    %v230 = vunpack.c.h.b16 %v119
    %v231 = vunpack.c.l.b16 %v120
    %v232 = vunpack.c.h.b16 %v120
    %v233 = vunpack.c.l.b16 %v121
    %v234 = vunpack.c.h.b16 %v121
    %v235 = vunpack.c.l.b16 %v122
    %v236 = vunpack.c.h.b16 %v122
    %v237 = vunpack.c.l.b16 %v123
    %v238 = vunpack.c.h.b16 %v123
    %v239 = vunpack.c.l.b16 %v124
    %v240 = vunpack.c.h.b16 %v124
    %v241 = vunpack.c.l.b16 %v125
    %v242 = vunpack.c.h.b16 %v125
    %v243 = vpack.c.b16 %v231, %v229
    %v244 = vpack.c.b16 %v232, %v230
    %v245 = vpack.c.b16 %v235, %v233
    %v246 = vpack.c.b16 %v236, %v234
    %v247 = vpack.c.b16 %v239, %v237
    %v248 = vpack.c.b16 %v240, %v238
    %v249 = vpack.c.b16 %v241, %v241
    %v250 = vpack.c.b16 %v242, %v242
    %v355 = vunpack.c.l.b16 %v126
    %v356 = vunpack.c.h.b16 %v126
    %v357 = vunpack.c.l.b16 %v127
    %v358 = vunpack.c.h.b16 %v127
    %v359 = vunpack.c.l.b16 %v128
    %v360 = vunpack.c.h.b16 %v128
    %v361 = vunpack.c.l.b16 %v129
    %v362 = vunpack.c.h.b16 %v129
    %v363 = vunpack.c.l.b16 %v130
    %v364 = vunpack.c.h.b16 %v130
    %v365 = vunpack.c.l.b16 %v131
    %v366 = vunpack.c.h.b16 %v131
    %v367 = vunpack.c.l.b16 %v132
    %v368 = vunpack.c.h.b16 %v132
    %v369 = vunpack.c.l.b16 %v133
    %v370 = vunpack.c.h.b16 %v133
    %v371 = vunpack.c.l.b16 %v134
    %v372 = vunpack.c.h.b16 %v134
    %v373 = vunpack.c.l.b16 %v135
    %v374 = vunpack.c.h.b16 %v135
    %v375 = vunpack.c.l.b16 %v136
    %v376 = vunpack.c.h.b16 %v136
    %v377 = vunpack.c.l.b16 %v137
    %v378 = vunpack.c.h.b16 %v137
    %v379 = vunpack.c.l.b16 %v138
    %v380 = vunpack.c.h.b16 %v138
    %v381 = vunpack.c.l.b16 %v139
    %v382 = vunpack.c.h.b16 %v139
    %v383 = vunpack.c.l.b16 %v140
    %v384 = vunpack.c.h.b16 %v140
    %v385 = vunpack.c.l.b16 %v141
    %v386 = vunpack.c.h.b16 %v141
    %v387 = vunpack.c.l.b16 %v142
    %v388 = vunpack.c.h.b16 %v142
    %v389 = vunpack.c.l.b16 %v143
    %v390 = vunpack.c.h.b16 %v143
    %v391 = vunpack.c.l.b16 %v144
    %v392 = vunpack.c.h.b16 %v144
    %v393 = vunpack.c.l.b16 %v145
    %v394 = vunpack.c.h.b16 %v145
    %v395 = vunpack.c.l.b16 %v146
    %v396 = vunpack.c.h.b16 %v146
    %v397 = vunpack.c.l.b16 %v147
    %v398 = vunpack.c.h.b16 %v147
    %v399 = vunpack.c.l.b16 %v148
    %v400 = vunpack.c.h.b16 %v148
    %v401 = vunpack.c.l.b16 %v149
    %v402 = vunpack.c.h.b16 %v149
    %v403 = vunpack.c.l.b16 %v150
    %v404 = vunpack.c.h.b16 %v150
    %v405 = vunpack.c.l.b16 %v151
    %v406 = vunpack.c.h.b16 %v151
    %v407 = vunpack.c.l.b16 %v152
    %v408 = vunpack.c.h.b16 %v152
    %v409 = vunpack.c.l.b16 %v153
    %v410 = vunpack.c.h.b16 %v153
    %v411 = vunpack.c.l.b16 %v154
    %v412 = vunpack.c.h.b16 %v154
    %v413 = vunpack.c.l.b16 %v155
    %v414 = vunpack.c.h.b16 %v155
    %v415 = vunpack.c.l.b16 %v156
    %v416 = vunpack.c.h.b16 %v156
    %v417 = vunpack.c.l.b16 %v157
    %v418 = vunpack.c.h.b16 %v157
    %v419 = vunpack.c.l.b16 %v158
    %v420 = vunpack.c.h.b16 %v158
    %v421 = vunpack.c.l.b16 %v159
    %v422 = vunpack.c.h.b16 %v159
    %v423 = vunpack.c.l.b16 %v160
    %v424 = vunpack.c.h.b16 %v160
    %v425 = vunpack.c.l.b16 %v161
    %v426 = vunpack.c.h.b16 %v161
    %v427 = vunpack.c.l.b16 %v162
    %v428 = vunpack.c.h.b16 %v162
    %v429 = vunpack.c.l.b16 %v163
    %v430 = vunpack.c.h.b16 %v163
    %v431 = vunpack.c.l.b16 %v164
    %v432 = vunpack.c.h.b16 %v164
    %v433 = vunpack.c.l.b16 %v165
    %v434 = vunpack.c.h.b16 %v165
    %v435 = vunpack.c.l.b16 %v166
    %v436 = vunpack.c.h.b16 %v166
    %v437 = vunpack.c.l.b16 %v167
    %v438 = vunpack.c.h.b16 %v167
    %v439 = vunpack.c.l.b16 %v168
    %v440 = vunpack.c.h.b16 %v168
    %v441 = vunpack.c.l.b16 %v169
    %v442 = vunpack.c.h.b16 %v169
    %v443 = vunpack.c.l.b16 %v170
    %v444 = vunpack.c.h.b16 %v170
    %v445 = vunpack.c.l.b16 %v171
    %v446 = vunpack.c.h.b16 %v171
    %v447 = vunpack.c.l.b16 %v172
    %v448 = vunpack.c.h.b16 %v172
    %v449 = vunpack.c.l.b16 %v173
    %v450 = vunpack.c.h.b16 %v173
    %v451 = vunpack.c.l.b16 %v174
    %v452 = vunpack.c.h.b16 %v174
    %v453 = vunpack.c.l.b16 %v175
    %v454 = vunpack.c.h.b16 %v175
    %v455 = vunpack.c.l.b16 %v176
    %v456 = vunpack.c.h.b16 %v176
    %v457 = vunpack.c.l.b16 %v177
    %v458 = vunpack.c.h.b16 %v177
    %v459 = vunpack.c.l.b16 %v178
    %v460 = vunpack.c.h.b16 %v178
    %v461 = vunpack.c.l.b16 %v179
    %v462 = vunpack.c.h.b16 %v179
    %v463 = vunpack.c.l.b16 %v180
    %v464 = vunpack.c.h.b16 %v180
    %v465 = vunpack.c.l.b16 %v181
    %v466 = vunpack.c.h.b16 %v181
    %v467 = vunpack.c.l.b16 %v182
    %v468 = vunpack.c.h.b16 %v182
    %v469 = vunpack.c.l.b16 %v183
    %v470 = vunpack.c.h.b16 %v183
    %v471 = vunpack.c.l.b16 %v184
    %v472 = vunpack.c.h.b16 %v184
    %v473 = vunpack.c.l.b16 %v185
    %v474 = vunpack.c.h.b16 %v185
    %v475 = vunpack.c.l.b16 %v186
    %v476 = vunpack.c.h.b16 %v186
    %v477 = vunpack.c.l.b16 %v187
    %v478 = vunpack.c.h.b16 %v187
    %v479 = vunpack.c.l.b16 %v188
    %v480 = vunpack.c.h.b16 %v188
    %v481 = vunpack.c.l.b16 %v189
    %v482 = vunpack.c.h.b16 %v189
    %v483 = vunpack.c.l.b16 %v190
    %v484 = vunpack.c.h.b16 %v190
    %v485 = vunpack.c.l.b16 %v191
    %v486 = vunpack.c.h.b16 %v191
    %v487 = vunpack.c.l.b16 %v192
    %v488 = vunpack.c.h.b16 %v192
    %v489 = vunpack.c.l.b16 %v193
    %v490 = vunpack.c.h.b16 %v193
    %v491 = vunpack.c.l.b16 %v194
    %v492 = vunpack.c.h.b16 %v194
    %v493 = vunpack.c.l.b16 %v195
    %v494 = vunpack.c.h.b16 %v195
    %v495 = vunpack.c.l.b16 %v196
    %v496 = vunpack.c.h.b16 %v196
    %v497 = vunpack.c.l.b16 %v197
    %v498 = vunpack.c.h.b16 %v197
    %v499 = vunpack.c.l.b16 %v198
    %v500 = vunpack.c.h.b16 %v198
    %v501 = vunpack.c.l.b16 %v199
    %v502 = vunpack.c.h.b16 %v199
    %v503 = vunpack.c.l.b16 %v200
    %v504 = vunpack.c.h.b16 %v200
    %v505 = vunpack.c.l.b16 %v201
    %v506 = vunpack.c.h.b16 %v201
    %v507 = vunpack.c.l.b16 %v202
    %v508 = vunpack.c.h.b16 %v202
    %v509 = vunpack.c.l.b16 %v203
    %v510 = vunpack.c.h.b16 %v203
    %v511 = vunpack.c.l.b16 %v204
    %v512 = vunpack.c.h.b16 %v204
    %v513 = vunpack.c.l.b16 %v205
    %v514 = vunpack.c.h.b16 %v205
    %v515 = vunpack.c.l.b16 %v206
    %v516 = vunpack.c.h.b16 %v206
    %v517 = vunpack.c.l.b16 %v207
    %v518 = vunpack.c.h.b16 %v207
    %v519 = vunpack.c.l.b16 %v208
    %v520 = vunpack.c.h.b16 %v208
    %v521 = vunpack.c.l.b16 %v209
    %v522 = vunpack.c.h.b16 %v209
    %v523 = vunpack.c.l.b16 %v210
    %v524 = vunpack.c.h.b16 %v210
    %v525 = vunpack.c.l.b16 %v211
    %v526 = vunpack.c.h.b16 %v211
    %v527 = vunpack.c.l.b16 %v212
    %v528 = vunpack.c.h.b16 %v212
    %v529 = vunpack.c.l.b16 %v213
    %v530 = vunpack.c.h.b16 %v213
    %v531 = vunpack.c.l.b16 %v214
    %v532 = vunpack.c.h.b16 %v214
    %v533 = vunpack.c.l.b16 %v215
    %v534 = vunpack.c.h.b16 %v215
    %v535 = vunpack.c.l.b16 %v216
    %v536 = vunpack.c.h.b16 %v216
    %v537 = vunpack.c.l.b16 %v217
    %v538 = vunpack.c.h.b16 %v217
    %v539 = vunpack.c.l.b16 %v218
    %v540 = vunpack.c.h.b16 %v218
    %v541 = vunpack.c.l.b16 %v219
    %v542 = vunpack.c.h.b16 %v219
    %v543 = vunpack.c.l.b16 %v220
    %v544 = vunpack.c.h.b16 %v220
    %v545 = vunpack.c.l.b16 %v221
    %v546 = vunpack.c.h.b16 %v221
    %v547 = vpack.c.b16 %v361, %v355
    %v548 = vpack.c.b16 %v362, %v356
    %v549 = vpack.c.b16 %v363, %v357
    %v550 = vpack.c.b16 %v364, %v358
    %v551 = vpack.c.b16 %v365, %v359
    %v552 = vpack.c.b16 %v366, %v360
    %v553 = vpack.c.b16 %v373, %v367
    %v554 = vpack.c.b16 %v374, %v368
    %v555 = vpack.c.b16 %v375, %v369
    %v556 = vpack.c.b16 %v376, %v370
    %v557 = vpack.c.b16 %v377, %v371
    %v558 = vpack.c.b16 %v378, %v372
    %v559 = vpack.c.b16 %v385, %v379
    %v560 = vpack.c.b16 %v386, %v380
    %v561 = vpack.c.b16 %v387, %v381
    %v562 = vpack.c.b16 %v388, %v382
    %v563 = vpack.c.b16 %v389, %v383
    %v564 = vpack.c.b16 %v390, %v384
    %v565 = vpack.c.b16 %v397, %v391
    %v566 = vpack.c.b16 %v398, %v392
    %v567 = vpack.c.b16 %v399, %v393
    %v568 = vpack.c.b16 %v400, %v394
    %v569 = vpack.c.b16 %v401, %v395
    %v570 = vpack.c.b16 %v402, %v396
    %v571 = vpack.c.b16 %v409, %v403
    %v572 = vpack.c.b16 %v410, %v404
    %v573 = vpack.c.b16 %v411, %v405
    %v574 = vpack.c.b16 %v412, %v406
    %v575 = vpack.c.b16 %v413, %v407
    %v576 = vpack.c.b16 %v414, %v408
    %v577 = vpack.c.b16 %v421, %v415
    %v578 = vpack.c.b16 %v422, %v416
    %v579 = vpack.c.b16 %v423, %v417
    %v580 = vpack.c.b16 %v424, %v418
    %v581 = vpack.c.b16 %v425, %v419
    %v582 = vpack.c.b16 %v426, %v420
    %v583 = vpack.c.b16 %v433, %v427
    %v584 = vpack.c.b16 %v434, %v428
    %v585 = vpack.c.b16 %v435, %v429
    %v586 = vpack.c.b16 %v436, %v430
    %v587 = vpack.c.b16 %v437, %v431
    %v588 = vpack.c.b16 %v438, %v432
    %v589 = vpack.c.b16 %v445, %v439
    %v590 = vpack.c.b16 %v446, %v440
    %v591 = vpack.c.b16 %v447, %v441
    %v592 = vpack.c.b16 %v448, %v442
    %v593 = vpack.c.b16 %v449, %v443
    %v594 = vpack.c.b16 %v450, %v444
    %v595 = vpack.c.b16 %v457, %v451
    %v596 = vpack.c.b16 %v458, %v452
    %v597 = vpack.c.b16 %v459, %v453
    %v598 = vpack.c.b16 %v460, %v454
    %v599 = vpack.c.b16 %v461, %v455
    %v600 = vpack.c.b16 %v462, %v456
    %v601 = vpack.c.b16 %v469, %v463
    %v602 = vpack.c.b16 %v470, %v464
    %v603 = vpack.c.b16 %v471, %v465
    %v604 = vpack.c.b16 %v472, %v466
    %v605 = vpack.c.b16 %v473, %v467
    %v606 = vpack.c.b16 %v474, %v468
    %v607 = vpack.c.b16 %v481, %v475
    %v608 = vpack.c.b16 %v482, %v476
    %v609 = vpack.c.b16 %v483, %v477
    %v610 = vpack.c.b16 %v484, %v478
    %v611 = vpack.c.b16 %v485, %v479
    %v612 = vpack.c.b16 %v486, %v480
    %v613 = vpack.c.b16 %v493, %v487
    %v614 = vpack.c.b16 %v494, %v488
    %v615 = vpack.c.b16 %v495, %v489
    %v616 = vpack.c.b16 %v496, %v490
    %v617 = vpack.c.b16 %v497, %v491
    %v618 = vpack.c.b16 %v498, %v492
    %v619 = vpack.c.b16 %v505, %v499
    %v620 = vpack.c.b16 %v506, %v500
    %v621 = vpack.c.b16 %v507, %v501
    %v622 = vpack.c.b16 %v508, %v502
    %v623 = vpack.c.b16 %v509, %v503
    %v624 = vpack.c.b16 %v510, %v504
    %v625 = vpack.c.b16 %v517, %v511
    %v626 = vpack.c.b16 %v518, %v512
    %v627 = vpack.c.b16 %v519, %v513
    %v628 = vpack.c.b16 %v520, %v514
    %v629 = vpack.c.b16 %v521, %v515
    %v630 = vpack.c.b16 %v522, %v516
    %v631 = vpack.c.b16 %v529, %v523
    %v632 = vpack.c.b16 %v530, %v524
    %v633 = vpack.c.b16 %v531, %v525
    %v634 = vpack.c.b16 %v532, %v526
    %v635 = vpack.c.b16 %v533, %v527
    %v636 = vpack.c.b16 %v534, %v528
    %v637 = vpack.c.b16 %v541, %v535
    %v638 = vpack.c.b16 %v542, %v536
    %v639 = vpack.c.b16 %v543, %v537
    %v640 = vpack.c.b16 %v544, %v538
    %v641 = vpack.c.b16 %v545, %v539
    %v642 = vpack.c.b16 %v546, %v540
    %739 = vmatprep.subr.bf16.mxu0 %v590
    %740 = vmatpush1.bf16.msra.mxu0 %v589
    %741 = vmatprep.subr.bf16.mxu0 %v584
    %742 = vmatpush1.bf16.msra.mxu0 %v583
    %743 = vmatprep.subr.bf16.mxu0 %v578
    %744 = vmatpush1.bf16.msra.mxu0 %v577
    %745 = vmatprep.subr.bf16.mxu0 %v572
    %746 = vmatpush1.bf16.msra.mxu0 %v571
    %747 = vmatprep.subr.bf16.mxu0 %v566
    %748 = vmatpush1.bf16.msra.mxu0 %v565
    %749 = vmatprep.subr.bf16.mxu0 %v560
    %750 = vmatpush1.bf16.msra.mxu0 %v559
    %751 = vmatprep.subr.bf16.mxu0 %v554
    %752 = vmatpush1.bf16.msra.mxu0 %v553
    %753 = vmatprep.subr.bf16.mxu0 %v548
    %754 = vmatpush1.bf16.msra.mxu0 %v547
    %755 = vmatprep.subr.bf16.mxu0 %v638
    %756 = vmatpush2.bf16.msra.mxu0 %v637
    %757 = vmatprep.subr.bf16.mxu0 %v632
    %758 = vmatpush2.bf16.msra.mxu0 %v631
    %759 = vmatprep.subr.bf16.mxu0 %v626
    %760 = vmatpush2.bf16.msra.mxu0 %v625
    %761 = vmatprep.subr.bf16.mxu0 %v620
    %762 = vmatpush2.bf16.msra.mxu0 %v619
    %763 = vmatprep.subr.bf16.mxu0 %v614
    %764 = vmatpush2.bf16.msra.mxu0 %v613
    %765 = vmatprep.subr.bf16.mxu0 %v608
    %766 = vmatpush2.bf16.msra.mxu0 %v607
    %767 = vmatprep.subr.bf16.mxu0 %v602
    %768 = vmatpush2.bf16.msra.mxu0 %v601
    %769 = vmatprep.subr.bf16.mxu0 %v596
    %770 = vmatpush2.bf16.msra.mxu0 %v595
    %771 = vmatprep.mubr.bf16.mxu0 %v244
    %772 = vmatmul.mubr.bf16.gmra.mxu0 %v243
    %v773 = vpop.f32.mrf.mxu0
    %v774 = vadd.f32 0.0, %v773
    %v775 = vpop.f32.mrf.mxu0
    %v776 = vadd.f32 0.0, %v775
    %v777 = vpop.f32.mrf.mxu0
    %v778 = vadd.f32 0.0, %v777
    %v779 = vpop.f32.mrf.mxu0
    %v780 = vadd.f32 0.0, %v779
    %781 = vmatprep.mubr.bf16.mxu0 %v246
    %782 = vmatmul.mubr.bf16.gmra.mxu0 %v245
    %v783 = vpop.f32.mrf.mxu0
    %v784 = vadd.f32 0.0, %v783
    %v785 = vpop.f32.mrf.mxu0
    %v786 = vadd.f32 0.0, %v785
    %v787 = vpop.f32.mrf.mxu0
    %v788 = vadd.f32 0.0, %v787
    %v789 = vpop.f32.mrf.mxu0
    %v790 = vadd.f32 0.0, %v789
    %791 = vmatprep.mubr.bf16.mxu0 %v248
    %792 = vmatmul.mubr.bf16.gmra.mxu0 %v247
    %v793 = vpop.f32.mrf.mxu0
    %v794 = vadd.f32 0.0, %v793
    %v795 = vpop.f32.mrf.mxu0
    %v796 = vadd.f32 0.0, %v795
    %v797 = vpop.f32.mrf.mxu0
    %v798 = vadd.f32 0.0, %v797
    %v799 = vpop.f32.mrf.mxu0
    %v800 = vadd.f32 0.0, %v799
    %801 = vmatprep.mubr.bf16.mxu0 %v250
    %802 = vmatmul.mubr.bf16.gmra.mxu0 %v249
    %v803 = vpop.f32.mrf.mxu0
    %v804 = vadd.f32 0.0, %v803
    %v805 = vpop.f32.mrf.mxu0
    %v806 = vadd.f32 0.0, %v805
    %v807 = vpop.f32.mrf.mxu0
    %v808 = vpop.f32.mrf.mxu0
    %809 = vdwg.mxu0
    %810 = vmatprep.subr.bf16.mxu0 %v592
    %811 = vmatpush1.bf16.msra.mxu0 %v591
    %812 = vmatprep.subr.bf16.mxu0 %v586
    %813 = vmatpush1.bf16.msra.mxu0 %v585
    %814 = vmatprep.subr.bf16.mxu0 %v580
    %815 = vmatpush1.bf16.msra.mxu0 %v579
    %816 = vmatprep.subr.bf16.mxu0 %v574
    %817 = vmatpush1.bf16.msra.mxu0 %v573
    %818 = vmatprep.subr.bf16.mxu0 %v568
    %819 = vmatpush1.bf16.msra.mxu0 %v567
    %820 = vmatprep.subr.bf16.mxu0 %v562
    %821 = vmatpush1.bf16.msra.mxu0 %v561
    %822 = vmatprep.subr.bf16.mxu0 %v556
    %823 = vmatpush1.bf16.msra.mxu0 %v555
    %824 = vmatprep.subr.bf16.mxu0 %v550
    %825 = vmatpush1.bf16.msra.mxu0 %v549
    %826 = vmatprep.subr.bf16.mxu0 %v640
    %827 = vmatpush2.bf16.msra.mxu0 %v639
    %828 = vmatprep.subr.bf16.mxu0 %v634
    %829 = vmatpush2.bf16.msra.mxu0 %v633
    %830 = vmatprep.subr.bf16.mxu0 %v628
    %831 = vmatpush2.bf16.msra.mxu0 %v627
    %832 = vmatprep.subr.bf16.mxu0 %v622
    %833 = vmatpush2.bf16.msra.mxu0 %v621
    %834 = vmatprep.subr.bf16.mxu0 %v616
    %835 = vmatpush2.bf16.msra.mxu0 %v615
    %836 = vmatprep.subr.bf16.mxu0 %v610
    %837 = vmatpush2.bf16.msra.mxu0 %v609
    %838 = vmatprep.subr.bf16.mxu0 %v604
    %839 = vmatpush2.bf16.msra.mxu0 %v603
    %840 = vmatprep.subr.bf16.mxu0 %v598
    %841 = vmatpush2.bf16.msra.mxu0 %v597
    %842 = vmatprep.mubr.bf16.mxu0 %v244
    %843 = vmatmul.mubr.bf16.gmra.mxu0 %v243
    %v844 = vpop.f32.mrf.mxu0
    %v845 = vadd.f32 0.0, %v844
    %v846 = vpop.f32.mrf.mxu0
    %v847 = vadd.f32 0.0, %v846
    %v848 = vpop.f32.mrf.mxu0
    %v849 = vadd.f32 0.0, %v848
    %v850 = vpop.f32.mrf.mxu0
    %v851 = vadd.f32 0.0, %v850
    %852 = vmatprep.mubr.bf16.mxu0 %v246
    %853 = vmatmul.mubr.bf16.gmra.mxu0 %v245
    %v854 = vpop.f32.mrf.mxu0
    %v855 = vadd.f32 0.0, %v854
    %v856 = vpop.f32.mrf.mxu0
    %v857 = vadd.f32 0.0, %v856
    %v858 = vpop.f32.mrf.mxu0
    %v859 = vadd.f32 0.0, %v858
    %v860 = vpop.f32.mrf.mxu0
    %v861 = vadd.f32 0.0, %v860
    %862 = vmatprep.mubr.bf16.mxu0 %v248
    %863 = vmatmul.mubr.bf16.gmra.mxu0 %v247
    %v864 = vpop.f32.mrf.mxu0
    %v865 = vadd.f32 0.0, %v864
    %v866 = vpop.f32.mrf.mxu0
    %v867 = vadd.f32 0.0, %v866
    %v868 = vpop.f32.mrf.mxu0
    %v869 = vadd.f32 0.0, %v868
    %v870 = vpop.f32.mrf.mxu0
    %v871 = vadd.f32 0.0, %v870
    %872 = vmatprep.mubr.bf16.mxu0 %v250
    %873 = vmatmul.mubr.bf16.gmra.mxu0 %v249
    %v874 = vpop.f32.mrf.mxu0
    %v875 = vadd.f32 0.0, %v874
    %v876 = vpop.f32.mrf.mxu0
    %v877 = vadd.f32 0.0, %v876
    %v878 = vpop.f32.mrf.mxu0
    %v879 = vpop.f32.mrf.mxu0
    %880 = vdwg.mxu0
    %881 = vmatprep.subr.bf16.mxu0 %v594
    %882 = vmatpush1.bf16.msra.mxu0 %v593
    %883 = vmatprep.subr.bf16.mxu0 %v588
    %884 = vmatpush1.bf16.msra.mxu0 %v587
    %885 = vmatprep.subr.bf16.mxu0 %v582
    %886 = vmatpush1.bf16.msra.mxu0 %v581
    %887 = vmatprep.subr.bf16.mxu0 %v576
    %888 = vmatpush1.bf16.msra.mxu0 %v575
    %889 = vmatprep.subr.bf16.mxu0 %v570
    %890 = vmatpush1.bf16.msra.mxu0 %v569
    %891 = vmatprep.subr.bf16.mxu0 %v564
    %892 = vmatpush1.bf16.msra.mxu0 %v563
    %893 = vmatprep.subr.bf16.mxu0 %v558
    %894 = vmatpush1.bf16.msra.mxu0 %v557
    %895 = vmatprep.subr.bf16.mxu0 %v552
    %896 = vmatpush1.bf16.msra.mxu0 %v551
    %897 = vmatprep.subr.bf16.mxu0 %v642
    %898 = vmatpush2.bf16.msra.mxu0 %v641
    %899 = vmatprep.subr.bf16.mxu0 %v636
    %900 = vmatpush2.bf16.msra.mxu0 %v635
    %901 = vmatprep.subr.bf16.mxu0 %v630
    %902 = vmatpush2.bf16.msra.mxu0 %v629
    %903 = vmatprep.subr.bf16.mxu0 %v624
    %904 = vmatpush2.bf16.msra.mxu0 %v623
    %905 = vmatprep.subr.bf16.mxu0 %v618
    %906 = vmatpush2.bf16.msra.mxu0 %v617
    %907 = vmatprep.subr.bf16.mxu0 %v612
    %908 = vmatpush2.bf16.msra.mxu0 %v611
    %909 = vmatprep.subr.bf16.mxu0 %v606
    %910 = vmatpush2.bf16.msra.mxu0 %v605
    %911 = vmatprep.subr.bf16.mxu0 %v600
    %912 = vmatpush2.bf16.msra.mxu0 %v599
    %913 = vmatprep.mubr.bf16.mxu0 %v244
    %914 = vmatmul.mubr.bf16.gmra.mxu0 %v243
    %v915 = vpop.f32.mrf.mxu0
    %v916 = vadd.f32 0.0, %v915
    %v917 = vpop.f32.mrf.mxu0
    %v918 = vadd.f32 0.0, %v917
    %v919 = vpop.f32.mrf.mxu0
    %v920 = vadd.f32 0.0, %v919
    %v921 = vpop.f32.mrf.mxu0
    %v922 = vadd.f32 0.0, %v921
    %923 = vmatprep.mubr.bf16.mxu0 %v246
    %924 = vmatmul.mubr.bf16.gmra.mxu0 %v245
    %v925 = vpop.f32.mrf.mxu0
    %v926 = vadd.f32 0.0, %v925
    %v927 = vpop.f32.mrf.mxu0
    %v928 = vadd.f32 0.0, %v927
    %v929 = vpop.f32.mrf.mxu0
    %v930 = vadd.f32 0.0, %v929
    %v931 = vpop.f32.mrf.mxu0
    %v932 = vadd.f32 0.0, %v931
    %933 = vmatprep.mubr.bf16.mxu0 %v248
    %934 = vmatmul.mubr.bf16.gmra.mxu0 %v247
    %v935 = vpop.f32.mrf.mxu0
    %v936 = vadd.f32 0.0, %v935
    %v937 = vpop.f32.mrf.mxu0
    %v938 = vadd.f32 0.0, %v937
    %v939 = vpop.f32.mrf.mxu0
    %v940 = vadd.f32 0.0, %v939
    %v941 = vpop.f32.mrf.mxu0
    %v942 = vadd.f32 0.0, %v941
    %943 = vmatprep.mubr.bf16.mxu0 %v250
    %944 = vmatmul.mubr.bf16.gmra.mxu0 %v249
    %v945 = vpop.f32.mrf.mxu0
    %v946 = vadd.f32 0.0, %v945
    %v947 = vpop.f32.mrf.mxu0
    %v948 = vadd.f32 0.0, %v947
    %v949 = vpop.f32.mrf.mxu0
    %v950 = vpop.f32.mrf.mxu0
    %951 = vdwg.mxu0
    %v958 = vrot.slane %v774, 2
    %v959 = vrot.slane %v776, 2
    %v960 = vrot.slane %v845, 2
    %v961 = vrot.slane %v847, 2
    %v962 = vrot.slane %v916, 2
    %v963 = vrot.slane %v918, 2
    %970 = vrot.lane.b32.xlu0 %v958, 127
    %v971 = vpop.permute.xlu0 %970
    %972 = vrot.lane.b32.xlu0 %v959, 127
    %v973 = vpop.permute.xlu0 %972
    %974 = vrot.lane.b32.xlu0 %v960, 127
    %v975 = vpop.permute.xlu0 %974
    %976 = vrot.lane.b32.xlu0 %v961, 127
    %v977 = vpop.permute.xlu0 %976
    %978 = vrot.lane.b32.xlu0 %v962, 127
    %v979 = vpop.permute.xlu0 %978
    %980 = vrot.lane.b32.xlu0 %v963, 127
    %v981 = vpop.permute.xlu0 %980
    %v982 = vlaneseq
    %v983 = vand.u32 %v982, 127
    %vm984 = vcmp.lt.s32.totalorder %v983, 127
    %v985 = vsel %vm984, %v979, %v981
    %v986 = vsel %vm984, %v977, %v979
    %v987 = vsel %vm984, %v975, %v977
    %v988 = vsel %vm984, %v973, %v975
    %v989 = vsel %vm984, %v971, %v973
    %v990 = vsel %vm984, %v981, %v971
    %v991 = vadd.f32 %v774, %v989
    %v992 = vadd.f32 %v776, %v988
    %v993 = vadd.f32 %v845, %v987
    %v994 = vadd.f32 %v847, %v986
    %v995 = vadd.f32 %v916, %v985
    %v996 = vadd.f32 %v918, %v990
    %v997 = vrot.slane %v774, 4
    %v998 = vrot.slane %v776, 4
    %v999 = vrot.slane %v845, 4
    %v1000 = vrot.slane %v847, 4
    %v1001 = vrot.slane %v916, 4
    %v1002 = vrot.slane %v918, 4
    %1009 = vrot.lane.b32.xlu0 %v997, 126
    %v1010 = vpop.permute.xlu0 %1009
    %1011 = vrot.lane.b32.xlu0 %v998, 126
    %v1012 = vpop.permute.xlu0 %1011
    %1013 = vrot.lane.b32.xlu0 %v999, 126
    %v1014 = vpop.permute.xlu0 %1013
    %1015 = vrot.lane.b32.xlu0 %v1000, 126
    %v1016 = vpop.permute.xlu0 %1015
    %1017 = vrot.lane.b32.xlu0 %v1001, 126
    %v1018 = vpop.permute.xlu0 %1017
    %1019 = vrot.lane.b32.xlu0 %v1002, 126
    %v1020 = vpop.permute.xlu0 %1019
    %vm1021 = vcmp.lt.s32.totalorder %v983, 126
    %v1022 = vsel %vm1021, %v1018, %v1020
    %v1023 = vsel %vm1021, %v1016, %v1018
    %v1024 = vsel %vm1021, %v1014, %v1016
    %v1025 = vsel %vm1021, %v1012, %v1014
    %v1026 = vsel %vm1021, %v1010, %v1012
    %v1027 = vsel %vm1021, %v1020, %v1010
    %v1028 = vadd.f32 %v991, %v1026
    %v1029 = vadd.f32 %v992, %v1025
    %v1030 = vadd.f32 %v993, %v1024
    %v1031 = vadd.f32 %v994, %v1023
    %v1032 = vadd.f32 %v995, %v1022
    %v1033 = vadd.f32 %v996, %v1027
    %v1034 = vrot.slane %v774, 6
    %v1035 = vrot.slane %v776, 6
    %v1036 = vrot.slane %v845, 6
    %v1037 = vrot.slane %v847, 6
    %v1038 = vrot.slane %v916, 6
    %v1039 = vrot.slane %v918, 6
    %1046 = vrot.lane.b32.xlu0 %v1034, 125
    %v1047 = vpop.permute.xlu0 %1046
    %1048 = vrot.lane.b32.xlu0 %v1035, 125
    %v1049 = vpop.permute.xlu0 %1048
    %1050 = vrot.lane.b32.xlu0 %v1036, 125
    %v1051 = vpop.permute.xlu0 %1050
    %1052 = vrot.lane.b32.xlu0 %v1037, 125
    %v1053 = vpop.permute.xlu0 %1052
    %1054 = vrot.lane.b32.xlu0 %v1038, 125
    %v1055 = vpop.permute.xlu0 %1054
    %1056 = vrot.lane.b32.xlu0 %v1039, 125
    %v1057 = vpop.permute.xlu0 %1056
    %vm1058 = vcmp.lt.s32.totalorder %v983, 125
    %v1059 = vsel %vm1058, %v1055, %v1057
    %v1060 = vsel %vm1058, %v1053, %v1055
    %v1061 = vsel %vm1058, %v1051, %v1053
    %v1062 = vsel %vm1058, %v1049, %v1051
    %v1063 = vsel %vm1058, %v1047, %v1049
    %v1064 = vsel %vm1058, %v1057, %v1047
    %v1065 = vadd.f32 %v1028, %v1063
    %v1066 = vadd.f32 %v1029, %v1062
    %v1067 = vadd.f32 %v1030, %v1061
    %v1068 = vadd.f32 %v1031, %v1060
    %v1069 = vadd.f32 %v1032, %v1059
    %v1070 = vadd.f32 %v1033, %v1064
    %1071 = vrot.lane.b32.xlu0 %v778, 124
    %v1072 = vpop.permute.xlu0 %1071
    %1073 = vrot.lane.b32.xlu0 %v780, 124
    %v1074 = vpop.permute.xlu0 %1073
    %1075 = vrot.lane.b32.xlu0 %v849, 124
    %v1076 = vpop.permute.xlu0 %1075
    %1077 = vrot.lane.b32.xlu0 %v851, 124
    %v1078 = vpop.permute.xlu0 %1077
    %1079 = vrot.lane.b32.xlu0 %v920, 124
    %v1080 = vpop.permute.xlu0 %1079
    %1081 = vrot.lane.b32.xlu0 %v922, 124
    %v1082 = vpop.permute.xlu0 %1081
    %vm1083 = vcmp.lt.s32.totalorder %v983, 124
    %v1084 = vsel %vm1083, %v1080, %v1082
    %v1085 = vsel %vm1083, %v1078, %v1080
    %v1086 = vsel %vm1083, %v1076, %v1078
    %v1087 = vsel %vm1083, %v1074, %v1076
    %v1088 = vsel %vm1083, %v1072, %v1074
    %v1089 = vsel %vm1083, %v1082, %v1072
    %v1090 = vadd.f32 %v1065, %v1088
    %v1091 = vadd.f32 %v1066, %v1087
    %v1092 = vadd.f32 %v1067, %v1086
    %v1093 = vadd.f32 %v1068, %v1085
    %v1094 = vadd.f32 %v1069, %v1084
    %v1095 = vadd.f32 %v1070, %v1089
    %v1102 = vrot.slane %v778, 2
    %v1103 = vrot.slane %v780, 2
    %v1104 = vrot.slane %v849, 2
    %v1105 = vrot.slane %v851, 2
    %v1106 = vrot.slane %v920, 2
    %v1107 = vrot.slane %v922, 2
    %1114 = vrot.lane.b32.xlu0 %v1102, 104
    %v1115 = vpop.permute.xlu0 %1114
    %1116 = vrot.lane.b32.xlu0 %v1103, 104
    %v1117 = vpop.permute.xlu0 %1116
    %1118 = vrot.lane.b32.xlu0 %v1104, 104
    %v1119 = vpop.permute.xlu0 %1118
    %1120 = vrot.lane.b32.xlu0 %v1105, 104
    %v1121 = vpop.permute.xlu0 %1120
    %1122 = vrot.lane.b32.xlu0 %v1106, 104
    %v1123 = vpop.permute.xlu0 %1122
    %1124 = vrot.lane.b32.xlu0 %v1107, 104
    %v1125 = vpop.permute.xlu0 %1124
    %vm1126 = vcmp.lt.s32.totalorder %v983, 104
    %v1127 = vsel %vm1126, %v1123, %v1125
    %v1128 = vsel %vm1126, %v1121, %v1123
    %v1129 = vsel %vm1126, %v1119, %v1121
    %v1130 = vsel %vm1126, %v1117, %v1119
    %v1131 = vsel %vm1126, %v1115, %v1117
    %v1132 = vsel %vm1126, %v1125, %v1115
    %v1133 = vadd.f32 %v1090, %v1131
    %v1134 = vadd.f32 %v1091, %v1130
    %v1135 = vadd.f32 %v1092, %v1129
    %v1136 = vadd.f32 %v1093, %v1128
    %v1137 = vadd.f32 %v1094, %v1127
    %v1138 = vadd.f32 %v1095, %v1132
    %v1139 = vrot.slane %v778, 4
    %v1140 = vrot.slane %v780, 4
    %v1141 = vrot.slane %v849, 4
    %v1142 = vrot.slane %v851, 4
    %v1143 = vrot.slane %v920, 4
    %v1144 = vrot.slane %v922, 4
    %1151 = vrot.lane.b32.xlu0 %v1139, 103
    %v1152 = vpop.permute.xlu0 %1151
    %1153 = vrot.lane.b32.xlu0 %v1140, 103
    %v1154 = vpop.permute.xlu0 %1153
    %1155 = vrot.lane.b32.xlu0 %v1141, 103
    %v1156 = vpop.permute.xlu0 %1155
    %1157 = vrot.lane.b32.xlu0 %v1142, 103
    %v1158 = vpop.permute.xlu0 %1157
    %1159 = vrot.lane.b32.xlu0 %v1143, 103
    %v1160 = vpop.permute.xlu0 %1159
    %1161 = vrot.lane.b32.xlu0 %v1144, 103
    %v1162 = vpop.permute.xlu0 %1161
    %vm1163 = vcmp.lt.s32.totalorder %v983, 103
    %v1164 = vsel %vm1163, %v1160, %v1162
    %v1165 = vsel %vm1163, %v1158, %v1160
    %v1166 = vsel %vm1163, %v1156, %v1158
    %v1167 = vsel %vm1163, %v1154, %v1156
    %v1168 = vsel %vm1163, %v1152, %v1154
    %v1169 = vsel %vm1163, %v1162, %v1152
    %v1170 = vadd.f32 %v1133, %v1168
    %v1171 = vadd.f32 %v1134, %v1167
    %v1172 = vadd.f32 %v1135, %v1166
    %v1173 = vadd.f32 %v1136, %v1165
    %v1174 = vadd.f32 %v1137, %v1164
    %v1175 = vadd.f32 %v1138, %v1169
    %v1176 = vrot.slane %v778, 6
    %v1177 = vrot.slane %v780, 6
    %v1178 = vrot.slane %v849, 6
    %v1179 = vrot.slane %v851, 6
    %v1180 = vrot.slane %v920, 6
    %v1181 = vrot.slane %v922, 6
    %1188 = vrot.lane.b32.xlu0 %v1176, 102
    %v1189 = vpop.permute.xlu0 %1188
    %1190 = vrot.lane.b32.xlu0 %v1177, 102
    %v1191 = vpop.permute.xlu0 %1190
    %1192 = vrot.lane.b32.xlu0 %v1178, 102
    %v1193 = vpop.permute.xlu0 %1192
    %1194 = vrot.lane.b32.xlu0 %v1179, 102
    %v1195 = vpop.permute.xlu0 %1194
    %1196 = vrot.lane.b32.xlu0 %v1180, 102
    %v1197 = vpop.permute.xlu0 %1196
    %1198 = vrot.lane.b32.xlu0 %v1181, 102
    %v1199 = vpop.permute.xlu0 %1198
    %vm1200 = vcmp.lt.s32.totalorder %v983, 102
    %v1201 = vsel %vm1200, %v1197, %v1199
    %v1202 = vsel %vm1200, %v1195, %v1197
    %v1203 = vsel %vm1200, %v1193, %v1195
    %v1204 = vsel %vm1200, %v1191, %v1193
    %v1205 = vsel %vm1200, %v1189, %v1191
    %v1206 = vsel %vm1200, %v1199, %v1189
    %v1207 = vadd.f32 %v1170, %v1205
    %v1208 = vadd.f32 %v1171, %v1204
    %v1209 = vadd.f32 %v1172, %v1203
    %v1210 = vadd.f32 %v1173, %v1202
    %v1211 = vadd.f32 %v1174, %v1201
    %v1212 = vadd.f32 %v1175, %v1206
    %1213 = vrot.lane.b32.xlu0 %v784, 101
    %v1214 = vpop.permute.xlu0 %1213
    %1215 = vrot.lane.b32.xlu0 %v786, 101
    %v1216 = vpop.permute.xlu0 %1215
    %1217 = vrot.lane.b32.xlu0 %v855, 101
    %v1218 = vpop.permute.xlu0 %1217
    %1219 = vrot.lane.b32.xlu0 %v857, 101
    %v1220 = vpop.permute.xlu0 %1219
    %1221 = vrot.lane.b32.xlu0 %v926, 101
    %v1222 = vpop.permute.xlu0 %1221
    %1223 = vrot.lane.b32.xlu0 %v928, 101
    %v1224 = vpop.permute.xlu0 %1223
    %vm1225 = vcmp.lt.s32.totalorder %v983, 101
    %v1226 = vsel %vm1225, %v1222, %v1224
    %v1227 = vsel %vm1225, %v1220, %v1222
    %v1228 = vsel %vm1225, %v1218, %v1220
    %v1229 = vsel %vm1225, %v1216, %v1218
    %v1230 = vsel %vm1225, %v1214, %v1216
    %v1231 = vsel %vm1225, %v1224, %v1214
    %v1232 = vadd.f32 %v1207, %v1230
    %v1233 = vadd.f32 %v1208, %v1229
    %v1234 = vadd.f32 %v1209, %v1228
    %v1235 = vadd.f32 %v1210, %v1227
    %v1236 = vadd.f32 %v1211, %v1226
    %v1237 = vadd.f32 %v1212, %v1231
    %v1244 = vrot.slane %v784, 2
    %v1245 = vrot.slane %v786, 2
    %v1246 = vrot.slane %v855, 2
    %v1247 = vrot.slane %v857, 2
    %v1248 = vrot.slane %v926, 2
    %v1249 = vrot.slane %v928, 2
    %1256 = vrot.lane.b32.xlu0 %v1244, 100
    %v1257 = vpop.permute.xlu0 %1256
    %1258 = vrot.lane.b32.xlu0 %v1245, 100
    %v1259 = vpop.permute.xlu0 %1258
    %1260 = vrot.lane.b32.xlu0 %v1246, 100
    %v1261 = vpop.permute.xlu0 %1260
    %1262 = vrot.lane.b32.xlu0 %v1247, 100
    %v1263 = vpop.permute.xlu0 %1262
    %1264 = vrot.lane.b32.xlu0 %v1248, 100
    %v1265 = vpop.permute.xlu0 %1264
    %1266 = vrot.lane.b32.xlu0 %v1249, 100
    %v1267 = vpop.permute.xlu0 %1266
    %vm1268 = vcmp.lt.s32.totalorder %v983, 100
    %v1269 = vsel %vm1268, %v1265, %v1267
    %v1270 = vsel %vm1268, %v1263, %v1265
    %v1271 = vsel %vm1268, %v1261, %v1263
    %v1272 = vsel %vm1268, %v1259, %v1261
    %v1273 = vsel %vm1268, %v1257, %v1259
    %v1274 = vsel %vm1268, %v1267, %v1257
    %v1275 = vadd.f32 %v1232, %v1273
    %v1276 = vadd.f32 %v1233, %v1272
    %v1277 = vadd.f32 %v1234, %v1271
    %v1278 = vadd.f32 %v1235, %v1270
    %v1279 = vadd.f32 %v1236, %v1269
    %v1280 = vadd.f32 %v1237, %v1274
    %v1281 = vrot.slane %v784, 4
    %v1282 = vrot.slane %v786, 4
    %v1283 = vrot.slane %v855, 4
    %v1284 = vrot.slane %v857, 4
    %v1285 = vrot.slane %v926, 4
    %v1286 = vrot.slane %v928, 4
    %1293 = vrot.lane.b32.xlu0 %v1281, 80
    %v1294 = vpop.permute.xlu0 %1293
    %1295 = vrot.lane.b32.xlu0 %v1282, 80
    %v1296 = vpop.permute.xlu0 %1295
    %1297 = vrot.lane.b32.xlu0 %v1283, 80
    %v1298 = vpop.permute.xlu0 %1297
    %1299 = vrot.lane.b32.xlu0 %v1284, 80
    %v1300 = vpop.permute.xlu0 %1299
    %1301 = vrot.lane.b32.xlu0 %v1285, 80
    %v1302 = vpop.permute.xlu0 %1301
    %1303 = vrot.lane.b32.xlu0 %v1286, 80
    %v1304 = vpop.permute.xlu0 %1303
    %vm1305 = vcmp.lt.s32.totalorder %v983, 80
    %v1306 = vsel %vm1305, %v1302, %v1304
    %v1307 = vsel %vm1305, %v1300, %v1302
    %v1308 = vsel %vm1305, %v1298, %v1300
    %v1309 = vsel %vm1305, %v1296, %v1298
    %v1310 = vsel %vm1305, %v1294, %v1296
    %v1311 = vsel %vm1305, %v1304, %v1294
    %v1312 = vadd.f32 %v1275, %v1310
    %v1313 = vadd.f32 %v1276, %v1309
    %v1314 = vadd.f32 %v1277, %v1308
    %v1315 = vadd.f32 %v1278, %v1307
    %v1316 = vadd.f32 %v1279, %v1306
    %v1317 = vadd.f32 %v1280, %v1311
    %v1318 = vrot.slane %v784, 6
    %v1319 = vrot.slane %v786, 6
    %v1320 = vrot.slane %v855, 6
    %v1321 = vrot.slane %v857, 6
    %v1322 = vrot.slane %v926, 6
    %v1323 = vrot.slane %v928, 6
    %1330 = vrot.lane.b32.xlu0 %v1318, 79
    %v1331 = vpop.permute.xlu0 %1330
    %1332 = vrot.lane.b32.xlu0 %v1319, 79
    %v1333 = vpop.permute.xlu0 %1332
    %1334 = vrot.lane.b32.xlu0 %v1320, 79
    %v1335 = vpop.permute.xlu0 %1334
    %1336 = vrot.lane.b32.xlu0 %v1321, 79
    %v1337 = vpop.permute.xlu0 %1336
    %1338 = vrot.lane.b32.xlu0 %v1322, 79
    %v1339 = vpop.permute.xlu0 %1338
    %1340 = vrot.lane.b32.xlu0 %v1323, 79
    %v1341 = vpop.permute.xlu0 %1340
    %vm1342 = vcmp.lt.s32.totalorder %v983, 79
    %v1343 = vsel %vm1342, %v1339, %v1341
    %v1344 = vsel %vm1342, %v1337, %v1339
    %v1345 = vsel %vm1342, %v1335, %v1337
    %v1346 = vsel %vm1342, %v1333, %v1335
    %v1347 = vsel %vm1342, %v1331, %v1333
    %v1348 = vsel %vm1342, %v1341, %v1331
    %v1349 = vadd.f32 %v1312, %v1347
    %v1350 = vadd.f32 %v1313, %v1346
    %v1351 = vadd.f32 %v1314, %v1345
    %v1352 = vadd.f32 %v1315, %v1344
    %v1353 = vadd.f32 %v1316, %v1343
    %v1354 = vadd.f32 %v1317, %v1348
    %1355 = vrot.lane.b32.xlu0 %v788, 78
    %v1356 = vpop.permute.xlu0 %1355
    %1357 = vrot.lane.b32.xlu0 %v790, 78
    %v1358 = vpop.permute.xlu0 %1357
    %1359 = vrot.lane.b32.xlu0 %v859, 78
    %v1360 = vpop.permute.xlu0 %1359
    %1361 = vrot.lane.b32.xlu0 %v861, 78
    %v1362 = vpop.permute.xlu0 %1361
    %1363 = vrot.lane.b32.xlu0 %v930, 78
    %v1364 = vpop.permute.xlu0 %1363
    %1365 = vrot.lane.b32.xlu0 %v932, 78
    %v1366 = vpop.permute.xlu0 %1365
    %vm1367 = vcmp.lt.s32.totalorder %v983, 78
    %v1368 = vsel %vm1367, %v1364, %v1366
    %v1369 = vsel %vm1367, %v1362, %v1364
    %v1370 = vsel %vm1367, %v1360, %v1362
    %v1371 = vsel %vm1367, %v1358, %v1360
    %v1372 = vsel %vm1367, %v1356, %v1358
    %v1373 = vsel %vm1367, %v1366, %v1356
    %v1374 = vadd.f32 %v1349, %v1372
    %v1375 = vadd.f32 %v1350, %v1371
    %v1376 = vadd.f32 %v1351, %v1370
    %v1377 = vadd.f32 %v1352, %v1369
    %v1378 = vadd.f32 %v1353, %v1368
    %v1379 = vadd.f32 %v1354, %v1373
    %v1386 = vrot.slane %v788, 2
    %v1387 = vrot.slane %v790, 2
    %v1388 = vrot.slane %v859, 2
    %v1389 = vrot.slane %v861, 2
    %v1390 = vrot.slane %v930, 2
    %v1391 = vrot.slane %v932, 2
    %1398 = vrot.lane.b32.xlu0 %v1386, 77
    %v1399 = vpop.permute.xlu0 %1398
    %1400 = vrot.lane.b32.xlu0 %v1387, 77
    %v1401 = vpop.permute.xlu0 %1400
    %1402 = vrot.lane.b32.xlu0 %v1388, 77
    %v1403 = vpop.permute.xlu0 %1402
    %1404 = vrot.lane.b32.xlu0 %v1389, 77
    %v1405 = vpop.permute.xlu0 %1404
    %1406 = vrot.lane.b32.xlu0 %v1390, 77
    %v1407 = vpop.permute.xlu0 %1406
    %1408 = vrot.lane.b32.xlu0 %v1391, 77
    %v1409 = vpop.permute.xlu0 %1408
    %vm1410 = vcmp.lt.s32.totalorder %v983, 77
    %v1411 = vsel %vm1410, %v1407, %v1409
    %v1412 = vsel %vm1410, %v1405, %v1407
    %v1413 = vsel %vm1410, %v1403, %v1405
    %v1414 = vsel %vm1410, %v1401, %v1403
    %v1415 = vsel %vm1410, %v1399, %v1401
    %v1416 = vsel %vm1410, %v1409, %v1399
    %v1417 = vadd.f32 %v1374, %v1415
    %v1418 = vadd.f32 %v1375, %v1414
    %v1419 = vadd.f32 %v1376, %v1413
    %v1420 = vadd.f32 %v1377, %v1412
    %v1421 = vadd.f32 %v1378, %v1411
    %v1422 = vadd.f32 %v1379, %v1416
    %v1423 = vrot.slane %v788, 4
    %v1424 = vrot.slane %v790, 4
    %v1425 = vrot.slane %v859, 4
    %v1426 = vrot.slane %v861, 4
    %v1427 = vrot.slane %v930, 4
    %v1428 = vrot.slane %v932, 4
    %1435 = vrot.lane.b32.xlu0 %v1423, 76
    %v1436 = vpop.permute.xlu0 %1435
    %1437 = vrot.lane.b32.xlu0 %v1424, 76
    %v1438 = vpop.permute.xlu0 %1437
    %1439 = vrot.lane.b32.xlu0 %v1425, 76
    %v1440 = vpop.permute.xlu0 %1439
    %1441 = vrot.lane.b32.xlu0 %v1426, 76
    %v1442 = vpop.permute.xlu0 %1441
    %1443 = vrot.lane.b32.xlu0 %v1427, 76
    %v1444 = vpop.permute.xlu0 %1443
    %1445 = vrot.lane.b32.xlu0 %v1428, 76
    %v1446 = vpop.permute.xlu0 %1445
    %vm1447 = vcmp.lt.s32.totalorder %v983, 76
    %v1448 = vsel %vm1447, %v1444, %v1446
    %v1449 = vsel %vm1447, %v1442, %v1444
    %v1450 = vsel %vm1447, %v1440, %v1442
    %v1451 = vsel %vm1447, %v1438, %v1440
    %v1452 = vsel %vm1447, %v1436, %v1438
    %v1453 = vsel %vm1447, %v1446, %v1436
    %v1454 = vadd.f32 %v1417, %v1452
    %v1455 = vadd.f32 %v1418, %v1451
    %v1456 = vadd.f32 %v1419, %v1450
    %v1457 = vadd.f32 %v1420, %v1449
    %v1458 = vadd.f32 %v1421, %v1448
    %v1459 = vadd.f32 %v1422, %v1453
    %v1460 = vrot.slane %v788, 6
    %v1461 = vrot.slane %v790, 6
    %v1462 = vrot.slane %v859, 6
    %v1463 = vrot.slane %v861, 6
    %v1464 = vrot.slane %v930, 6
    %v1465 = vrot.slane %v932, 6
    %1472 = vrot.lane.b32.xlu0 %v1460, 56
    %v1473 = vpop.permute.xlu0 %1472
    %1474 = vrot.lane.b32.xlu0 %v1461, 56
    %v1475 = vpop.permute.xlu0 %1474
    %1476 = vrot.lane.b32.xlu0 %v1462, 56
    %v1477 = vpop.permute.xlu0 %1476
    %1478 = vrot.lane.b32.xlu0 %v1463, 56
    %v1479 = vpop.permute.xlu0 %1478
    %1480 = vrot.lane.b32.xlu0 %v1464, 56
    %v1481 = vpop.permute.xlu0 %1480
    %1482 = vrot.lane.b32.xlu0 %v1465, 56
    %v1483 = vpop.permute.xlu0 %1482
    %vm1484 = vcmp.lt.s32.totalorder %v983, 56
    %v1485 = vsel %vm1484, %v1481, %v1483
    %v1486 = vsel %vm1484, %v1479, %v1481
    %v1487 = vsel %vm1484, %v1477, %v1479
    %v1488 = vsel %vm1484, %v1475, %v1477
    %v1489 = vsel %vm1484, %v1473, %v1475
    %v1490 = vsel %vm1484, %v1483, %v1473
    %v1491 = vadd.f32 %v1454, %v1489
    %v1492 = vadd.f32 %v1455, %v1488
    %v1493 = vadd.f32 %v1456, %v1487
    %v1494 = vadd.f32 %v1457, %v1486
    %v1495 = vadd.f32 %v1458, %v1485
    %v1496 = vadd.f32 %v1459, %v1490
    %1497 = vrot.lane.b32.xlu0 %v794, 55
    %v1498 = vpop.permute.xlu0 %1497
    %1499 = vrot.lane.b32.xlu0 %v796, 55
    %v1500 = vpop.permute.xlu0 %1499
    %1501 = vrot.lane.b32.xlu0 %v865, 55
    %v1502 = vpop.permute.xlu0 %1501
    %1503 = vrot.lane.b32.xlu0 %v867, 55
    %v1504 = vpop.permute.xlu0 %1503
    %1505 = vrot.lane.b32.xlu0 %v936, 55
    %v1506 = vpop.permute.xlu0 %1505
    %1507 = vrot.lane.b32.xlu0 %v938, 55
    %v1508 = vpop.permute.xlu0 %1507
    %vm1509 = vcmp.lt.s32.totalorder %v983, 55
    %v1510 = vsel %vm1509, %v1506, %v1508
    %v1511 = vsel %vm1509, %v1504, %v1506
    %v1512 = vsel %vm1509, %v1502, %v1504
    %v1513 = vsel %vm1509, %v1500, %v1502
    %v1514 = vsel %vm1509, %v1498, %v1500
    %v1515 = vsel %vm1509, %v1508, %v1498
    %v1516 = vadd.f32 %v1491, %v1514
    %v1517 = vadd.f32 %v1492, %v1513
    %v1518 = vadd.f32 %v1493, %v1512
    %v1519 = vadd.f32 %v1494, %v1511
    %v1520 = vadd.f32 %v1495, %v1510
    %v1521 = vadd.f32 %v1496, %v1515
    %v1528 = vrot.slane %v794, 2
    %v1529 = vrot.slane %v796, 2
    %v1530 = vrot.slane %v865, 2
    %v1531 = vrot.slane %v867, 2
    %v1532 = vrot.slane %v936, 2
    %v1533 = vrot.slane %v938, 2
    %1540 = vrot.lane.b32.xlu0 %v1528, 54
    %v1541 = vpop.permute.xlu0 %1540
    %1542 = vrot.lane.b32.xlu0 %v1529, 54
    %v1543 = vpop.permute.xlu0 %1542
    %1544 = vrot.lane.b32.xlu0 %v1530, 54
    %v1545 = vpop.permute.xlu0 %1544
    %1546 = vrot.lane.b32.xlu0 %v1531, 54
    %v1547 = vpop.permute.xlu0 %1546
    %1548 = vrot.lane.b32.xlu0 %v1532, 54
    %v1549 = vpop.permute.xlu0 %1548
    %1550 = vrot.lane.b32.xlu0 %v1533, 54
    %v1551 = vpop.permute.xlu0 %1550
    %vm1552 = vcmp.lt.s32.totalorder %v983, 54
    %v1553 = vsel %vm1552, %v1549, %v1551
    %v1554 = vsel %vm1552, %v1547, %v1549
    %v1555 = vsel %vm1552, %v1545, %v1547
    %v1556 = vsel %vm1552, %v1543, %v1545
    %v1557 = vsel %vm1552, %v1541, %v1543
    %v1558 = vsel %vm1552, %v1551, %v1541
    %v1559 = vadd.f32 %v1516, %v1557
    %v1560 = vadd.f32 %v1517, %v1556
    %v1561 = vadd.f32 %v1518, %v1555
    %v1562 = vadd.f32 %v1519, %v1554
    %v1563 = vadd.f32 %v1520, %v1553
    %v1564 = vadd.f32 %v1521, %v1558
    %v1565 = vrot.slane %v794, 4
    %v1566 = vrot.slane %v796, 4
    %v1567 = vrot.slane %v865, 4
    %v1568 = vrot.slane %v867, 4
    %v1569 = vrot.slane %v936, 4
    %v1570 = vrot.slane %v938, 4
    %1577 = vrot.lane.b32.xlu0 %v1565, 53
    %v1578 = vpop.permute.xlu0 %1577
    %1579 = vrot.lane.b32.xlu0 %v1566, 53
    %v1580 = vpop.permute.xlu0 %1579
    %1581 = vrot.lane.b32.xlu0 %v1567, 53
    %v1582 = vpop.permute.xlu0 %1581
    %1583 = vrot.lane.b32.xlu0 %v1568, 53
    %v1584 = vpop.permute.xlu0 %1583
    %1585 = vrot.lane.b32.xlu0 %v1569, 53
    %v1586 = vpop.permute.xlu0 %1585
    %1587 = vrot.lane.b32.xlu0 %v1570, 53
    %v1588 = vpop.permute.xlu0 %1587
    %vm1589 = vcmp.lt.s32.totalorder %v983, 53
    %v1590 = vsel %vm1589, %v1586, %v1588
    %v1591 = vsel %vm1589, %v1584, %v1586
    %v1592 = vsel %vm1589, %v1582, %v1584
    %v1593 = vsel %vm1589, %v1580, %v1582
    %v1594 = vsel %vm1589, %v1578, %v1580
    %v1595 = vsel %vm1589, %v1588, %v1578
    %v1596 = vadd.f32 %v1559, %v1594
    %v1597 = vadd.f32 %v1560, %v1593
    %v1598 = vadd.f32 %v1561, %v1592
    %v1599 = vadd.f32 %v1562, %v1591
    %v1600 = vadd.f32 %v1563, %v1590
    %v1601 = vadd.f32 %v1564, %v1595
    %v1602 = vrot.slane %v794, 6
    %v1603 = vrot.slane %v796, 6
    %v1604 = vrot.slane %v865, 6
    %v1605 = vrot.slane %v867, 6
    %v1606 = vrot.slane %v936, 6
    %v1607 = vrot.slane %v938, 6
    %1614 = vrot.lane.b32.xlu0 %v1602, 52
    %v1615 = vpop.permute.xlu0 %1614
    %1616 = vrot.lane.b32.xlu0 %v1603, 52
    %v1617 = vpop.permute.xlu0 %1616
    %1618 = vrot.lane.b32.xlu0 %v1604, 52
    %v1619 = vpop.permute.xlu0 %1618
    %1620 = vrot.lane.b32.xlu0 %v1605, 52
    %v1621 = vpop.permute.xlu0 %1620
    %1622 = vrot.lane.b32.xlu0 %v1606, 52
    %v1623 = vpop.permute.xlu0 %1622
    %1624 = vrot.lane.b32.xlu0 %v1607, 52
    %v1625 = vpop.permute.xlu0 %1624
    %vm1626 = vcmp.lt.s32.totalorder %v983, 52
    %v1627 = vsel %vm1626, %v1623, %v1625
    %v1628 = vsel %vm1626, %v1621, %v1623
    %v1629 = vsel %vm1626, %v1619, %v1621
    %v1630 = vsel %vm1626, %v1617, %v1619
    %v1631 = vsel %vm1626, %v1615, %v1617
    %v1632 = vsel %vm1626, %v1625, %v1615
    %v1633 = vadd.f32 %v1596, %v1631
    %v1634 = vadd.f32 %v1597, %v1630
    %v1635 = vadd.f32 %v1598, %v1629
    %v1636 = vadd.f32 %v1599, %v1628
    %v1637 = vadd.f32 %v1600, %v1627
    %v1638 = vadd.f32 %v1601, %v1632
    %1639 = vrot.lane.b32.xlu0 %v798, 32
    %v1640 = vpop.permute.xlu0 %1639
    %1641 = vrot.lane.b32.xlu0 %v800, 32
    %v1642 = vpop.permute.xlu0 %1641
    %1643 = vrot.lane.b32.xlu0 %v869, 32
    %v1644 = vpop.permute.xlu0 %1643
    %1645 = vrot.lane.b32.xlu0 %v871, 32
    %v1646 = vpop.permute.xlu0 %1645
    %1647 = vrot.lane.b32.xlu0 %v940, 32
    %v1648 = vpop.permute.xlu0 %1647
    %1649 = vrot.lane.b32.xlu0 %v942, 32
    %v1650 = vpop.permute.xlu0 %1649
    %vm1651 = vcmp.lt.s32.totalorder %v983, 32
    %v1652 = vsel %vm1651, %v1648, %v1650
    %v1653 = vsel %vm1651, %v1646, %v1648
    %v1654 = vsel %vm1651, %v1644, %v1646
    %v1655 = vsel %vm1651, %v1642, %v1644
    %v1656 = vsel %vm1651, %v1640, %v1642
    %v1657 = vsel %vm1651, %v1650, %v1640
    %v1658 = vadd.f32 %v1633, %v1656
    %v1659 = vadd.f32 %v1634, %v1655
    %v1660 = vadd.f32 %v1635, %v1654
    %v1661 = vadd.f32 %v1636, %v1653
    %v1662 = vadd.f32 %v1637, %v1652
    %v1663 = vadd.f32 %v1638, %v1657
    %v1670 = vrot.slane %v798, 2
    %v1671 = vrot.slane %v800, 2
    %v1672 = vrot.slane %v869, 2
    %v1673 = vrot.slane %v871, 2
    %v1674 = vrot.slane %v940, 2
    %v1675 = vrot.slane %v942, 2
    %1682 = vrot.lane.b32.xlu0 %v1670, 31
    %v1683 = vpop.permute.xlu0 %1682
    %1684 = vrot.lane.b32.xlu0 %v1671, 31
    %v1685 = vpop.permute.xlu0 %1684
    %1686 = vrot.lane.b32.xlu0 %v1672, 31
    %v1687 = vpop.permute.xlu0 %1686
    %1688 = vrot.lane.b32.xlu0 %v1673, 31
    %v1689 = vpop.permute.xlu0 %1688
    %1690 = vrot.lane.b32.xlu0 %v1674, 31
    %v1691 = vpop.permute.xlu0 %1690
    %1692 = vrot.lane.b32.xlu0 %v1675, 31
    %v1693 = vpop.permute.xlu0 %1692
    %vm1694 = vcmp.lt.s32.totalorder %v983, 31
    %v1695 = vsel %vm1694, %v1691, %v1693
    %v1696 = vsel %vm1694, %v1689, %v1691
    %v1697 = vsel %vm1694, %v1687, %v1689
    %v1698 = vsel %vm1694, %v1685, %v1687
    %v1699 = vsel %vm1694, %v1683, %v1685
    %v1700 = vsel %vm1694, %v1693, %v1683
    %v1701 = vadd.f32 %v1658, %v1699
    %v1702 = vadd.f32 %v1659, %v1698
    %v1703 = vadd.f32 %v1660, %v1697
    %v1704 = vadd.f32 %v1661, %v1696
    %v1705 = vadd.f32 %v1662, %v1695
    %v1706 = vadd.f32 %v1663, %v1700
    %v1707 = vrot.slane %v798, 4
    %v1708 = vrot.slane %v800, 4
    %v1709 = vrot.slane %v869, 4
    %v1710 = vrot.slane %v871, 4
    %v1711 = vrot.slane %v940, 4
    %v1712 = vrot.slane %v942, 4
    %1719 = vrot.lane.b32.xlu0 %v1707, 30
    %v1720 = vpop.permute.xlu0 %1719
    %1721 = vrot.lane.b32.xlu0 %v1708, 30
    %v1722 = vpop.permute.xlu0 %1721
    %1723 = vrot.lane.b32.xlu0 %v1709, 30
    %v1724 = vpop.permute.xlu0 %1723
    %1725 = vrot.lane.b32.xlu0 %v1710, 30
    %v1726 = vpop.permute.xlu0 %1725
    %1727 = vrot.lane.b32.xlu0 %v1711, 30
    %v1728 = vpop.permute.xlu0 %1727
    %1729 = vrot.lane.b32.xlu0 %v1712, 30
    %v1730 = vpop.permute.xlu0 %1729
    %vm1731 = vcmp.lt.s32.totalorder %v983, 30
    %v1732 = vsel %vm1731, %v1728, %v1730
    %v1733 = vsel %vm1731, %v1726, %v1728
    %v1734 = vsel %vm1731, %v1724, %v1726
    %v1735 = vsel %vm1731, %v1722, %v1724
    %v1736 = vsel %vm1731, %v1720, %v1722
    %v1737 = vsel %vm1731, %v1730, %v1720
    %v1738 = vadd.f32 %v1701, %v1736
    %v1739 = vadd.f32 %v1702, %v1735
    %v1740 = vadd.f32 %v1703, %v1734
    %v1741 = vadd.f32 %v1704, %v1733
    %v1742 = vadd.f32 %v1705, %v1732
    %v1743 = vadd.f32 %v1706, %v1737
    %v1744 = vrot.slane %v798, 6
    %v1745 = vrot.slane %v800, 6
    %v1746 = vrot.slane %v869, 6
    %v1747 = vrot.slane %v871, 6
    %v1748 = vrot.slane %v940, 6
    %v1749 = vrot.slane %v942, 6
    %1756 = vrot.lane.b32.xlu0 %v1744, 29
    %v1757 = vpop.permute.xlu0 %1756
    %1758 = vrot.lane.b32.xlu0 %v1745, 29
    %v1759 = vpop.permute.xlu0 %1758
    %1760 = vrot.lane.b32.xlu0 %v1746, 29
    %v1761 = vpop.permute.xlu0 %1760
    %1762 = vrot.lane.b32.xlu0 %v1747, 29
    %v1763 = vpop.permute.xlu0 %1762
    %1764 = vrot.lane.b32.xlu0 %v1748, 29
    %v1765 = vpop.permute.xlu0 %1764
    %1766 = vrot.lane.b32.xlu0 %v1749, 29
    %v1767 = vpop.permute.xlu0 %1766
    %vm1768 = vcmp.lt.s32.totalorder %v983, 29
    %v1769 = vsel %vm1768, %v1765, %v1767
    %v1770 = vsel %vm1768, %v1763, %v1765
    %v1771 = vsel %vm1768, %v1761, %v1763
    %v1772 = vsel %vm1768, %v1759, %v1761
    %v1773 = vsel %vm1768, %v1757, %v1759
    %v1774 = vsel %vm1768, %v1767, %v1757
    %v1775 = vadd.f32 %v1738, %v1773
    %v1776 = vadd.f32 %v1739, %v1772
    %v1777 = vadd.f32 %v1740, %v1771
    %v1778 = vadd.f32 %v1741, %v1770
    %v1779 = vadd.f32 %v1742, %v1769
    %v1780 = vadd.f32 %v1743, %v1774
    %1781 = vrot.lane.b32.xlu0 %v804, 28
    %v1782 = vpop.permute.xlu0 %1781
    %1783 = vrot.lane.b32.xlu0 %v806, 28
    %v1784 = vpop.permute.xlu0 %1783
    %1785 = vrot.lane.b32.xlu0 %v875, 28
    %v1786 = vpop.permute.xlu0 %1785
    %1787 = vrot.lane.b32.xlu0 %v877, 28
    %v1788 = vpop.permute.xlu0 %1787
    %1789 = vrot.lane.b32.xlu0 %v946, 28
    %v1790 = vpop.permute.xlu0 %1789
    %1791 = vrot.lane.b32.xlu0 %v948, 28
    %v1792 = vpop.permute.xlu0 %1791
    %vm1793 = vcmp.lt.s32.totalorder %v983, 28
    %v1794 = vsel %vm1793, %v1790, %v1792
    %v1795 = vsel %vm1793, %v1788, %v1790
    %v1796 = vsel %vm1793, %v1786, %v1788
    %v1797 = vsel %vm1793, %v1784, %v1786
    %v1798 = vsel %vm1793, %v1782, %v1784
    %v1799 = vsel %vm1793, %v1792, %v1782
    %v1800 = vadd.f32 %v1775, %v1798
    %v1801 = vadd.f32 %v1776, %v1797
    %v1802 = vadd.f32 %v1777, %v1796
    %v1803 = vadd.f32 %v1778, %v1795
    %v1804 = vadd.f32 %v1779, %v1794
    %v1805 = vadd.f32 %v1780, %v1799
    %v1806 = vld [vmem:[#allocation14] ss:$4 sm:$0x3f]
    %v1808 = vlaneseq
    %v1809 = vshrl.u32 %v1808, 7
    %v1810 = vsub.s32 0, %v1809
    %v1811 = vrot.slane %v1806, %v1810
    %v1812 = vlaneseq
    %v1813 = vshrl.u32 %v1812, 7
    %v1814 = vsub.s32 1, %v1813
    %v1815 = vrot.slane %v1806, %v1814
    %v1816 = vlaneseq
    %v1817 = vshrl.u32 %v1816, 7
    %v1818 = vsub.s32 2, %v1817
    %v1819 = vrot.slane %v1806, %v1818
    %v1820 = vlaneseq
    %v1821 = vshrl.u32 %v1820, 7
    %v1822 = vsub.s32 3, %v1821
    %v1823 = vrot.slane %v1806, %v1822
    %v1824 = vlaneseq
    %v1825 = vshrl.u32 %v1824, 7
    %v1826 = vsub.s32 4, %v1825
    %v1827 = vrot.slane %v1806, %v1826
    %v1828 = vlaneseq
    %v1829 = vshrl.u32 %v1828, 7
    %v1830 = vsub.s32 5, %v1829
    %v1831 = vrot.slane %v1806, %v1830
    %v1838 = vmul.f32 %v1800, %v1811
    %v1839 = vmul.f32 %v1801, %v1815
    %v1840 = vmul.f32 %v1802, %v1819
    %v1841 = vmul.f32 %v1803, %v1823
    %v1842 = vmul.f32 %v1804, %v1827
    %v1843 = vmul.f32 %v1805, %v1831
    %vm1844 = vcmask 1040384
    %v1845 = vsel %vm1844, %v1838, 0.0
    %v1846 = vsel %vm1844, %v1839, 0.0
    %v1847 = vadd.f32 %v1845, %v1846
    %v1848 = vsel %vm1844, %v1840, 0.0
    %v1849 = vadd.f32 %v1847, %v1848
    %v1850 = vsel %vm1844, %v1841, 0.0
    %v1851 = vadd.f32 %v1849, %v1850
    %v1852 = vsel %vm1844, %v1842, 0.0
    %v1853 = vadd.f32 %v1851, %v1852
    %v1854 = vsel %vm1844, %v1843, 0.0
    %v1855 = vadd.f32 %v1853, %v1854
    %1856 = vadd.xlane.f32.xlu0 %v1855
    %v1857 = vpop.xlane.xlu0 %1856
    %v1858 = vmul.f32 %v1857, 0.0025
    %v1859 = vsub.f32 %v1800, %v1858
    %v1860 = vsub.f32 %v1801, %v1858
    %v1861 = vsub.f32 %v1802, %v1858
    %v1862 = vsub.f32 %v1803, %v1858
    %v1863 = vsub.f32 %v1804, %v1858
    %v1864 = vsub.f32 %v1805, %v1858
    %v1865 = vmul.f32 %v1859, %v1811
    %v1866 = vmul.f32 %v1860, %v1815
    %v1867 = vmul.f32 %v1861, %v1819
    %v1868 = vmul.f32 %v1862, %v1823
    %v1869 = vmul.f32 %v1863, %v1827
    %v1870 = vmul.f32 %v1864, %v1831
    %v1871 = vmul.f32 %v1865, %v1865
    %v1872 = vmul.f32 %v1866, %v1866
    %v1873 = vmul.f32 %v1867, %v1867
    %v1874 = vmul.f32 %v1868, %v1868
    %v1875 = vmul.f32 %v1869, %v1869
    %v1876 = vmul.f32 %v1870, %v1870
    %v1877 = vsel %vm1844, %v1871, 0.0
    %v1878 = vsel %vm1844, %v1872, 0.0
    %v1879 = vadd.f32 %v1877, %v1878
    %v1880 = vsel %vm1844, %v1873, 0.0
    %v1881 = vadd.f32 %v1879, %v1880
    %v1882 = vsel %vm1844, %v1874, 0.0
    %v1883 = vadd.f32 %v1881, %v1882
    %v1884 = vsel %vm1844, %v1875, 0.0
    %v1885 = vadd.f32 %v1883, %v1884
    %v1886 = vsel %vm1844, %v1876, 0.0
    %v1887 = vadd.f32 %v1885, %v1886
    %1888 = vadd.xlane.f32.xlu0 %v1887
    %v1889 = vpop.xlane.xlu0 %1888
    %v1890 = vmul.f32 %v1889, 0.0025
    %s1891 = sld [smem:[#allocation3]]
    %v1892 = vadd.f32 %v1890, 1e-05
    %v1893 = vrsqrt.pop %v1892
    %v1894 = vstv %s1891
    %v1895 = vmul.f32 %v1894, %v1893
    %s1896 = sld [smem:[#allocation3 + $0x2]]
    %v1897 = vmul.f32 %v1858, %v1895
    %v1898 = vstv %s1896
    %v1899 = vsub.f32 %v1898, %v1897
    %v1900 = vmul.f32 %v1800, %v1895
    %v1901 = vmul.f32 %v1801, %v1895
    %v1902 = vmul.f32 %v1802, %v1895
    %v1903 = vmul.f32 %v1803, %v1895
    %v1904 = vmul.f32 %v1804, %v1895
    %v1905 = vmul.f32 %v1805, %v1895
    %v1906 = vadd.f32 %v1900, %v1899
    %v1907 = vadd.f32 %v1901, %v1899
    %v1908 = vadd.f32 %v1902, %v1899
    %v1909 = vadd.f32 %v1903, %v1899
    %v1910 = vadd.f32 %v1904, %v1899
    %v1911 = vadd.f32 %v1905, %v1899
    %v1915 = vcombine.low %v1906, %v1907
    %v1917 = vunpack.c.l.s4 1966171168
    %v1918 = vunpack.c.0.s8 %v1917
    %v1919 = vlaneseq
    %v1920 = vshrl.u32 %v1919, 7
    %v1921 = vsub.s32 %v1918, %v1920
    %v1922 = vrot.slane %v1915, %v1921
    %v1924 = vunpack.c.l.s4 1966171168
    %v1925 = vunpack.c.0.s8 %v1924
    %v1926 = vlaneseq
    %v1927 = vshrl.u32 %v1926, 7
    %v1928 = vsub.s32 %v1925, %v1927
    %v1929 = vrot.slane %v1908, %v1928
    %v1930 = vcombine.low %v1922, %v1929
    %v1932 = vunpack.c.l.s4 1966171168
    %v1933 = vunpack.c.0.s8 %v1932
    %v1934 = vlaneseq
    %v1935 = vshrl.u32 %v1934, 7
    %v1936 = vsub.s32 %v1933, %v1935
    %v1937 = vrot.slane %v1930, %v1936
    %v1939 = vlaneseq
    %vm1940 = vcmp.ge.s32.totalorder %v1939, 0
    %vm1941 = vcmp.lt.s32.totalorder %v1939, 384
    %vm1942 = vmand %vm1940, %vm1941
    %1943 = vst.msk [vmem:[#allocation2] ss:$2 sm:$0x7] %vm1942, %v1937
    %v1947 = vcombine.low %v1909, %v1910
    %v1949 = vunpack.c.l.s4 1966171168
    %v1950 = vunpack.c.0.s8 %v1949
    %v1951 = vlaneseq
    %v1952 = vshrl.u32 %v1951, 7
    %v1953 = vsub.s32 %v1950, %v1952
    %v1954 = vrot.slane %v1947, %v1953
    %v1956 = vunpack.c.l.s4 1966171168
    %v1957 = vunpack.c.0.s8 %v1956
    %v1958 = vlaneseq
    %v1959 = vshrl.u32 %v1958, 7
    %v1960 = vsub.s32 %v1957, %v1959
    %v1961 = vrot.slane %v1911, %v1960
    %v1962 = vcombine.low %v1954, %v1961
    %v1964 = vunpack.c.l.s4 1966171168
    %v1965 = vunpack.c.0.s8 %v1964
    %v1966 = vlaneseq
    %v1967 = vshrl.u32 %v1966, 7
    %v1968 = vsub.s32 %v1965, %v1967
    %v1969 = vrot.slane %v1962, %v1968
    %s1971 = scalar_lea.vmem [#allocation2], 1
    %1972 = vst.msk [vmem:[%s1971] ss:$2 sm:$0x7] %vm1942, %v1969
    %vm1973 = vcmask 1041409
    %v1974 = vsel %vm1973, %v1838, 0.0
    %v1975 = vsel %vm1973, %v1839, 0.0
    %v1976 = vadd.f32 %v1974, %v1975
    %v1977 = vsel %vm1973, %v1840, 0.0
    %v1978 = vadd.f32 %v1976, %v1977
    %v1979 = vsel %vm1973, %v1841, 0.0
    %v1980 = vadd.f32 %v1978, %v1979
    %v1981 = vsel %vm1973, %v1842, 0.0
    %v1982 = vadd.f32 %v1980, %v1981
    %v1983 = vsel %vm1973, %v1843, 0.0
    %v1984 = vadd.f32 %v1982, %v1983
    %1985 = vadd.xlane.f32.xlu0 %v1984
    %v1986 = vpop.xlane.xlu0 %1985
    %v1987 = vmul.f32 %v1986, 0.0025
    %v1988 = vsub.f32 %v1800, %v1987
    %v1989 = vsub.f32 %v1801, %v1987
    %v1990 = vsub.f32 %v1802, %v1987
    %v1991 = vsub.f32 %v1803, %v1987
    %v1992 = vsub.f32 %v1804, %v1987
    %v1993 = vsub.f32 %v1805, %v1987
    %v1994 = vmul.f32 %v1988, %v1811
    %v1995 = vmul.f32 %v1989, %v1815
    %v1996 = vmul.f32 %v1990, %v1819
    %v1997 = vmul.f32 %v1991, %v1823
    %v1998 = vmul.f32 %v1992, %v1827
    %v1999 = vmul.f32 %v1993, %v1831
    %v2000 = vmul.f32 %v1994, %v1994
    %v2001 = vmul.f32 %v1995, %v1995
    %v2002 = vmul.f32 %v1996, %v1996
    %v2003 = vmul.f32 %v1997, %v1997
    %v2004 = vmul.f32 %v1998, %v1998
    %v2005 = vmul.f32 %v1999, %v1999
    %v2006 = vsel %vm1973, %v2000, 0.0
    %v2007 = vsel %vm1973, %v2001, 0.0
    %v2008 = vadd.f32 %v2006, %v2007
    %v2009 = vsel %vm1973, %v2002, 0.0
    %v2010 = vadd.f32 %v2008, %v2009
    %v2011 = vsel %vm1973, %v2003, 0.0
    %v2012 = vadd.f32 %v2010, %v2011
    %v2013 = vsel %vm1973, %v2004, 0.0
    %v2014 = vadd.f32 %v2012, %v2013
    %v2015 = vsel %vm1973, %v2005, 0.0
    %v2016 = vadd.f32 %v2014, %v2015
    %2017 = vadd.xlane.f32.xlu0 %v2016
    %v2018 = vpop.xlane.xlu0 %2017
    %v2019 = vmul.f32 %v2018, 0.0025
    %s2020 = sld [smem:[#allocation3 + $0x1]]
    %v2021 = vadd.f32 %v2019, 1e-05
    %v2022 = vrsqrt.pop %v2021
    %v2023 = vstv %s2020
    %v2024 = vmul.f32 %v2023, %v2022
    %s2025 = sld [smem:[#allocation3 + $0x3]]
    %v2026 = vmul.f32 %v1987, %v2024
    %v2027 = vstv %s2025
    %v2028 = vsub.f32 %v2027, %v2026
    %v2029 = vmul.f32 %v1800, %v2024
    %v2030 = vmul.f32 %v1801, %v2024
    %v2031 = vmul.f32 %v1802, %v2024
    %v2032 = vmul.f32 %v1803, %v2024
    %v2033 = vmul.f32 %v1804, %v2024
    %v2034 = vmul.f32 %v1805, %v2024
    %v2035 = vadd.f32 %v2029, %v2028
    %v2036 = vadd.f32 %v2030, %v2028
    %v2037 = vadd.f32 %v2031, %v2028
    %v2038 = vadd.f32 %v2032, %v2028
    %v2039 = vadd.f32 %v2033, %v2028
    %v2040 = vadd.f32 %v2034, %v2028
    %v2044 = vcombine.low %v2035, %v2036
    %v2046 = vunpack.c.l.s4 1966171168
    %v2047 = vunpack.c.0.s8 %v2046
    %v2048 = vlaneseq
    %v2049 = vshrl.u32 %v2048, 7
    %v2050 = vsub.s32 %v2047, %v2049
    %v2051 = vrot.slane %v2044, %v2050
    %v2053 = vunpack.c.l.s4 1966171168
    %v2054 = vunpack.c.0.s8 %v2053
    %v2055 = vlaneseq
    %v2056 = vshrl.u32 %v2055, 7
    %v2057 = vsub.s32 %v2054, %v2056
    %v2058 = vrot.slane %v2037, %v2057
    %v2059 = vcombine.high %v2051, %v2058
    %v2061 = vunpack.c.l.s4 1966171168
    %v2062 = vunpack.c.0.s8 %v2061
    %v2063 = vlaneseq
    %v2064 = vshrl.u32 %v2063, 7
    %v2065 = vsub.s32 %v2062, %v2064
    %v2066 = vrot.slane %v2059, %v2065
    %s2068 = scalar_lea.vmem [#allocation2], 6
    %2069 = vst.msk [vmem:[%s2068] ss:$2 sm:$0x7] %vm1942, %v2066
    %v2073 = vcombine.low %v2038, %v2039
    %v2075 = vunpack.c.l.s4 1966171168
    %v2076 = vunpack.c.0.s8 %v2075
    %v2077 = vlaneseq
    %v2078 = vshrl.u32 %v2077, 7
    %v2079 = vsub.s32 %v2076, %v2078
    %v2080 = vrot.slane %v2073, %v2079
    %v2082 = vunpack.c.l.s4 1966171168
    %v2083 = vunpack.c.0.s8 %v2082
    %v2084 = vlaneseq
    %v2085 = vshrl.u32 %v2084, 7
    %v2086 = vsub.s32 %v2083, %v2085
    %v2087 = vrot.slane %v2040, %v2086
    %v2088 = vcombine.high %v2080, %v2087
    %v2090 = vunpack.c.l.s4 1966171168
    %v2091 = vunpack.c.0.s8 %v2090
    %v2092 = vlaneseq
    %v2093 = vshrl.u32 %v2092, 7
    %v2094 = vsub.s32 %v2091, %v2093
    %v2095 = vrot.slane %v2088, %v2094
    %s2097 = scalar_lea.vmem [#allocation2], 7
    %2098 = vst.msk [vmem:[%s2097] ss:$2 sm:$0x7] %vm1942, %v2095
    %s2099 = scalar_lea.vmem [#allocation14], 1
    %v2100 = vld [vmem:[%s2099] ss:$4 sm:$0x3]
    %s2101 = scalar_lea.vmem [#allocation14], 2
    %v2102 = vld [vmem:[%s2101] ss:$4 sm:$0x3]
    %v2103 = vld [vmem:[#allocation14 + $0x3] sm:$0x1]
    %v2104 = vld [vmem:[#allocation2] sm:$0xff]
    %v2105 = vld [vmem:[#allocation2 + $0x8] sm:$0xf]
    %v2108 = vcombine.high %v2104, %v2104
    %v2110 = vunpack.c.l.s4 1983009808
    %v2111 = vunpack.c.0.s8 %v2110
    %v2112 = vlaneseq
    %v2113 = vshrl.u32 %v2112, 7
    %v2114 = vsub.s32 %v2111, %v2113
    %v2115 = vrot.slane %v2104, %v2114
    %v2117 = vunpack.c.l.s4 1983009808
    %v2118 = vunpack.c.0.s8 %v2117
    %v2119 = vlaneseq
    %v2120 = vshrl.u32 %v2119, 7
    %v2121 = vsub.s32 %v2118, %v2120
    %v2122 = vrot.slane %v2108, %v2121
    %v2123 = vcombine.high %v2115, %v2115
    %v2124 = vcombine.high %v2122, %v2122
    %v2126 = vunpack.c.l.s4 1983009808
    %v2127 = vunpack.c.0.s8 %v2126
    %v2128 = vlaneseq
    %v2129 = vshrl.u32 %v2128, 7
    %v2130 = vsub.s32 %v2127, %v2129
    %v2131 = vrot.slane %v2105, %v2130
    %v2132 = vcombine.high %v2131, %v2131
    %v2139 = vpack.c.bf16 %v2115, %v2115
    %v2140 = vpack.c.bf16 %v2123, %v2123
    %v2141 = vpack.c.bf16 %v2122, %v2122
    %v2142 = vpack.c.bf16 %v2124, %v2124
    %v2143 = vpack.c.bf16 %v2131, %v2131
    %v2144 = vpack.c.bf16 %v2132, %v2132
    %v2145 = vld [vmem:[#allocation10] sm:$0xff]
    %v2146 = vld [vmem:[#allocation10 + $0x8] sm:$0xff]
    %v2147 = vld [vmem:[#allocation10 + $0x10] sm:$0xff]
    %v2148 = vld [vmem:[#allocation10 + $0x18] sm:$0xff]
    %v2149 = vld [vmem:[#allocation10 + $0x20] sm:$0xff]
    %v2150 = vld [vmem:[#allocation10 + $0x28] sm:$0xff]
    %v2151 = vld [vmem:[#allocation10 + $0x30] sm:$0xff]
    %v2152 = vld [vmem:[#allocation10 + $0x38] sm:$0xff]
    %v2153 = vld [vmem:[#allocation10 + $0x40] sm:$0xff]
    %v2154 = vld [vmem:[#allocation10 + $0x48] sm:$0xff]
    %v2155 = vld [vmem:[#allocation10 + $0x50] sm:$0xff]
    %v2156 = vld [vmem:[#allocation10 + $0x58] sm:$0xff]
    %v2157 = vld [vmem:[#allocation10 + $0x60] sm:$0xff]
    %v2158 = vld [vmem:[#allocation10 + $0x68] sm:$0xff]
    %v2159 = vld [vmem:[#allocation10 + $0x70] sm:$0xff]
    %v2160 = vld [vmem:[#allocation10 + $0x78] sm:$0xff]
    %v2161 = vld [vmem:[#allocation10 + $0x80] sm:$0xff]
    %v2162 = vld [vmem:[#allocation10 + $0x88] sm:$0xff]
    %v2163 = vld [vmem:[#allocation10 + $0x90] sm:$0xff]
    %v2164 = vld [vmem:[#allocation10 + $0x98] sm:$0xff]
    %v2165 = vld [vmem:[#allocation10 + $0xa0] sm:$0xff]
    %v2166 = vld [vmem:[#allocation10 + $0xa8] sm:$0xff]
    %v2167 = vld [vmem:[#allocation10 + $0xb0] sm:$0xff]
    %v2168 = vld [vmem:[#allocation10 + $0xb8] sm:$0xff]
    %v2169 = vld [vmem:[#allocation10 + $0xc0] sm:$0xff]
    %v2170 = vld [vmem:[#allocation10 + $0xc8] sm:$0xff]
    %v2171 = vld [vmem:[#allocation10 + $0xd0] sm:$0xff]
    %v2172 = vld [vmem:[#allocation10 + $0xd8] sm:$0xff]
    %v2173 = vld [vmem:[#allocation10 + $0xe0] sm:$0xff]
    %v2174 = vld [vmem:[#allocation10 + $0xe8] sm:$0xff]
    %v2175 = vld [vmem:[#allocation10 + $0xf0] sm:$0xff]
    %v2176 = vld [vmem:[#allocation10 + $0xf8] sm:$0xff]
    %v2177 = vld [vmem:[#allocation10 + $0x100] sm:$0xff]
    %v2178 = vld [vmem:[#allocation10 + $0x108] sm:$0xff]
    %v2179 = vld [vmem:[#allocation10 + $0x110] sm:$0xff]
    %v2180 = vld [vmem:[#allocation10 + $0x118] sm:$0xff]
    %v2181 = vld [vmem:[#allocation10 + $0x120] sm:$0xff]
    %v2182 = vld [vmem:[#allocation10 + $0x128] sm:$0xff]
    %v2183 = vld [vmem:[#allocation10 + $0x130] sm:$0xff]
    %v2184 = vld [vmem:[#allocation10 + $0x138] sm:$0xff]
    %v2185 = vld [vmem:[#allocation10 + $0x140] sm:$0xff]
    %v2186 = vld [vmem:[#allocation10 + $0x148] sm:$0xff]
    %v2187 = vld [vmem:[#allocation10 + $0x150] sm:$0xff]
    %v2188 = vld [vmem:[#allocation10 + $0x158] sm:$0xff]
    %v2189 = vld [vmem:[#allocation10 + $0x160] sm:$0xff]
    %v2190 = vld [vmem:[#allocation10 + $0x168] sm:$0xff]
    %v2191 = vld [vmem:[#allocation10 + $0x170] sm:$0xff]
    %v2192 = vld [vmem:[#allocation10 + $0x178] sm:$0xff]
    %v2193 = vld [vmem:[#allocation10 + $0x180] sm:$0xff]
    %v2194 = vld [vmem:[#allocation10 + $0x188] sm:$0xff]
    %v2195 = vld [vmem:[#allocation10 + $0x190] sm:$0xff]
    %v2196 = vld [vmem:[#allocation10 + $0x198] sm:$0xff]
    %v2197 = vld [vmem:[#allocation10 + $0x1a0] sm:$0xff]
    %v2198 = vld [vmem:[#allocation10 + $0x1a8] sm:$0xff]
    %v2199 = vld [vmem:[#allocation10 + $0x1b0] sm:$0xff]
    %v2200 = vld [vmem:[#allocation10 + $0x1b8] sm:$0xff]
    %v2201 = vld [vmem:[#allocation10 + $0x1c0] sm:$0xff]
    %v2202 = vld [vmem:[#allocation10 + $0x1c8] sm:$0xff]
    %v2203 = vld [vmem:[#allocation10 + $0x1d0] sm:$0xff]
    %v2204 = vld [vmem:[#allocation10 + $0x1d8] sm:$0xff]
    %v2205 = vld [vmem:[#allocation10 + $0x1e0] sm:$0xff]
    %v2206 = vld [vmem:[#allocation10 + $0x1e8] sm:$0xff]
    %v2207 = vld [vmem:[#allocation10 + $0x1f0] sm:$0xff]
    %v2208 = vld [vmem:[#allocation10 + $0x1f8] sm:$0xff]
    %v2209 = vld [vmem:[#allocation10 + $0x200] sm:$0xff]
    %v2210 = vld [vmem:[#allocation10 + $0x208] sm:$0xff]
    %v2211 = vld [vmem:[#allocation10 + $0x210] sm:$0xff]
    %v2212 = vld [vmem:[#allocation10 + $0x218] sm:$0xff]
    %v2213 = vld [vmem:[#allocation10 + $0x220] sm:$0xff]
    %v2214 = vld [vmem:[#allocation10 + $0x228] sm:$0xff]
    %v2215 = vld [vmem:[#allocation10 + $0x230] sm:$0xff]
    %v2216 = vld [vmem:[#allocation10 + $0x238] sm:$0xff]
    %v2217 = vld [vmem:[#allocation10 + $0x240] sm:$0xff]
    %v2218 = vld [vmem:[#allocation10 + $0x248] sm:$0xff]
    %v2219 = vld [vmem:[#allocation10 + $0x250] sm:$0xff]
    %v2220 = vld [vmem:[#allocation10 + $0x258] sm:$0xff]
    %v2221 = vld [vmem:[#allocation10 + $0x260] sm:$0xff]
    %v2222 = vld [vmem:[#allocation10 + $0x268] sm:$0xff]
    %v2223 = vld [vmem:[#allocation10 + $0x270] sm:$0xff]
    %v2224 = vld [vmem:[#allocation10 + $0x278] sm:$0xff]
    %v2225 = vld [vmem:[#allocation10 + $0x280] sm:$0xff]
    %v2226 = vld [vmem:[#allocation10 + $0x288] sm:$0xff]
    %v2227 = vld [vmem:[#allocation10 + $0x290] sm:$0xff]
    %v2228 = vld [vmem:[#allocation10 + $0x298] sm:$0xff]
    %v2229 = vld [vmem:[#allocation10 + $0x2a0] sm:$0xff]
    %v2230 = vld [vmem:[#allocation10 + $0x2a8] sm:$0xff]
    %v2231 = vld [vmem:[#allocation10 + $0x2b0] sm:$0xff]
    %v2232 = vld [vmem:[#allocation10 + $0x2b8] sm:$0xff]
    %v2233 = vld [vmem:[#allocation10 + $0x2c0] sm:$0xff]
    %v2234 = vld [vmem:[#allocation10 + $0x2c8] sm:$0xff]
    %v2235 = vld [vmem:[#allocation10 + $0x2d0] sm:$0xff]
    %v2236 = vld [vmem:[#allocation10 + $0x2d8] sm:$0xff]
    %v2237 = vld [vmem:[#allocation10 + $0x2e0] sm:$0xff]
    %v2238 = vld [vmem:[#allocation10 + $0x2e8] sm:$0xff]
    %v2239 = vld [vmem:[#allocation10 + $0x2f0] sm:$0xff]
    %v2240 = vld [vmem:[#allocation10 + $0x2f8] sm:$0xff]
    %v2242 = vlaneseq
    %v2243 = vshrl.u32 %v2242, 7
    %v2244 = vsub.s32 0, %v2243
    %v2245 = vrot.slane %v2100, %v2244
    %v2246 = vlaneseq
    %v2247 = vshrl.u32 %v2246, 7
    %v2248 = vsub.s32 1, %v2247
    %v2249 = vrot.slane %v2100, %v2248
    %v2348 = vunpack.c.l.b16 %v2145
    %v2349 = vunpack.c.h.b16 %v2145
    %v2350 = vunpack.c.l.b16 %v2146
    %v2351 = vunpack.c.h.b16 %v2146
    %v2352 = vunpack.c.l.b16 %v2147
    %v2353 = vunpack.c.h.b16 %v2147
    %v2354 = vunpack.c.l.b16 %v2148
    %v2355 = vunpack.c.h.b16 %v2148
    %v2356 = vunpack.c.l.b16 %v2149
    %v2357 = vunpack.c.h.b16 %v2149
    %v2358 = vunpack.c.l.b16 %v2150
    %v2359 = vunpack.c.h.b16 %v2150
    %v2360 = vunpack.c.l.b16 %v2151
    %v2361 = vunpack.c.h.b16 %v2151
    %v2362 = vunpack.c.l.b16 %v2152
    %v2363 = vunpack.c.h.b16 %v2152
    %v2364 = vunpack.c.l.b16 %v2153
    %v2365 = vunpack.c.h.b16 %v2153
    %v2366 = vunpack.c.l.b16 %v2154
    %v2367 = vunpack.c.h.b16 %v2154
    %v2368 = vunpack.c.l.b16 %v2155
    %v2369 = vunpack.c.h.b16 %v2155
    %v2370 = vunpack.c.l.b16 %v2156
    %v2371 = vunpack.c.h.b16 %v2156
    %v2372 = vunpack.c.l.b16 %v2157
    %v2373 = vunpack.c.h.b16 %v2157
    %v2374 = vunpack.c.l.b16 %v2158
    %v2375 = vunpack.c.h.b16 %v2158
    %v2376 = vunpack.c.l.b16 %v2159
    %v2377 = vunpack.c.h.b16 %v2159
    %v2378 = vunpack.c.l.b16 %v2160
    %v2379 = vunpack.c.h.b16 %v2160
    %v2380 = vunpack.c.l.b16 %v2161
    %v2381 = vunpack.c.h.b16 %v2161
    %v2382 = vunpack.c.l.b16 %v2162
    %v2383 = vunpack.c.h.b16 %v2162
    %v2384 = vunpack.c.l.b16 %v2163
    %v2385 = vunpack.c.h.b16 %v2163
    %v2386 = vunpack.c.l.b16 %v2164
    %v2387 = vunpack.c.h.b16 %v2164
    %v2388 = vunpack.c.l.b16 %v2165
    %v2389 = vunpack.c.h.b16 %v2165
    %v2390 = vunpack.c.l.b16 %v2166
    %v2391 = vunpack.c.h.b16 %v2166
    %v2392 = vunpack.c.l.b16 %v2167
    %v2393 = vunpack.c.h.b16 %v2167
    %v2394 = vunpack.c.l.b16 %v2168
    %v2395 = vunpack.c.h.b16 %v2168
    %v2396 = vunpack.c.l.b16 %v2169
    %v2397 = vunpack.c.h.b16 %v2169
    %v2398 = vunpack.c.l.b16 %v2170
    %v2399 = vunpack.c.h.b16 %v2170
    %v2400 = vunpack.c.l.b16 %v2171
    %v2401 = vunpack.c.h.b16 %v2171
    %v2402 = vunpack.c.l.b16 %v2172
    %v2403 = vunpack.c.h.b16 %v2172
    %v2404 = vunpack.c.l.b16 %v2173
    %v2405 = vunpack.c.h.b16 %v2173
    %v2406 = vunpack.c.l.b16 %v2174
    %v2407 = vunpack.c.h.b16 %v2174
    %v2408 = vunpack.c.l.b16 %v2175
    %v2409 = vunpack.c.h.b16 %v2175
    %v2410 = vunpack.c.l.b16 %v2176
    %v2411 = vunpack.c.h.b16 %v2176
    %v2412 = vunpack.c.l.b16 %v2177
    %v2413 = vunpack.c.h.b16 %v2177
    %v2414 = vunpack.c.l.b16 %v2178
    %v2415 = vunpack.c.h.b16 %v2178
    %v2416 = vunpack.c.l.b16 %v2179
    %v2417 = vunpack.c.h.b16 %v2179
    %v2418 = vunpack.c.l.b16 %v2180
    %v2419 = vunpack.c.h.b16 %v2180
    %v2420 = vunpack.c.l.b16 %v2181
    %v2421 = vunpack.c.h.b16 %v2181
    %v2422 = vunpack.c.l.b16 %v2182
    %v2423 = vunpack.c.h.b16 %v2182
    %v2424 = vunpack.c.l.b16 %v2183
    %v2425 = vunpack.c.h.b16 %v2183
    %v2426 = vunpack.c.l.b16 %v2184
    %v2427 = vunpack.c.h.b16 %v2184
    %v2428 = vunpack.c.l.b16 %v2185
    %v2429 = vunpack.c.h.b16 %v2185
    %v2430 = vunpack.c.l.b16 %v2186
    %v2431 = vunpack.c.h.b16 %v2186
    %v2432 = vunpack.c.l.b16 %v2187
    %v2433 = vunpack.c.h.b16 %v2187
    %v2434 = vunpack.c.l.b16 %v2188
    %v2435 = vunpack.c.h.b16 %v2188
    %v2436 = vunpack.c.l.b16 %v2189
    %v2437 = vunpack.c.h.b16 %v2189
    %v2438 = vunpack.c.l.b16 %v2190
    %v2439 = vunpack.c.h.b16 %v2190
    %v2440 = vunpack.c.l.b16 %v2191
    %v2441 = vunpack.c.h.b16 %v2191
    %v2442 = vunpack.c.l.b16 %v2192
    %v2443 = vunpack.c.h.b16 %v2192
    %v2444 = vunpack.c.l.b16 %v2193
    %v2445 = vunpack.c.h.b16 %v2193
    %v2446 = vunpack.c.l.b16 %v2194
    %v2447 = vunpack.c.h.b16 %v2194
    %v2448 = vunpack.c.l.b16 %v2195
    %v2449 = vunpack.c.h.b16 %v2195
    %v2450 = vunpack.c.l.b16 %v2196
    %v2451 = vunpack.c.h.b16 %v2196
    %v2452 = vunpack.c.l.b16 %v2197
    %v2453 = vunpack.c.h.b16 %v2197
    %v2454 = vunpack.c.l.b16 %v2198
    %v2455 = vunpack.c.h.b16 %v2198
    %v2456 = vunpack.c.l.b16 %v2199
    %v2457 = vunpack.c.h.b16 %v2199
    %v2458 = vunpack.c.l.b16 %v2200
    %v2459 = vunpack.c.h.b16 %v2200
    %v2460 = vunpack.c.l.b16 %v2201
    %v2461 = vunpack.c.h.b16 %v2201
    %v2462 = vunpack.c.l.b16 %v2202
    %v2463 = vunpack.c.h.b16 %v2202
    %v2464 = vunpack.c.l.b16 %v2203
    %v2465 = vunpack.c.h.b16 %v2203
    %v2466 = vunpack.c.l.b16 %v2204
    %v2467 = vunpack.c.h.b16 %v2204
    %v2468 = vunpack.c.l.b16 %v2205
    %v2469 = vunpack.c.h.b16 %v2205
    %v2470 = vunpack.c.l.b16 %v2206
    %v2471 = vunpack.c.h.b16 %v2206
    %v2472 = vunpack.c.l.b16 %v2207
    %v2473 = vunpack.c.h.b16 %v2207
    %v2474 = vunpack.c.l.b16 %v2208
    %v2475 = vunpack.c.h.b16 %v2208
    %v2476 = vunpack.c.l.b16 %v2209
    %v2477 = vunpack.c.h.b16 %v2209
    %v2478 = vunpack.c.l.b16 %v2210
    %v2479 = vunpack.c.h.b16 %v2210
    %v2480 = vunpack.c.l.b16 %v2211
    %v2481 = vunpack.c.h.b16 %v2211
    %v2482 = vunpack.c.l.b16 %v2212
    %v2483 = vunpack.c.h.b16 %v2212
    %v2484 = vunpack.c.l.b16 %v2213
    %v2485 = vunpack.c.h.b16 %v2213
    %v2486 = vunpack.c.l.b16 %v2214
    %v2487 = vunpack.c.h.b16 %v2214
    %v2488 = vunpack.c.l.b16 %v2215
    %v2489 = vunpack.c.h.b16 %v2215
    %v2490 = vunpack.c.l.b16 %v2216
    %v2491 = vunpack.c.h.b16 %v2216
    %v2492 = vunpack.c.l.b16 %v2217
    %v2493 = vunpack.c.h.b16 %v2217
    %v2494 = vunpack.c.l.b16 %v2218
    %v2495 = vunpack.c.h.b16 %v2218
    %v2496 = vunpack.c.l.b16 %v2219
    %v2497 = vunpack.c.h.b16 %v2219
    %v2498 = vunpack.c.l.b16 %v2220
    %v2499 = vunpack.c.h.b16 %v2220
    %v2500 = vunpack.c.l.b16 %v2221
    %v2501 = vunpack.c.h.b16 %v2221
    %v2502 = vunpack.c.l.b16 %v2222
    %v2503 = vunpack.c.h.b16 %v2222
    %v2504 = vunpack.c.l.b16 %v2223
    %v2505 = vunpack.c.h.b16 %v2223
    %v2506 = vunpack.c.l.b16 %v2224
    %v2507 = vunpack.c.h.b16 %v2224
    %v2508 = vunpack.c.l.b16 %v2225
    %v2509 = vunpack.c.h.b16 %v2225
    %v2510 = vunpack.c.l.b16 %v2226
    %v2511 = vunpack.c.h.b16 %v2226
    %v2512 = vunpack.c.l.b16 %v2227
    %v2513 = vunpack.c.h.b16 %v2227
    %v2514 = vunpack.c.l.b16 %v2228
    %v2515 = vunpack.c.h.b16 %v2228
    %v2516 = vunpack.c.l.b16 %v2229
    %v2517 = vunpack.c.h.b16 %v2229
    %v2518 = vunpack.c.l.b16 %v2230
    %v2519 = vunpack.c.h.b16 %v2230
    %v2520 = vunpack.c.l.b16 %v2231
    %v2521 = vunpack.c.h.b16 %v2231
    %v2522 = vunpack.c.l.b16 %v2232
    %v2523 = vunpack.c.h.b16 %v2232
    %v2524 = vunpack.c.l.b16 %v2233
    %v2525 = vunpack.c.h.b16 %v2233
    %v2526 = vunpack.c.l.b16 %v2234
    %v2527 = vunpack.c.h.b16 %v2234
    %v2528 = vunpack.c.l.b16 %v2235
    %v2529 = vunpack.c.h.b16 %v2235
    %v2530 = vunpack.c.l.b16 %v2236
    %v2531 = vunpack.c.h.b16 %v2236
    %v2532 = vunpack.c.l.b16 %v2237
    %v2533 = vunpack.c.h.b16 %v2237
    %v2534 = vunpack.c.l.b16 %v2238
    %v2535 = vunpack.c.h.b16 %v2238
    %v2536 = vunpack.c.l.b16 %v2239
    %v2537 = vunpack.c.h.b16 %v2239
    %v2538 = vunpack.c.l.b16 %v2240
    %v2539 = vunpack.c.h.b16 %v2240
    %v2540 = vpack.c.b16 %v2350, %v2348
    %v2541 = vpack.c.b16 %v2351, %v2349
    %v2542 = vpack.c.b16 %v2354, %v2352
    %v2543 = vpack.c.b16 %v2355, %v2353
    %v2544 = vpack.c.b16 %v2358, %v2356
    %v2545 = vpack.c.b16 %v2359, %v2357
    %v2546 = vpack.c.b16 %v2362, %v2360
    %v2547 = vpack.c.b16 %v2363, %v2361
    %v2548 = vpack.c.b16 %v2366, %v2364
    %v2549 = vpack.c.b16 %v2367, %v2365
    %v2550 = vpack.c.b16 %v2370, %v2368
    %v2551 = vpack.c.b16 %v2371, %v2369
    %v2552 = vpack.c.b16 %v2374, %v2372
    %v2553 = vpack.c.b16 %v2375, %v2373
    %v2554 = vpack.c.b16 %v2378, %v2376
    %v2555 = vpack.c.b16 %v2379, %v2377
    %v2556 = vpack.c.b16 %v2382, %v2380
    %v2557 = vpack.c.b16 %v2383, %v2381
    %v2558 = vpack.c.b16 %v2386, %v2384
    %v2559 = vpack.c.b16 %v2387, %v2385
    %v2560 = vpack.c.b16 %v2390, %v2388
    %v2561 = vpack.c.b16 %v2391, %v2389
    %v2562 = vpack.c.b16 %v2394, %v2392
    %v2563 = vpack.c.b16 %v2395, %v2393
    %v2564 = vpack.c.b16 %v2398, %v2396
    %v2565 = vpack.c.b16 %v2399, %v2397
    %v2566 = vpack.c.b16 %v2402, %v2400
    %v2567 = vpack.c.b16 %v2403, %v2401
    %v2568 = vpack.c.b16 %v2406, %v2404
    %v2569 = vpack.c.b16 %v2407, %v2405
    %v2570 = vpack.c.b16 %v2410, %v2408
    %v2571 = vpack.c.b16 %v2411, %v2409
    %v2572 = vpack.c.b16 %v2414, %v2412
    %v2573 = vpack.c.b16 %v2415, %v2413
    %v2574 = vpack.c.b16 %v2418, %v2416
    %v2575 = vpack.c.b16 %v2419, %v2417
    %v2576 = vpack.c.b16 %v2422, %v2420
    %v2577 = vpack.c.b16 %v2423, %v2421
    %v2578 = vpack.c.b16 %v2426, %v2424
    %v2579 = vpack.c.b16 %v2427, %v2425
    %v2580 = vpack.c.b16 %v2430, %v2428
    %v2581 = vpack.c.b16 %v2431, %v2429
    %v2582 = vpack.c.b16 %v2434, %v2432
    %v2583 = vpack.c.b16 %v2435, %v2433
    %v2584 = vpack.c.b16 %v2438, %v2436
    %v2585 = vpack.c.b16 %v2439, %v2437
    %v2586 = vpack.c.b16 %v2442, %v2440
    %v2587 = vpack.c.b16 %v2443, %v2441
    %v2588 = vpack.c.b16 %v2446, %v2444
    %v2589 = vpack.c.b16 %v2447, %v2445
    %v2590 = vpack.c.b16 %v2450, %v2448
    %v2591 = vpack.c.b16 %v2451, %v2449
    %v2592 = vpack.c.b16 %v2454, %v2452
    %v2593 = vpack.c.b16 %v2455, %v2453
    %v2594 = vpack.c.b16 %v2458, %v2456
    %v2595 = vpack.c.b16 %v2459, %v2457
    %v2596 = vpack.c.b16 %v2462, %v2460
    %v2597 = vpack.c.b16 %v2463, %v2461
    %v2598 = vpack.c.b16 %v2466, %v2464
    %v2599 = vpack.c.b16 %v2467, %v2465
    %v2600 = vpack.c.b16 %v2470, %v2468
    %v2601 = vpack.c.b16 %v2471, %v2469
    %v2602 = vpack.c.b16 %v2474, %v2472
    %v2603 = vpack.c.b16 %v2475, %v2473
    %v2604 = vpack.c.b16 %v2478, %v2476
    %v2605 = vpack.c.b16 %v2479, %v2477
    %v2606 = vpack.c.b16 %v2482, %v2480
    %v2607 = vpack.c.b16 %v2483, %v2481
    %v2608 = vpack.c.b16 %v2486, %v2484
    %v2609 = vpack.c.b16 %v2487, %v2485
    %v2610 = vpack.c.b16 %v2490, %v2488
    %v2611 = vpack.c.b16 %v2491, %v2489
    %v2612 = vpack.c.b16 %v2494, %v2492
    %v2613 = vpack.c.b16 %v2495, %v2493
    %v2614 = vpack.c.b16 %v2498, %v2496
    %v2615 = vpack.c.b16 %v2499, %v2497
    %v2616 = vpack.c.b16 %v2502, %v2500
    %v2617 = vpack.c.b16 %v2503, %v2501
    %v2618 = vpack.c.b16 %v2506, %v2504
    %v2619 = vpack.c.b16 %v2507, %v2505
    %v2620 = vpack.c.b16 %v2510, %v2508
    %v2621 = vpack.c.b16 %v2511, %v2509
    %v2622 = vpack.c.b16 %v2514, %v2512
    %v2623 = vpack.c.b16 %v2515, %v2513
    %v2624 = vpack.c.b16 %v2518, %v2516
    %v2625 = vpack.c.b16 %v2519, %v2517
    %v2626 = vpack.c.b16 %v2522, %v2520
    %v2627 = vpack.c.b16 %v2523, %v2521
    %v2628 = vpack.c.b16 %v2526, %v2524
    %v2629 = vpack.c.b16 %v2527, %v2525
    %v2630 = vpack.c.b16 %v2530, %v2528
    %v2631 = vpack.c.b16 %v2531, %v2529
    %v2632 = vpack.c.b16 %v2534, %v2532
    %v2633 = vpack.c.b16 %v2535, %v2533
    %v2634 = vpack.c.b16 %v2538, %v2536
    %v2635 = vpack.c.b16 %v2539, %v2537
    %2732 = vmatprep.subr.bf16.mxu0 %v2555
    %2733 = vmatpush1.bf16.msra.mxu0 %v2554
    %2734 = vmatprep.subr.bf16.mxu0 %v2553
    %2735 = vmatpush1.bf16.msra.mxu0 %v2552
    %2736 = vmatprep.subr.bf16.mxu0 %v2551
    %2737 = vmatpush1.bf16.msra.mxu0 %v2550
    %2738 = vmatprep.subr.bf16.mxu0 %v2549
    %2739 = vmatpush1.bf16.msra.mxu0 %v2548
    %2740 = vmatprep.subr.bf16.mxu0 %v2547
    %2741 = vmatpush1.bf16.msra.mxu0 %v2546
    %2742 = vmatprep.subr.bf16.mxu0 %v2545
    %2743 = vmatpush1.bf16.msra.mxu0 %v2544
    %2744 = vmatprep.subr.bf16.mxu0 %v2543
    %2745 = vmatpush1.bf16.msra.mxu0 %v2542
    %2746 = vmatprep.subr.bf16.mxu0 %v2541
    %2747 = vmatpush1.bf16.msra.mxu0 %v2540
    %2748 = vmatprep.subr.bf16.mxu0 %v2571
    %2749 = vmatpush2.bf16.msra.mxu0 %v2570
    %2750 = vmatprep.subr.bf16.mxu0 %v2569
    %2751 = vmatpush2.bf16.msra.mxu0 %v2568
    %2752 = vmatprep.subr.bf16.mxu0 %v2567
    %2753 = vmatpush2.bf16.msra.mxu0 %v2566
    %2754 = vmatprep.subr.bf16.mxu0 %v2565
    %2755 = vmatpush2.bf16.msra.mxu0 %v2564
    %2756 = vmatprep.subr.bf16.mxu0 %v2563
    %2757 = vmatpush2.bf16.msra.mxu0 %v2562
    %2758 = vmatprep.subr.bf16.mxu0 %v2561
    %2759 = vmatpush2.bf16.msra.mxu0 %v2560
    %2760 = vmatprep.subr.bf16.mxu0 %v2559
    %2761 = vmatpush2.bf16.msra.mxu0 %v2558
    %2762 = vmatprep.subr.bf16.mxu0 %v2557
    %2763 = vmatpush2.bf16.msra.mxu0 %v2556
    %2764 = vmatprep.mubr.bf16.mxu0 %v2140
    %2765 = vmatmul.mubr.bf16.gmra.mxu0 %v2139
    %v2766 = vpop.f32.mrf.mxu0
    %v2767 = vadd.f32 %v2245, %v2766
    %v2768 = vpop.f32.mrf.mxu0
    %v2769 = vadd.f32 %v2249, %v2768
    %v2770 = vpop.f32.mrf.mxu0
    %v2771 = vpop.f32.mrf.mxu0
    %2772 = vdwg.mxu0
    %2773 = vmatprep.subr.bf16.mxu0 %v2587
    %2774 = vmatpush1.bf16.msra.mxu0 %v2586
    %2775 = vmatprep.subr.bf16.mxu0 %v2585
    %2776 = vmatpush1.bf16.msra.mxu0 %v2584
    %2777 = vmatprep.subr.bf16.mxu0 %v2583
    %2778 = vmatpush1.bf16.msra.mxu0 %v2582
    %2779 = vmatprep.subr.bf16.mxu0 %v2581
    %2780 = vmatpush1.bf16.msra.mxu0 %v2580
    %2781 = vmatprep.subr.bf16.mxu0 %v2579
    %2782 = vmatpush1.bf16.msra.mxu0 %v2578
    %2783 = vmatprep.subr.bf16.mxu0 %v2577
    %2784 = vmatpush1.bf16.msra.mxu0 %v2576
    %2785 = vmatprep.subr.bf16.mxu0 %v2575
    %2786 = vmatpush1.bf16.msra.mxu0 %v2574
    %2787 = vmatprep.subr.bf16.mxu0 %v2573
    %2788 = vmatpush1.bf16.msra.mxu0 %v2572
    %2789 = vmatprep.subr.bf16.mxu0 %v2603
    %2790 = vmatpush2.bf16.msra.mxu0 %v2602
    %2791 = vmatprep.subr.bf16.mxu0 %v2601
    %2792 = vmatpush2.bf16.msra.mxu0 %v2600
    %2793 = vmatprep.subr.bf16.mxu0 %v2599
    %2794 = vmatpush2.bf16.msra.mxu0 %v2598
    %2795 = vmatprep.subr.bf16.mxu0 %v2597
    %2796 = vmatpush2.bf16.msra.mxu0 %v2596
    %2797 = vmatprep.subr.bf16.mxu0 %v2595
    %2798 = vmatpush2.bf16.msra.mxu0 %v2594
    %2799 = vmatprep.subr.bf16.mxu0 %v2593
    %2800 = vmatpush2.bf16.msra.mxu0 %v2592
    %2801 = vmatprep.subr.bf16.mxu0 %v2591
    %2802 = vmatpush2.bf16.msra.mxu0 %v2590
    %2803 = vmatprep.subr.bf16.mxu0 %v2589
    %2804 = vmatpush2.bf16.msra.mxu0 %v2588
    %2805 = vmatprep.mubr.bf16.mxu0 %v2142
    %2806 = vmatmul.mubr.bf16.gmra.mxu0 %v2141
    %v2807 = vpop.f32.mrf.mxu0
    %v2808 = vadd.f32 %v2767, %v2807
    %v2809 = vpop.f32.mrf.mxu0
    %v2810 = vadd.f32 %v2769, %v2809
    %v2811 = vpop.f32.mrf.mxu0
    %v2812 = vpop.f32.mrf.mxu0
    %2813 = vdwg.mxu0
    %2814 = vmatprep.subr.bf16.mxu0 %v2619
    %2815 = vmatpush1.bf16.msra.mxu0 %v2618
    %2816 = vmatprep.subr.bf16.mxu0 %v2617
    %2817 = vmatpush1.bf16.msra.mxu0 %v2616
    %2818 = vmatprep.subr.bf16.mxu0 %v2615
    %2819 = vmatpush1.bf16.msra.mxu0 %v2614
    %2820 = vmatprep.subr.bf16.mxu0 %v2613
    %2821 = vmatpush1.bf16.msra.mxu0 %v2612
    %2822 = vmatprep.subr.bf16.mxu0 %v2611
    %2823 = vmatpush1.bf16.msra.mxu0 %v2610
    %2824 = vmatprep.subr.bf16.mxu0 %v2609
    %2825 = vmatpush1.bf16.msra.mxu0 %v2608
    %2826 = vmatprep.subr.bf16.mxu0 %v2607
    %2827 = vmatpush1.bf16.msra.mxu0 %v2606
    %2828 = vmatprep.subr.bf16.mxu0 %v2605
    %2829 = vmatpush1.bf16.msra.mxu0 %v2604
    %2830 = vmatprep.subr.bf16.mxu0 %v2635
    %2831 = vmatpush2.bf16.msra.mxu0 %v2634
    %2832 = vmatprep.subr.bf16.mxu0 %v2633
    %2833 = vmatpush2.bf16.msra.mxu0 %v2632
    %2834 = vmatprep.subr.bf16.mxu0 %v2631
    %2835 = vmatpush2.bf16.msra.mxu0 %v2630
    %2836 = vmatprep.subr.bf16.mxu0 %v2629
    %2837 = vmatpush2.bf16.msra.mxu0 %v2628
    %2838 = vmatprep.subr.bf16.mxu0 %v2627
    %2839 = vmatpush2.bf16.msra.mxu0 %v2626
    %2840 = vmatprep.subr.bf16.mxu0 %v2625
    %2841 = vmatpush2.bf16.msra.mxu0 %v2624
    %2842 = vmatprep.subr.bf16.mxu0 %v2623
    %2843 = vmatpush2.bf16.msra.mxu0 %v2622
    %2844 = vmatprep.subr.bf16.mxu0 %v2621
    %2845 = vmatpush2.bf16.msra.mxu0 %v2620
    %2846 = vmatprep.mubr.bf16.mxu0 %v2144
    %2847 = vmatmul.mubr.bf16.gmra.mxu0 %v2143
    %v2848 = vpop.f32.mrf.mxu0
    %v2849 = vadd.f32 %v2808, %v2848
    %v2850 = vpop.f32.mrf.mxu0
    %v2851 = vadd.f32 %v2810, %v2850
    %v2852 = vpop.f32.mrf.mxu0
    %v2853 = vpop.f32.mrf.mxu0
    %2854 = vdwg.mxu0
    %vm2855 = vcmp.gt.f32.partialorder %v2849, 0.0
    %vm2856 = vcmp.gt.f32.partialorder %v2851, 0.0
    %v2857 = vmul.f32 %v2849, 0.1
    %v2858 = vmul.f32 %v2851, 0.1
    %v2859 = vsel %vm2855, %v2849, %v2857
    %v2860 = vsel %vm2856, %v2851, %v2858
    %v2861 = vpack.c.bf16 %v2859, %v2859
    %v2862 = vpack.c.bf16 %v2860, %v2860
    %v2863 = vld [vmem:[#allocation11] sm:$0xff]
    %v2864 = vld [vmem:[#allocation11 + $0x8] sm:$0xff]
    %v2865 = vld [vmem:[#allocation11 + $0x10] sm:$0xff]
    %v2866 = vld [vmem:[#allocation11 + $0x18] sm:$0xff]
    %v2867 = vld [vmem:[#allocation11 + $0x20] sm:$0xff]
    %v2868 = vld [vmem:[#allocation11 + $0x28] sm:$0xff]
    %v2869 = vld [vmem:[#allocation11 + $0x30] sm:$0xff]
    %v2870 = vld [vmem:[#allocation11 + $0x38] sm:$0xff]
    %v2871 = vld [vmem:[#allocation11 + $0x40] sm:$0xff]
    %v2872 = vld [vmem:[#allocation11 + $0x48] sm:$0xff]
    %v2873 = vld [vmem:[#allocation11 + $0x50] sm:$0xff]
    %v2874 = vld [vmem:[#allocation11 + $0x58] sm:$0xff]
    %v2875 = vld [vmem:[#allocation11 + $0x60] sm:$0xff]
    %v2876 = vld [vmem:[#allocation11 + $0x68] sm:$0xff]
    %v2877 = vld [vmem:[#allocation11 + $0x70] sm:$0xff]
    %v2878 = vld [vmem:[#allocation11 + $0x78] sm:$0xff]
    %v2879 = vld [vmem:[#allocation11 + $0x80] sm:$0xff]
    %v2880 = vld [vmem:[#allocation11 + $0x88] sm:$0xff]
    %v2881 = vld [vmem:[#allocation11 + $0x90] sm:$0xff]
    %v2882 = vld [vmem:[#allocation11 + $0x98] sm:$0xff]
    %v2883 = vld [vmem:[#allocation11 + $0xa0] sm:$0xff]
    %v2884 = vld [vmem:[#allocation11 + $0xa8] sm:$0xff]
    %v2885 = vld [vmem:[#allocation11 + $0xb0] sm:$0xff]
    %v2886 = vld [vmem:[#allocation11 + $0xb8] sm:$0xff]
    %v2887 = vld [vmem:[#allocation11 + $0xc0] sm:$0xff]
    %v2888 = vld [vmem:[#allocation11 + $0xc8] sm:$0xff]
    %v2889 = vld [vmem:[#allocation11 + $0xd0] sm:$0xff]
    %v2890 = vld [vmem:[#allocation11 + $0xd8] sm:$0xff]
    %v2891 = vld [vmem:[#allocation11 + $0xe0] sm:$0xff]
    %v2892 = vld [vmem:[#allocation11 + $0xe8] sm:$0xff]
    %v2893 = vld [vmem:[#allocation11 + $0xf0] sm:$0xff]
    %v2894 = vld [vmem:[#allocation11 + $0xf8] sm:$0xff]
    %v2896 = vlaneseq
    %v2897 = vshrl.u32 %v2896, 7
    %v2898 = vsub.s32 0, %v2897
    %v2899 = vrot.slane %v2102, %v2898
    %v2900 = vlaneseq
    %v2901 = vshrl.u32 %v2900, 7
    %v2902 = vsub.s32 1, %v2901
    %v2903 = vrot.slane %v2102, %v2902
    %v2938 = vunpack.c.l.b16 %v2863
    %v2939 = vunpack.c.h.b16 %v2863
    %v2940 = vunpack.c.l.b16 %v2864
    %v2941 = vunpack.c.h.b16 %v2864
    %v2942 = vunpack.c.l.b16 %v2865
    %v2943 = vunpack.c.h.b16 %v2865
    %v2944 = vunpack.c.l.b16 %v2866
    %v2945 = vunpack.c.h.b16 %v2866
    %v2946 = vunpack.c.l.b16 %v2867
    %v2947 = vunpack.c.h.b16 %v2867
    %v2948 = vunpack.c.l.b16 %v2868
    %v2949 = vunpack.c.h.b16 %v2868
    %v2950 = vunpack.c.l.b16 %v2869
    %v2951 = vunpack.c.h.b16 %v2869
    %v2952 = vunpack.c.l.b16 %v2870
    %v2953 = vunpack.c.h.b16 %v2870
    %v2954 = vunpack.c.l.b16 %v2871
    %v2955 = vunpack.c.h.b16 %v2871
    %v2956 = vunpack.c.l.b16 %v2872
    %v2957 = vunpack.c.h.b16 %v2872
    %v2958 = vunpack.c.l.b16 %v2873
    %v2959 = vunpack.c.h.b16 %v2873
    %v2960 = vunpack.c.l.b16 %v2874
    %v2961 = vunpack.c.h.b16 %v2874
    %v2962 = vunpack.c.l.b16 %v2875
    %v2963 = vunpack.c.h.b16 %v2875
    %v2964 = vunpack.c.l.b16 %v2876
    %v2965 = vunpack.c.h.b16 %v2876
    %v2966 = vunpack.c.l.b16 %v2877
    %v2967 = vunpack.c.h.b16 %v2877
    %v2968 = vunpack.c.l.b16 %v2878
    %v2969 = vunpack.c.h.b16 %v2878
    %v2970 = vunpack.c.l.b16 %v2879
    %v2971 = vunpack.c.h.b16 %v2879
    %v2972 = vunpack.c.l.b16 %v2880
    %v2973 = vunpack.c.h.b16 %v2880
    %v2974 = vunpack.c.l.b16 %v2881
    %v2975 = vunpack.c.h.b16 %v2881
    %v2976 = vunpack.c.l.b16 %v2882
    %v2977 = vunpack.c.h.b16 %v2882
    %v2978 = vunpack.c.l.b16 %v2883
    %v2979 = vunpack.c.h.b16 %v2883
    %v2980 = vunpack.c.l.b16 %v2884
    %v2981 = vunpack.c.h.b16 %v2884
    %v2982 = vunpack.c.l.b16 %v2885
    %v2983 = vunpack.c.h.b16 %v2885
    %v2984 = vunpack.c.l.b16 %v2886
    %v2985 = vunpack.c.h.b16 %v2886
    %v2986 = vunpack.c.l.b16 %v2887
    %v2987 = vunpack.c.h.b16 %v2887
    %v2988 = vunpack.c.l.b16 %v2888
    %v2989 = vunpack.c.h.b16 %v2888
    %v2990 = vunpack.c.l.b16 %v2889
    %v2991 = vunpack.c.h.b16 %v2889
    %v2992 = vunpack.c.l.b16 %v2890
    %v2993 = vunpack.c.h.b16 %v2890
    %v2994 = vunpack.c.l.b16 %v2891
    %v2995 = vunpack.c.h.b16 %v2891
    %v2996 = vunpack.c.l.b16 %v2892
    %v2997 = vunpack.c.h.b16 %v2892
    %v2998 = vunpack.c.l.b16 %v2893
    %v2999 = vunpack.c.h.b16 %v2893
    %v3000 = vunpack.c.l.b16 %v2894
    %v3001 = vunpack.c.h.b16 %v2894
    %v3002 = vpack.c.b16 %v2940, %v2938
    %v3003 = vpack.c.b16 %v2941, %v2939
    %v3004 = vpack.c.b16 %v2944, %v2942
    %v3005 = vpack.c.b16 %v2945, %v2943
    %v3006 = vpack.c.b16 %v2948, %v2946
    %v3007 = vpack.c.b16 %v2949, %v2947
    %v3008 = vpack.c.b16 %v2952, %v2950
    %v3009 = vpack.c.b16 %v2953, %v2951
    %v3010 = vpack.c.b16 %v2956, %v2954
    %v3011 = vpack.c.b16 %v2957, %v2955
    %v3012 = vpack.c.b16 %v2960, %v2958
    %v3013 = vpack.c.b16 %v2961, %v2959
    %v3014 = vpack.c.b16 %v2964, %v2962
    %v3015 = vpack.c.b16 %v2965, %v2963
    %v3016 = vpack.c.b16 %v2968, %v2966
    %v3017 = vpack.c.b16 %v2969, %v2967
    %v3018 = vpack.c.b16 %v2972, %v2970
    %v3019 = vpack.c.b16 %v2973, %v2971
    %v3020 = vpack.c.b16 %v2976, %v2974
    %v3021 = vpack.c.b16 %v2977, %v2975
    %v3022 = vpack.c.b16 %v2980, %v2978
    %v3023 = vpack.c.b16 %v2981, %v2979
    %v3024 = vpack.c.b16 %v2984, %v2982
    %v3025 = vpack.c.b16 %v2985, %v2983
    %v3026 = vpack.c.b16 %v2988, %v2986
    %v3027 = vpack.c.b16 %v2989, %v2987
    %v3028 = vpack.c.b16 %v2992, %v2990
    %v3029 = vpack.c.b16 %v2993, %v2991
    %v3030 = vpack.c.b16 %v2996, %v2994
    %v3031 = vpack.c.b16 %v2997, %v2995
    %v3032 = vpack.c.b16 %v3000, %v2998
    %v3033 = vpack.c.b16 %v3001, %v2999
    %3066 = vmatprep.subr.bf16.mxu0 %v3017
    %3067 = vmatpush1.bf16.msra.mxu0 %v3016
    %3068 = vmatprep.subr.bf16.mxu0 %v3015
    %3069 = vmatpush1.bf16.msra.mxu0 %v3014
    %3070 = vmatprep.subr.bf16.mxu0 %v3013
    %3071 = vmatpush1.bf16.msra.mxu0 %v3012
    %3072 = vmatprep.subr.bf16.mxu0 %v3011
    %3073 = vmatpush1.bf16.msra.mxu0 %v3010
    %3074 = vmatprep.subr.bf16.mxu0 %v3009
    %3075 = vmatpush1.bf16.msra.mxu0 %v3008
    %3076 = vmatprep.subr.bf16.mxu0 %v3007
    %3077 = vmatpush1.bf16.msra.mxu0 %v3006
    %3078 = vmatprep.subr.bf16.mxu0 %v3005
    %3079 = vmatpush1.bf16.msra.mxu0 %v3004
    %3080 = vmatprep.subr.bf16.mxu0 %v3003
    %3081 = vmatpush1.bf16.msra.mxu0 %v3002
    %3082 = vmatprep.subr.bf16.mxu0 %v3033
    %3083 = vmatpush2.bf16.msra.mxu0 %v3032
    %3084 = vmatprep.subr.bf16.mxu0 %v3031
    %3085 = vmatpush2.bf16.msra.mxu0 %v3030
    %3086 = vmatprep.subr.bf16.mxu0 %v3029
    %3087 = vmatpush2.bf16.msra.mxu0 %v3028
    %3088 = vmatprep.subr.bf16.mxu0 %v3027
    %3089 = vmatpush2.bf16.msra.mxu0 %v3026
    %3090 = vmatprep.subr.bf16.mxu0 %v3025
    %3091 = vmatpush2.bf16.msra.mxu0 %v3024
    %3092 = vmatprep.subr.bf16.mxu0 %v3023
    %3093 = vmatpush2.bf16.msra.mxu0 %v3022
    %3094 = vmatprep.subr.bf16.mxu0 %v3021
    %3095 = vmatpush2.bf16.msra.mxu0 %v3020
    %3096 = vmatprep.subr.bf16.mxu0 %v3019
    %3097 = vmatpush2.bf16.msra.mxu0 %v3018
    %3098 = vmatprep.mubr.bf16.mxu0 %v2862
    %3099 = vmatmul.mubr.bf16.gmra.mxu0 %v2861
    %v3100 = vpop.f32.mrf.mxu0
    %v3101 = vadd.f32 %v2899, %v3100
    %v3102 = vpop.f32.mrf.mxu0
    %v3103 = vadd.f32 %v2903, %v3102
    %v3104 = vpop.f32.mrf.mxu0
    %v3105 = vpop.f32.mrf.mxu0
    %3106 = vdwg.mxu0
    %vm3107 = vcmp.gt.f32.partialorder %v3101, 0.0
    %vm3108 = vcmp.gt.f32.partialorder %v3103, 0.0
    %v3109 = vmul.f32 %v3101, 0.1
    %v3110 = vmul.f32 %v3103, 0.1
    %v3111 = vsel %vm3107, %v3101, %v3109
    %v3112 = vsel %vm3108, %v3103, %v3110
    %v3113 = vpack.c.bf16 %v3111, %v3111
    %v3114 = vpack.c.bf16 %v3112, %v3112
    %v3115 = vld [vmem:[#allocation13] sm:$0xf]
    %v3116 = vld [vmem:[#allocation13 + $0x4] sm:$0xf]
    %v3117 = vld [vmem:[#allocation13 + $0x8] sm:$0xf]
    %v3118 = vld [vmem:[#allocation13 + $0xc] sm:$0xf]
    %v3119 = vld [vmem:[#allocation13 + $0x10] sm:$0xf]
    %v3120 = vld [vmem:[#allocation13 + $0x14] sm:$0xf]
    %v3121 = vld [vmem:[#allocation13 + $0x18] sm:$0xf]
    %v3122 = vld [vmem:[#allocation13 + $0x1c] sm:$0xf]
    %v3123 = vld [vmem:[#allocation13 + $0x20] sm:$0xf]
    %v3124 = vld [vmem:[#allocation13 + $0x24] sm:$0xf]
    %v3125 = vld [vmem:[#allocation13 + $0x28] sm:$0xf]
    %v3126 = vld [vmem:[#allocation13 + $0x2c] sm:$0xf]
    %v3127 = vld [vmem:[#allocation13 + $0x30] sm:$0xf]
    %v3128 = vld [vmem:[#allocation13 + $0x34] sm:$0xf]
    %v3129 = vld [vmem:[#allocation13 + $0x38] sm:$0xf]
    %v3130 = vld [vmem:[#allocation13 + $0x3c] sm:$0xf]
    %v3131 = vld [vmem:[#allocation13 + $0x40] sm:$0xf]
    %v3132 = vld [vmem:[#allocation13 + $0x44] sm:$0xf]
    %v3133 = vld [vmem:[#allocation13 + $0x48] sm:$0xf]
    %v3134 = vld [vmem:[#allocation13 + $0x4c] sm:$0xf]
    %v3135 = vld [vmem:[#allocation13 + $0x50] sm:$0xf]
    %v3136 = vld [vmem:[#allocation13 + $0x54] sm:$0xf]
    %v3137 = vld [vmem:[#allocation13 + $0x58] sm:$0xf]
    %v3138 = vld [vmem:[#allocation13 + $0x5c] sm:$0xf]
    %v3139 = vld [vmem:[#allocation13 + $0x60] sm:$0xf]
    %v3140 = vld [vmem:[#allocation13 + $0x64] sm:$0xf]
    %v3141 = vld [vmem:[#allocation13 + $0x68] sm:$0xf]
    %v3142 = vld [vmem:[#allocation13 + $0x6c] sm:$0xf]
    %v3143 = vld [vmem:[#allocation13 + $0x70] sm:$0xf]
    %v3144 = vld [vmem:[#allocation13 + $0x74] sm:$0xf]
    %v3145 = vld [vmem:[#allocation13 + $0x78] sm:$0xf]
    %v3146 = vld [vmem:[#allocation13 + $0x7c] sm:$0xf]
    %v3147 = vlaneseq
    %v3148 = vshrl.u32 %v3147, 7
    %v3149 = vsub.s32 0, %v3148
    %v3150 = vrot.slane %v2103, %v3149
    %v3183 = vunpack.c.l.b16 %v3115
    %v3184 = vunpack.c.l.b16 %v3116
    %v3185 = vunpack.c.l.b16 %v3117
    %v3186 = vunpack.c.l.b16 %v3118
    %v3187 = vunpack.c.l.b16 %v3119
    %v3188 = vunpack.c.l.b16 %v3120
    %v3189 = vunpack.c.l.b16 %v3121
    %v3190 = vunpack.c.l.b16 %v3122
    %v3191 = vunpack.c.l.b16 %v3123
    %v3192 = vunpack.c.l.b16 %v3124
    %v3193 = vunpack.c.l.b16 %v3125
    %v3194 = vunpack.c.l.b16 %v3126
    %v3195 = vunpack.c.l.b16 %v3127
    %v3196 = vunpack.c.l.b16 %v3128
    %v3197 = vunpack.c.l.b16 %v3129
    %v3198 = vunpack.c.l.b16 %v3130
    %v3199 = vunpack.c.l.b16 %v3131
    %v3200 = vunpack.c.l.b16 %v3132
    %v3201 = vunpack.c.l.b16 %v3133
    %v3202 = vunpack.c.l.b16 %v3134
    %v3203 = vunpack.c.l.b16 %v3135
    %v3204 = vunpack.c.l.b16 %v3136
    %v3205 = vunpack.c.l.b16 %v3137
    %v3206 = vunpack.c.l.b16 %v3138
    %v3207 = vunpack.c.l.b16 %v3139
    %v3208 = vunpack.c.l.b16 %v3140
    %v3209 = vunpack.c.l.b16 %v3141
    %v3210 = vunpack.c.l.b16 %v3142
    %v3211 = vunpack.c.l.b16 %v3143
    %v3212 = vunpack.c.l.b16 %v3144
    %v3213 = vunpack.c.l.b16 %v3145
    %v3214 = vunpack.c.l.b16 %v3146
    %v3215 = vpack.c.b16 %v3184, %v3183
    %v3216 = vpack.c.b16 %v3186, %v3185
    %v3217 = vpack.c.b16 %v3188, %v3187
    %v3218 = vpack.c.b16 %v3190, %v3189
    %v3219 = vpack.c.b16 %v3192, %v3191
    %v3220 = vpack.c.b16 %v3194, %v3193
    %v3221 = vpack.c.b16 %v3196, %v3195
    %v3222 = vpack.c.b16 %v3198, %v3197
    %v3223 = vpack.c.b16 %v3200, %v3199
    %v3224 = vpack.c.b16 %v3202, %v3201
    %v3225 = vpack.c.b16 %v3204, %v3203
    %v3226 = vpack.c.b16 %v3206, %v3205
    %v3227 = vpack.c.b16 %v3208, %v3207
    %v3228 = vpack.c.b16 %v3210, %v3209
    %v3229 = vpack.c.b16 %v3212, %v3211
    %v3230 = vpack.c.b16 %v3214, %v3213
    %3247 = vmatprep.subr.bf16.mxu0 0
    %3248 = vmatpush1.bf16.msra.mxu0 %v3222
    %3249 = vmatprep.subr.bf16.mxu0 0
    %3250 = vmatpush1.bf16.msra.mxu0 %v3221
    %3251 = vmatprep.subr.bf16.mxu0 0
    %3252 = vmatpush1.bf16.msra.mxu0 %v3220
    %3253 = vmatprep.subr.bf16.mxu0 0
    %3254 = vmatpush1.bf16.msra.mxu0 %v3219
    %3255 = vmatprep.subr.bf16.mxu0 0
    %3256 = vmatpush1.bf16.msra.mxu0 %v3218
    %3257 = vmatprep.subr.bf16.mxu0 0
    %3258 = vmatpush1.bf16.msra.mxu0 %v3217
    %3259 = vmatprep.subr.bf16.mxu0 0
    %3260 = vmatpush1.bf16.msra.mxu0 %v3216
    %3261 = vmatprep.subr.bf16.mxu0 0
    %3262 = vmatpush1.bf16.msra.mxu0 %v3215
    %3263 = vmatprep.subr.bf16.mxu0 0
    %3264 = vmatpush2.bf16.msra.mxu0 %v3230
    %3265 = vmatprep.subr.bf16.mxu0 0
    %3266 = vmatpush2.bf16.msra.mxu0 %v3229
    %3267 = vmatprep.subr.bf16.mxu0 0
    %3268 = vmatpush2.bf16.msra.mxu0 %v3228
    %3269 = vmatprep.subr.bf16.mxu0 0
    %3270 = vmatpush2.bf16.msra.mxu0 %v3227
    %3271 = vmatprep.subr.bf16.mxu0 0
    %3272 = vmatpush2.bf16.msra.mxu0 %v3226
    %3273 = vmatprep.subr.bf16.mxu0 0
    %3274 = vmatpush2.bf16.msra.mxu0 %v3225
    %3275 = vmatprep.subr.bf16.mxu0 0
    %3276 = vmatpush2.bf16.msra.mxu0 %v3224
    %3277 = vmatprep.subr.bf16.mxu0 0
    %3278 = vmatpush2.bf16.msra.mxu0 %v3223
    %3279 = vmatprep.mubr.bf16.mxu0 %v3114
    %3280 = vmatmul.mubr.bf16.gmra.mxu0 %v3113
    %v3281 = vpop.f32.mrf.mxu0
    %v3282 = vadd.f32 %v3150, %v3281
    %v3283 = vpop.f32.mrf.mxu0
    %v3284 = vpop.f32.mrf.mxu0
    %v3285 = vpop.f32.mrf.mxu0
    %3286 = vdwg.mxu0
    %3287 = vst [vmem:[#allocation16] sm:$0x3] %v3282
    // Predicated region
    $region58: #{tpu_custom_call.1} parent=1 // pred_check
      _
    $region59: #{tpu_custom_call.1} parent=1 // pred_check_branch
      %3289 = sbr.rel (0) target = $region61
    $region60: #{tpu_custom_call.1} parent=1 // pred_region
      %s3291 = ssub.s32 32, 32
      %3292 = vsyncadd [#allocation5], %s3291
      %s3294 = sshll.u32 [#allocation16], 4
      %s3295 = int_to_ptr.vmem [resolvable:$true] %s3294
      %3297 = dma.vmem_to_hbm [thread:$0]  %s3295, 32, %s7, [#allocation5]
    $region61: #{tpu_custom_call.1} parent=1 // pred_fallthru
      _
    // Predicated region
    $region62: #{tpu_custom_call.1} parent=1 // pred_check
      _
    $region63: #{tpu_custom_call.1} parent=1 // pred_check_branch
      %3299 = sbr.rel (0) target = $region65
    $region64: #{tpu_custom_call.1} parent=1 // pred_region
      %3300 = dma.done [#allocation5], 32
    $region65: #{tpu_custom_call.1} parent=1 // pred_fallthru
      _
    %3301 = vsyncpa [#allocation4], 1
    %3302 = vsyncpa [#allocation9], 1
    %3303 = vsyncpa [#allocation12], 1
    %3304 = vsyncpa [#allocation15], 1
    %3305 = vsyncpa [#allocation5], 1
    %3306 = vsyncpa [#allocation6], 1

</llo_original>
